<compile_context>
chip_gen: v7x
topology: tpu7x:2x2x1
jax: 0.10.0
libtpu: 0.0.40
codegen_flags: <defaults>
</compile_context>

<pallas_src>
import functools
import math

import jax
import jax.numpy as jnp
from jax.experimental import pallas as pl
from jax.experimental.pallas import tpu as pltpu


# ----------------------------- kernel helpers ------------------------------

_MXU_DTYPE = jnp.bfloat16   # MXU operand dtype; accumulation stays float32


def _mm(a, b):
    """a @ b with bf16 MXU operands, f32 accumulation."""
    return jnp.dot(a.astype(_MXU_DTYPE), b.astype(_MXU_DTYPE),
                   preferred_element_type=jnp.float32)


def _mm_nt(a, b):
    """a @ b.T without materializing the transpose (MXU handles it)."""
    return jax.lax.dot_general(
        a.astype(_MXU_DTYPE), b.astype(_MXU_DTYPE),
        dimension_numbers=(((1,), (1,)), ((), ())),
        preferred_element_type=jnp.float32)


def _layernorm(x, g, b, eps=1e-12):
    mu = jnp.mean(x, axis=-1, keepdims=True)
    var = jnp.mean(jnp.square(x - mu), axis=-1, keepdims=True)
    return (x - mu) * jax.lax.rsqrt(var + eps) * g + b


def _gelu(x):
    # tanh-approx GELU (HF BERT default is erf-GELU; ~1e-3 relative diff).
    return 0.5 * x * (1.0 + jnp.tanh(0.7978845608028654 *
                                     (x + 0.044715 * x * x * x)))


# --------------------------- fused encoder layer ----------------------------

def _encoder_layer_kernel(*refs, nh, scale, input_ln, with_pooler):
    """One full BERT encoder layer for one batch element (one grid step).

    Optionally applies the embedding LayerNorm on the input (first layer) and
    computes the pooler output tanh(W_p @ h_CLS + b_p) (last layer).
    """
    it = iter(refs)
    x_ref = next(it)                      # (1, S, H)
    mask_ref = next(it)                   # (1, 1, S) additive mask
    if input_ln:
        ilng_ref = next(it)               # (1, H)
        ilnb_ref = next(it)               # (1, H)
    wqkv_ref = next(it)                   # (H, 3H)
    bqkv_ref = next(it)                   # (1, 3H)
    wo_ref = next(it)                     # (H, H)
    bo_ref = next(it)                     # (1, H)
    ln1g_ref = next(it)                   # (1, H)
    ln1b_ref = next(it)                   # (1, H)
    wi_ref = next(it)                     # (H, I)
    bi_ref = next(it)                     # (1, I)
    wf_ref = next(it)                     # (I, H)
    bf_ref = next(it)                     # (1, H)
    ln2g_ref = next(it)                   # (1, H)
    ln2b_ref = next(it)                   # (1, H)
    if with_pooler:
        pw_ref = next(it)                 # (H, H)
        pb_ref = next(it)                 # (1, H)
    o_ref = next(it)                      # (1, S, H)
    if with_pooler:
        pool_ref = next(it)               # (1, 1, H)

    x = x_ref[0]                          # (S, H) float32
    if input_ln:
        x = _layernorm(x, ilng_ref[...], ilnb_ref[...])

    H = x.shape[-1]
    Dh = H // nh
    amask = mask_ref[0]                   # (1, S), broadcast over query rows

    # --- fused QKV projection (single lane-dense matmul) ---
    qkv = _mm(x, wqkv_ref[...]) + bqkv_ref[...]          # (S, 3H) f32
    q = qkv[:, :H] * scale                               # fold 1/sqrt(Dh) in
    k = qkv[:, H:2 * H]
    v = qkv[:, 2 * H:3 * H]

    # --- attention: all heads of this batch element in-kernel ---
    ctx_heads = []
    for h in range(nh):                                   # static unroll
        lo, hi = h * Dh, (h + 1) * Dh
        qh, kh, vh = q[:, lo:hi], k[:, lo:hi], v[:, lo:hi]
        s = _mm_nt(qh, kh) + amask                        # (S, S) f32
        s = s - jnp.max(s, axis=-1, keepdims=True)
        p = jnp.exp(s)
        denom = jnp.sum(p, axis=-1, keepdims=True)
        p = p * pl.reciprocal(denom, approx=True)         # EUP, not VALU
        ctx_heads.append(_mm(p, vh))                      # (S, Dh)
    ctx = jnp.concatenate(ctx_heads, axis=-1)             # (S, H) lane-dense

    # --- output projection + residual LayerNorm ---
    attn_out = _mm(ctx, wo_ref[...]) + bo_ref[...]
    h1 = _layernorm(attn_out + x, ln1g_ref[...], ln1b_ref[...])

    # --- FFN + residual LayerNorm ---
    inter = _gelu(_mm(h1, wi_ref[...]) + bi_ref[...])     # (S, I)
    ffn = _mm(inter, wf_ref[...]) + bf_ref[...]           # (S, H)
    out = _layernorm(ffn + h1, ln2g_ref[...], ln2b_ref[...])

    o_ref[0] = out.astype(o_ref.dtype)

    if with_pooler:
        cls = out[0:1, :]                                 # (1, H) = h_CLS
        pooled = jnp.tanh(_mm(cls, pw_ref[...]) + pb_ref[...])
        pool_ref[0] = pooled.astype(pool_ref.dtype)


def encoder_layer(x, add_mask, lyr, *, nh, scale,
                  input_ln_params=None, pooler_params=None):
    """x: (B, S, H); add_mask: (B, 1, S). Returns new x (and pooled if last)."""
    B, S, H = x.shape
    I = lyr["wi"].shape[1]
    input_ln = input_ln_params is not None
    with_pooler = pooler_params is not None

    inputs = [x, add_mask]
    in_specs = [
        pl.BlockSpec((1, S, H), lambda b: (b, 0, 0)),
        pl.BlockSpec((1, 1, S), lambda b: (b, 0, 0)),
    ]

    def add_full(arr):
        inputs.append(arr)
        shp = arr.shape
        in_specs.append(pl.BlockSpec(shp, lambda b, _n=len(shp): (0,) * _n))

    if input_ln:
        add_full(input_ln_params[0].reshape(1, H))
        add_full(input_ln_params[1].reshape(1, H))
    add_full(lyr["wqkv"])
    add_full(lyr["bqkv"].reshape(1, 3 * H))
    add_full(lyr["wo"])
    add_full(lyr["bo"].reshape(1, H))
    add_full(lyr["ln1_g"].reshape(1, H))
    add_full(lyr["ln1_b"].reshape(1, H))
    add_full(lyr["wi"])
    add_full(lyr["bi"].reshape(1, I))
    add_full(lyr["wf"])
    add_full(lyr["bf"].reshape(1, H))
    add_full(lyr["ln2_g"].reshape(1, H))
    add_full(lyr["ln2_b"].reshape(1, H))
    if with_pooler:
        add_full(pooler_params[0])                        # (H, H)
        add_full(pooler_params[1].reshape(1, H))

    if with_pooler:
        out_shape = (jax.ShapeDtypeStruct((B, S, H), jnp.float32),
                     jax.ShapeDtypeStruct((B, 1, H), jnp.float32))
        out_specs = (pl.BlockSpec((1, S, H), lambda b: (b, 0, 0)),
                     pl.BlockSpec((1, 1, H), lambda b: (b, 0, 0)))
    else:
        out_shape = jax.ShapeDtypeStruct((B, S, H), jnp.float32)
        out_specs = pl.BlockSpec((1, S, H), lambda b: (b, 0, 0))

    kernel = functools.partial(_encoder_layer_kernel, nh=nh, scale=scale,
                               input_ln=input_ln, with_pooler=with_pooler)
    outs = pl.pallas_call(
        kernel,
        out_shape=out_shape,
        grid=(B,),
        in_specs=in_specs,
        out_specs=out_specs,
        compiler_params=pltpu.CompilerParams(
            dimension_semantics=("parallel",)),   # megacore-friendly on v7x
    )(*inputs)
    return outs


# ------------------------- synthetic BERT parameters -----------------------

CFG = dict(vocab_size=100, type_vocab_size=2, max_position=16,
           hidden=32, heads=4, intermediate=64, layers=2)


def init_params(key, cfg):
    # TODO(synk): original module loads weights via AutoModel.from_pretrained;
    # here parameters are synthetic (deterministic PRNGKey init).
    H, I = cfg["hidden"], cfg["intermediate"]
    std = 0.02
    keys = iter(jax.random.split(key, 64))

    def nrm(shape):
        return std * jax.random.normal(next(keys), shape, jnp.float32)

    params = {
        "word_emb": nrm((cfg["vocab_size"], H)),
        "pos_emb": nrm((cfg["max_position"], H)),
        "type_emb": nrm((cfg["type_vocab_size"], H)),
        "emb_ln_g": jnp.ones((H,), jnp.float32),
        "emb_ln_b": jnp.zeros((H,), jnp.float32),
        "pool_w": nrm((H, H)),
        "pool_b": jnp.zeros((H,), jnp.float32),
        "layers": [],
    }
    for _ in range(cfg["layers"]):
        params["layers"].append({
            "wqkv": nrm((H, 3 * H)),                      # fused Q|K|V
            "bqkv": jnp.zeros((3 * H,), jnp.float32),
            "wo": nrm((H, H)), "bo": jnp.zeros((H,), jnp.float32),
            "ln1_g": jnp.ones((H,), jnp.float32),
            "ln1_b": jnp.zeros((H,), jnp.float32),
            "wi": nrm((H, I)), "bi": jnp.zeros((I,), jnp.float32),
            "wf": nrm((I, H)), "bf": jnp.zeros((H,), jnp.float32),
            "ln2_g": jnp.ones((H,), jnp.float32),
            "ln2_b": jnp.zeros((H,), jnp.float32),
        })
    return params


# ------------------------------- forward pass ------------------------------

def bert_forward(params, input_ids, token_type_ids, attention_mask, cfg):
    B, S = input_ids.shape
    H, nh = cfg["hidden"], cfg["heads"]
    Dh = H // nh
    scale = 1.0 / math.sqrt(Dh)

    # --- embeddings (gather is plain-JAX glue) ---
    emb = (params["word_emb"][input_ids]
           + params["pos_emb"][jnp.arange(S)][None, :, :]
           + params["type_emb"][token_type_ids])          # (B, S, H)

    # additive attention mask, kept at (B, 1, S); head broadcast is free
    # inside the kernel.
    add_mask = ((1.0 - attention_mask.astype(jnp.float32)) * -1e9)[:, None, :]

    x = emb
    n_layers = len(params["layers"])
    pooled = None
    for li, lyr in enumerate(params["layers"]):
        input_ln_params = ((params["emb_ln_g"], params["emb_ln_b"])
                           if li == 0 else None)
        pooler_params = ((params["pool_w"], params["pool_b"])
                         if li == n_layers - 1 else None)
        out = encoder_layer(x, add_mask, lyr, nh=nh, scale=scale,
                            input_ln_params=input_ln_params,
                            pooler_params=pooler_params)
        if pooler_params is not None:
            x, pooled = out[0], out[1]
        else:
            x = out

    return pooled.reshape(B, H)                            # pooler_output


# ----------------------------------- main -----------------------------------

if __name__ == "__main__":
    key = jax.random.PRNGKey(0)
    k_param, k_ids = jax.random.split(key)

    B, S = 2, 8
    params = init_params(k_param, CFG)

    input_ids = jax.random.randint(k_ids, (B, S), 0, CFG["vocab_size"],
                                   dtype=jnp.int32)
    token_type_ids = jnp.zeros((B, S), jnp.int32)
    attention_mask = jnp.ones((B, S), jnp.int32).at[1, 6:].set(0)  # pad tail

    # forward pass is inference-only (freeze=True / no_grad): no grads taken.
    fwd = jax.jit(functools.partial(bert_forward, cfg=CFG))
    out = fwd(params, input_ids, token_type_ids, attention_mask)
    out = jax.block_until_ready(out)

    assert out.shape == (B, CFG["hidden"]) and out.dtype == jnp.float32
    assert bool(jnp.all(jnp.isfinite(out)))
    print("KERNEL_OK")
</pallas_src>

<mosaic_0001>
module attributes {stable_mosaic.version = 11 : i64} {
  func.func @_encoder_layer_kernel(%arg0: i32, %arg1: memref<1x8x32xf32, #tpu.memory_space<vmem>>, %arg2: memref<1x1x8xf32, #tpu.memory_space<vmem>>, %arg3: memref<1x32xf32, #tpu.memory_space<vmem>>, %arg4: memref<1x32xf32, #tpu.memory_space<vmem>>, %arg5: memref<32x96xf32, #tpu.memory_space<vmem>>, %arg6: memref<1x96xf32, #tpu.memory_space<vmem>>, %arg7: memref<32x32xf32, #tpu.memory_space<vmem>>, %arg8: memref<1x32xf32, #tpu.memory_space<vmem>>, %arg9: memref<1x32xf32, #tpu.memory_space<vmem>>, %arg10: memref<1x32xf32, #tpu.memory_space<vmem>>, %arg11: memref<32x64xf32, #tpu.memory_space<vmem>>, %arg12: memref<1x64xf32, #tpu.memory_space<vmem>>, %arg13: memref<64x32xf32, #tpu.memory_space<vmem>>, %arg14: memref<1x32xf32, #tpu.memory_space<vmem>>, %arg15: memref<1x32xf32, #tpu.memory_space<vmem>>, %arg16: memref<1x32xf32, #tpu.memory_space<vmem>>, %arg17: memref<1x8x32xf32, #tpu.memory_space<vmem>>) attributes {dimension_semantics = [#tpu.dimension_semantics<parallel>], iteration_bounds = array<i64: 2>, scalar_prefetch = 0 : i64, scratch_operands = 0 : i64, tpu.core_type = #tpu.core_type<tc>, window_params = [{transform_indices = @transform_0, window_bounds = array<i64: 1, 8, 32>}, {transform_indices = @transform_1, window_bounds = array<i64: 1, 1, 8>}, {pipeline_mode = #tpu.pipeline_mode<synchronous>, transform_indices = @transform_2, window_bounds = array<i64: 1, 32>}, {pipeline_mode = #tpu.pipeline_mode<synchronous>, transform_indices = @transform_3, window_bounds = array<i64: 1, 32>}, {pipeline_mode = #tpu.pipeline_mode<synchronous>, transform_indices = @transform_4, window_bounds = array<i64: 32, 96>}, {pipeline_mode = #tpu.pipeline_mode<synchronous>, transform_indices = @transform_5, window_bounds = array<i64: 1, 96>}, {pipeline_mode = #tpu.pipeline_mode<synchronous>, transform_indices = @transform_6, window_bounds = array<i64: 32, 32>}, {pipeline_mode = #tpu.pipeline_mode<synchronous>, transform_indices = @transform_7, window_bounds = array<i64: 1, 32>}, {pipeline_mode = #tpu.pipeline_mode<synchronous>, transform_indices = @transform_8, window_bounds = array<i64: 1, 32>}, {pipeline_mode = #tpu.pipeline_mode<synchronous>, transform_indices = @transform_9, window_bounds = array<i64: 1, 32>}, {pipeline_mode = #tpu.pipeline_mode<synchronous>, transform_indices = @transform_10, window_bounds = array<i64: 32, 64>}, {pipeline_mode = #tpu.pipeline_mode<synchronous>, transform_indices = @transform_11, window_bounds = array<i64: 1, 64>}, {pipeline_mode = #tpu.pipeline_mode<synchronous>, transform_indices = @transform_12, window_bounds = array<i64: 64, 32>}, {pipeline_mode = #tpu.pipeline_mode<synchronous>, transform_indices = @transform_13, window_bounds = array<i64: 1, 32>}, {pipeline_mode = #tpu.pipeline_mode<synchronous>, transform_indices = @transform_14, window_bounds = array<i64: 1, 32>}, {pipeline_mode = #tpu.pipeline_mode<synchronous>, transform_indices = @transform_15, window_bounds = array<i64: 1, 32>}, {transform_indices = @transform_16, window_bounds = array<i64: 1, 8, 32>}]} {
    %c0 = arith.constant 0 : index
    %c0_0 = arith.constant 0 : index
    %c0_1 = arith.constant 0 : index
    %0 = vector.load %arg1[%c0, %c0_0, %c0_1] : memref<1x8x32xf32, #tpu.memory_space<vmem>>, vector<1x8x32xf32>
    %1 = vector.shape_cast %0 : vector<1x8x32xf32> to vector<8x32xf32>
    %c0_2 = arith.constant 0 : index
    %c0_3 = arith.constant 0 : index
    %2 = vector.load %arg3[%c0_2, %c0_3] : memref<1x32xf32, #tpu.memory_space<vmem>>, vector<1x32xf32>
    %c0_4 = arith.constant 0 : index
    %c0_5 = arith.constant 0 : index
    %3 = vector.load %arg4[%c0_4, %c0_5] : memref<1x32xf32, #tpu.memory_space<vmem>>, vector<1x32xf32>
    %cst = arith.constant dense<0.000000e+00> : vector<8xf32>
    %4 = vector.multi_reduction <add>, %1, %cst [1] : vector<8x32xf32> to vector<8xf32>
    %5 = vector.shape_cast %4 : vector<8xf32> to vector<8x1xf32>
    %cst_6 = arith.constant 3.200000e+01 : f32
    %6 = vector.broadcast %cst_6 : f32 to vector<8x1xf32>
    %7 = arith.divf %5, %6 : vector<8x1xf32>
    %8 = vector.broadcast %7 : vector<8x1xf32> to vector<8x32xf32>
    %9 = arith.subf %1, %8 : vector<8x32xf32>
    %10 = arith.mulf %9, %9 : vector<8x32xf32>
    %cst_7 = arith.constant dense<0.000000e+00> : vector<8xf32>
    %11 = vector.multi_reduction <add>, %10, %cst_7 [1] : vector<8x32xf32> to vector<8xf32>
    %12 = vector.shape_cast %11 : vector<8xf32> to vector<8x1xf32>
    %cst_8 = arith.constant 3.200000e+01 : f32
    %13 = vector.broadcast %cst_8 : f32 to vector<8x1xf32>
    %14 = arith.divf %12, %13 : vector<8x1xf32>
    %15 = vector.broadcast %7 : vector<8x1xf32> to vector<8x32xf32>
    %16 = arith.subf %1, %15 : vector<8x32xf32>
    %cst_9 = arith.constant 9.99999996E-13 : f32
    %17 = vector.broadcast %cst_9 : f32 to vector<8x1xf32>
    %18 = arith.addf %14, %17 : vector<8x1xf32>
    %19 = math.rsqrt %18 : vector<8x1xf32>
    %20 = vector.broadcast %19 : vector<8x1xf32> to vector<8x32xf32>
    %21 = arith.mulf %16, %20 : vector<8x32xf32>
    %22 = vector.broadcast %2 : vector<1x32xf32> to vector<8x32xf32>
    %23 = arith.mulf %21, %22 : vector<8x32xf32>
    %24 = vector.broadcast %3 : vector<1x32xf32> to vector<8x32xf32>
    %25 = arith.addf %23, %24 : vector<8x32xf32>
    %c0_10 = arith.constant 0 : index
    %c0_11 = arith.constant 0 : index
    %c0_12 = arith.constant 0 : index
    %26 = vector.load %arg2[%c0_10, %c0_11, %c0_12] : memref<1x1x8xf32, #tpu.memory_space<vmem>>, vector<1x1x8xf32>
    %27 = vector.shape_cast %26 : vector<1x1x8xf32> to vector<1x8xf32>
    %c0_13 = arith.constant 0 : index
    %c0_14 = arith.constant 0 : index
    %28 = vector.load %arg5[%c0_13, %c0_14] : memref<32x96xf32, #tpu.memory_space<vmem>>, vector<32x96xf32>
    %29 = arith.truncf %25 : vector<8x32xf32> to vector<8x32xbf16>
    %30 = arith.truncf %28 : vector<32x96xf32> to vector<32x96xbf16>
    %cst_15 = arith.constant dense<0.000000e+00> : vector<8x96xf32>
    %31 = tpu.matmul %29, %30, %cst_15 {dimension_numbers = #tpu.dot_dimension_numbers<[1], [0], [0], [1], [0, 0, 1, 1], [], []>} : vector<8x32xbf16>, vector<32x96xbf16>, vector<8x96xf32> -> vector<8x96xf32>
    %c0_16 = arith.constant 0 : index
    %c0_17 = arith.constant 0 : index
    %32 = vector.load %arg6[%c0_16, %c0_17] : memref<1x96xf32, #tpu.memory_space<vmem>>, vector<1x96xf32>
    %33 = vector.broadcast %32 : vector<1x96xf32> to vector<8x96xf32>
    %34 = arith.addf %31, %33 : vector<8x96xf32>
    %35 = vector.extract_strided_slice %34 {offsets = [0, 0], sizes = [8, 32], strides = [1, 1]} : vector<8x96xf32> to vector<8x32xf32>
    %cst_18 = arith.constant 0.353553385 : f32
    %36 = vector.broadcast %cst_18 : f32 to vector<8x32xf32>
    %37 = arith.mulf %35, %36 : vector<8x32xf32>
    %38 = vector.extract_strided_slice %34 {offsets = [0, 32], sizes = [8, 32], strides = [1, 1]} : vector<8x96xf32> to vector<8x32xf32>
    %39 = vector.extract_strided_slice %34 {offsets = [0, 64], sizes = [8, 32], strides = [1, 1]} : vector<8x96xf32> to vector<8x32xf32>
    %40 = vector.extract_strided_slice %37 {offsets = [0, 0], sizes = [8, 8], strides = [1, 1]} : vector<8x32xf32> to vector<8x8xf32>
    %41 = vector.extract_strided_slice %38 {offsets = [0, 0], sizes = [8, 8], strides = [1, 1]} : vector<8x32xf32> to vector<8x8xf32>
    %42 = vector.extract_strided_slice %39 {offsets = [0, 0], sizes = [8, 8], strides = [1, 1]} : vector<8x32xf32> to vector<8x8xf32>
    %43 = arith.truncf %40 : vector<8x8xf32> to vector<8x8xbf16>
    %44 = arith.truncf %41 : vector<8x8xf32> to vector<8x8xbf16>
    %cst_19 = arith.constant dense<0.000000e+00> : vector<8x8xf32>
    %45 = tpu.matmul %43, %44, %cst_19 {dimension_numbers = #tpu.dot_dimension_numbers<[1], [1], [0], [0], [0, 0, 1, 0], [], []>} : vector<8x8xbf16>, vector<8x8xbf16>, vector<8x8xf32> -> vector<8x8xf32>
    %46 = vector.broadcast %27 : vector<1x8xf32> to vector<8x8xf32>
    %47 = arith.addf %45, %46 : vector<8x8xf32>
    %cst_20 = arith.constant dense<0xFF800000> : vector<8xf32>
    %48 = vector.multi_reduction <maximumf>, %47, %cst_20 [1] : vector<8x8xf32> to vector<8xf32>
    %49 = vector.shape_cast %48 : vector<8xf32> to vector<8x1xf32>
    %50 = vector.broadcast %49 : vector<8x1xf32> to vector<8x8xf32>
    %51 = arith.subf %47, %50 : vector<8x8xf32>
    %52 = math.exp %51 : vector<8x8xf32>
    %cst_21 = arith.constant dense<0.000000e+00> : vector<8xf32>
    %53 = vector.multi_reduction <add>, %52, %cst_21 [1] : vector<8x8xf32> to vector<8xf32>
    %54 = vector.shape_cast %53 : vector<8xf32> to vector<8x1xf32>
    %55 = tpu.reciprocal %54 {approx = true} : vector<8x1xf32> -> vector<8x1xf32>
    %56 = vector.broadcast %55 : vector<8x1xf32> to vector<8x8xf32>
    %57 = arith.mulf %52, %56 : vector<8x8xf32>
    %58 = arith.truncf %57 : vector<8x8xf32> to vector<8x8xbf16>
    %59 = arith.truncf %42 : vector<8x8xf32> to vector<8x8xbf16>
    %cst_22 = arith.constant dense<0.000000e+00> : vector<8x8xf32>
    %60 = tpu.matmul %58, %59, %cst_22 {dimension_numbers = #tpu.dot_dimension_numbers<[1], [0], [0], [1], [0, 0, 1, 1], [], []>} : vector<8x8xbf16>, vector<8x8xbf16>, vector<8x8xf32> -> vector<8x8xf32>
    %61 = vector.extract_strided_slice %37 {offsets = [0, 8], sizes = [8, 8], strides = [1, 1]} : vector<8x32xf32> to vector<8x8xf32>
    %62 = vector.extract_strided_slice %38 {offsets = [0, 8], sizes = [8, 8], strides = [1, 1]} : vector<8x32xf32> to vector<8x8xf32>
    %63 = vector.extract_strided_slice %39 {offsets = [0, 8], sizes = [8, 8], strides = [1, 1]} : vector<8x32xf32> to vector<8x8xf32>
    %64 = arith.truncf %61 : vector<8x8xf32> to vector<8x8xbf16>
    %65 = arith.truncf %62 : vector<8x8xf32> to vector<8x8xbf16>
    %cst_23 = arith.constant dense<0.000000e+00> : vector<8x8xf32>
    %66 = tpu.matmul %64, %65, %cst_23 {dimension_numbers = #tpu.dot_dimension_numbers<[1], [1], [0], [0], [0, 0, 1, 0], [], []>} : vector<8x8xbf16>, vector<8x8xbf16>, vector<8x8xf32> -> vector<8x8xf32>
    %67 = vector.broadcast %27 : vector<1x8xf32> to vector<8x8xf32>
    %68 = arith.addf %66, %67 : vector<8x8xf32>
    %cst_24 = arith.constant dense<0xFF800000> : vector<8xf32>
    %69 = vector.multi_reduction <maximumf>, %68, %cst_24 [1] : vector<8x8xf32> to vector<8xf32>
    %70 = vector.shape_cast %69 : vector<8xf32> to vector<8x1xf32>
    %71 = vector.broadcast %70 : vector<8x1xf32> to vector<8x8xf32>
    %72 = arith.subf %68, %71 : vector<8x8xf32>
    %73 = math.exp %72 : vector<8x8xf32>
    %cst_25 = arith.constant dense<0.000000e+00> : vector<8xf32>
    %74 = vector.multi_reduction <add>, %73, %cst_25 [1] : vector<8x8xf32> to vector<8xf32>
    %75 = vector.shape_cast %74 : vector<8xf32> to vector<8x1xf32>
    %76 = tpu.reciprocal %75 {approx = true} : vector<8x1xf32> -> vector<8x1xf32>
    %77 = vector.broadcast %76 : vector<8x1xf32> to vector<8x8xf32>
    %78 = arith.mulf %73, %77 : vector<8x8xf32>
    %79 = arith.truncf %78 : vector<8x8xf32> to vector<8x8xbf16>
    %80 = arith.truncf %63 : vector<8x8xf32> to vector<8x8xbf16>
    %cst_26 = arith.constant dense<0.000000e+00> : vector<8x8xf32>
    %81 = tpu.matmul %79, %80, %cst_26 {dimension_numbers = #tpu.dot_dimension_numbers<[1], [0], [0], [1], [0, 0, 1, 1], [], []>} : vector<8x8xbf16>, vector<8x8xbf16>, vector<8x8xf32> -> vector<8x8xf32>
    %82 = vector.extract_strided_slice %37 {offsets = [0, 16], sizes = [8, 8], strides = [1, 1]} : vector<8x32xf32> to vector<8x8xf32>
    %83 = vector.extract_strided_slice %38 {offsets = [0, 16], sizes = [8, 8], strides = [1, 1]} : vector<8x32xf32> to vector<8x8xf32>
    %84 = vector.extract_strided_slice %39 {offsets = [0, 16], sizes = [8, 8], strides = [1, 1]} : vector<8x32xf32> to vector<8x8xf32>
    %85 = arith.truncf %82 : vector<8x8xf32> to vector<8x8xbf16>
    %86 = arith.truncf %83 : vector<8x8xf32> to vector<8x8xbf16>
    %cst_27 = arith.constant dense<0.000000e+00> : vector<8x8xf32>
    %87 = tpu.matmul %85, %86, %cst_27 {dimension_numbers = #tpu.dot_dimension_numbers<[1], [1], [0], [0], [0, 0, 1, 0], [], []>} : vector<8x8xbf16>, vector<8x8xbf16>, vector<8x8xf32> -> vector<8x8xf32>
    %88 = vector.broadcast %27 : vector<1x8xf32> to vector<8x8xf32>
    %89 = arith.addf %87, %88 : vector<8x8xf32>
    %cst_28 = arith.constant dense<0xFF800000> : vector<8xf32>
    %90 = vector.multi_reduction <maximumf>, %89, %cst_28 [1] : vector<8x8xf32> to vector<8xf32>
    %91 = vector.shape_cast %90 : vector<8xf32> to vector<8x1xf32>
    %92 = vector.broadcast %91 : vector<8x1xf32> to vector<8x8xf32>
    %93 = arith.subf %89, %92 : vector<8x8xf32>
    %94 = math.exp %93 : vector<8x8xf32>
    %cst_29 = arith.constant dense<0.000000e+00> : vector<8xf32>
    %95 = vector.multi_reduction <add>, %94, %cst_29 [1] : vector<8x8xf32> to vector<8xf32>
    %96 = vector.shape_cast %95 : vector<8xf32> to vector<8x1xf32>
    %97 = tpu.reciprocal %96 {approx = true} : vector<8x1xf32> -> vector<8x1xf32>
    %98 = vector.broadcast %97 : vector<8x1xf32> to vector<8x8xf32>
    %99 = arith.mulf %94, %98 : vector<8x8xf32>
    %100 = arith.truncf %99 : vector<8x8xf32> to vector<8x8xbf16>
    %101 = arith.truncf %84 : vector<8x8xf32> to vector<8x8xbf16>
    %cst_30 = arith.constant dense<0.000000e+00> : vector<8x8xf32>
    %102 = tpu.matmul %100, %101, %cst_30 {dimension_numbers = #tpu.dot_dimension_numbers<[1], [0], [0], [1], [0, 0, 1, 1], [], []>} : vector<8x8xbf16>, vector<8x8xbf16>, vector<8x8xf32> -> vector<8x8xf32>
    %103 = vector.extract_strided_slice %37 {offsets = [0, 24], sizes = [8, 8], strides = [1, 1]} : vector<8x32xf32> to vector<8x8xf32>
    %104 = vector.extract_strided_slice %38 {offsets = [0, 24], sizes = [8, 8], strides = [1, 1]} : vector<8x32xf32> to vector<8x8xf32>
    %105 = vector.extract_strided_slice %39 {offsets = [0, 24], sizes = [8, 8], strides = [1, 1]} : vector<8x32xf32> to vector<8x8xf32>
    %106 = arith.truncf %103 : vector<8x8xf32> to vector<8x8xbf16>
    %107 = arith.truncf %104 : vector<8x8xf32> to vector<8x8xbf16>
    %cst_31 = arith.constant dense<0.000000e+00> : vector<8x8xf32>
    %108 = tpu.matmul %106, %107, %cst_31 {dimension_numbers = #tpu.dot_dimension_numbers<[1], [1], [0], [0], [0, 0, 1, 0], [], []>} : vector<8x8xbf16>, vector<8x8xbf16>, vector<8x8xf32> -> vector<8x8xf32>
    %109 = vector.broadcast %27 : vector<1x8xf32> to vector<8x8xf32>
    %110 = arith.addf %108, %109 : vector<8x8xf32>
    %cst_32 = arith.constant dense<0xFF800000> : vector<8xf32>
    %111 = vector.multi_reduction <maximumf>, %110, %cst_32 [1] : vector<8x8xf32> to vector<8xf32>
    %112 = vector.shape_cast %111 : vector<8xf32> to vector<8x1xf32>
    %113 = vector.broadcast %112 : vector<8x1xf32> to vector<8x8xf32>
    %114 = arith.subf %110, %113 : vector<8x8xf32>
    %115 = math.exp %114 : vector<8x8xf32>
    %cst_33 = arith.constant dense<0.000000e+00> : vector<8xf32>
    %116 = vector.multi_reduction <add>, %115, %cst_33 [1] : vector<8x8xf32> to vector<8xf32>
    %117 = vector.shape_cast %116 : vector<8xf32> to vector<8x1xf32>
    %118 = tpu.reciprocal %117 {approx = true} : vector<8x1xf32> -> vector<8x1xf32>
    %119 = vector.broadcast %118 : vector<8x1xf32> to vector<8x8xf32>
    %120 = arith.mulf %115, %119 : vector<8x8xf32>
    %121 = arith.truncf %120 : vector<8x8xf32> to vector<8x8xbf16>
    %122 = arith.truncf %105 : vector<8x8xf32> to vector<8x8xbf16>
    %cst_34 = arith.constant dense<0.000000e+00> : vector<8x8xf32>
    %123 = tpu.matmul %121, %122, %cst_34 {dimension_numbers = #tpu.dot_dimension_numbers<[1], [0], [0], [1], [0, 0, 1, 1], [], []>} : vector<8x8xbf16>, vector<8x8xbf16>, vector<8x8xf32> -> vector<8x8xf32>
    %124 = tpu.concatenate %60, %81, %102, %123 in 1 : vector<8x8xf32>, vector<8x8xf32>, vector<8x8xf32>, vector<8x8xf32> -> vector<8x32xf32>
    %c0_35 = arith.constant 0 : index
    %c0_36 = arith.constant 0 : index
    %125 = vector.load %arg7[%c0_35, %c0_36] : memref<32x32xf32, #tpu.memory_space<vmem>>, vector<32x32xf32>
    %126 = arith.truncf %124 : vector<8x32xf32> to vector<8x32xbf16>
    %127 = arith.truncf %125 : vector<32x32xf32> to vector<32x32xbf16>
    %cst_37 = arith.constant dense<0.000000e+00> : vector<8x32xf32>
    %128 = tpu.matmul %126, %127, %cst_37 {dimension_numbers = #tpu.dot_dimension_numbers<[1], [0], [0], [1], [0, 0, 1, 1], [], []>} : vector<8x32xbf16>, vector<32x32xbf16>, vector<8x32xf32> -> vector<8x32xf32>
    %c0_38 = arith.constant 0 : index
    %c0_39 = arith.constant 0 : index
    %129 = vector.load %arg8[%c0_38, %c0_39] : memref<1x32xf32, #tpu.memory_space<vmem>>, vector<1x32xf32>
    %130 = vector.broadcast %129 : vector<1x32xf32> to vector<8x32xf32>
    %131 = arith.addf %128, %130 : vector<8x32xf32>
    %132 = arith.addf %131, %25 : vector<8x32xf32>
    %c0_40 = arith.constant 0 : index
    %c0_41 = arith.constant 0 : index
    %133 = vector.load %arg9[%c0_40, %c0_41] : memref<1x32xf32, #tpu.memory_space<vmem>>, vector<1x32xf32>
    %c0_42 = arith.constant 0 : index
    %c0_43 = arith.constant 0 : index
    %134 = vector.load %arg10[%c0_42, %c0_43] : memref<1x32xf32, #tpu.memory_space<vmem>>, vector<1x32xf32>
    %cst_44 = arith.constant dense<0.000000e+00> : vector<8xf32>
    %135 = vector.multi_reduction <add>, %132, %cst_44 [1] : vector<8x32xf32> to vector<8xf32>
    %136 = vector.shape_cast %135 : vector<8xf32> to vector<8x1xf32>
    %cst_45 = arith.constant 3.200000e+01 : f32
    %137 = vector.broadcast %cst_45 : f32 to vector<8x1xf32>
    %138 = arith.divf %136, %137 : vector<8x1xf32>
    %139 = vector.broadcast %138 : vector<8x1xf32> to vector<8x32xf32>
    %140 = arith.subf %132, %139 : vector<8x32xf32>
    %141 = arith.mulf %140, %140 : vector<8x32xf32>
    %cst_46 = arith.constant dense<0.000000e+00> : vector<8xf32>
    %142 = vector.multi_reduction <add>, %141, %cst_46 [1] : vector<8x32xf32> to vector<8xf32>
    %143 = vector.shape_cast %142 : vector<8xf32> to vector<8x1xf32>
    %cst_47 = arith.constant 3.200000e+01 : f32
    %144 = vector.broadcast %cst_47 : f32 to vector<8x1xf32>
    %145 = arith.divf %143, %144 : vector<8x1xf32>
    %146 = vector.broadcast %138 : vector<8x1xf32> to vector<8x32xf32>
    %147 = arith.subf %132, %146 : vector<8x32xf32>
    %cst_48 = arith.constant 9.99999996E-13 : f32
    %148 = vector.broadcast %cst_48 : f32 to vector<8x1xf32>
    %149 = arith.addf %145, %148 : vector<8x1xf32>
    %150 = math.rsqrt %149 : vector<8x1xf32>
    %151 = vector.broadcast %150 : vector<8x1xf32> to vector<8x32xf32>
    %152 = arith.mulf %147, %151 : vector<8x32xf32>
    %153 = vector.broadcast %133 : vector<1x32xf32> to vector<8x32xf32>
    %154 = arith.mulf %152, %153 : vector<8x32xf32>
    %155 = vector.broadcast %134 : vector<1x32xf32> to vector<8x32xf32>
    %156 = arith.addf %154, %155 : vector<8x32xf32>
    %c0_49 = arith.constant 0 : index
    %c0_50 = arith.constant 0 : index
    %157 = vector.load %arg11[%c0_49, %c0_50] : memref<32x64xf32, #tpu.memory_space<vmem>>, vector<32x64xf32>
    %158 = arith.truncf %156 : vector<8x32xf32> to vector<8x32xbf16>
    %159 = arith.truncf %157 : vector<32x64xf32> to vector<32x64xbf16>
    %cst_51 = arith.constant dense<0.000000e+00> : vector<8x64xf32>
    %160 = tpu.matmul %158, %159, %cst_51 {dimension_numbers = #tpu.dot_dimension_numbers<[1], [0], [0], [1], [0, 0, 1, 1], [], []>} : vector<8x32xbf16>, vector<32x64xbf16>, vector<8x64xf32> -> vector<8x64xf32>
    %c0_52 = arith.constant 0 : index
    %c0_53 = arith.constant 0 : index
    %161 = vector.load %arg12[%c0_52, %c0_53] : memref<1x64xf32, #tpu.memory_space<vmem>>, vector<1x64xf32>
    %162 = vector.broadcast %161 : vector<1x64xf32> to vector<8x64xf32>
    %163 = arith.addf %160, %162 : vector<8x64xf32>
    %cst_54 = arith.constant 5.000000e-01 : f32
    %164 = vector.broadcast %cst_54 : f32 to vector<8x64xf32>
    %165 = arith.mulf %164, %163 : vector<8x64xf32>
    %cst_55 = arith.constant 4.471500e-02 : f32
    %166 = vector.broadcast %cst_55 : f32 to vector<8x64xf32>
    %167 = arith.mulf %166, %163 : vector<8x64xf32>
    %168 = arith.mulf %167, %163 : vector<8x64xf32>
    %169 = arith.mulf %168, %163 : vector<8x64xf32>
    %170 = arith.addf %163, %169 : vector<8x64xf32>
    %cst_56 = arith.constant 0.797884583 : f32
    %171 = vector.broadcast %cst_56 : f32 to vector<8x64xf32>
    %172 = arith.mulf %171, %170 : vector<8x64xf32>
    %173 = math.tanh %172 : vector<8x64xf32>
    %cst_57 = arith.constant 1.000000e+00 : f32
    %174 = vector.broadcast %cst_57 : f32 to vector<8x64xf32>
    %175 = arith.addf %174, %173 : vector<8x64xf32>
    %176 = arith.mulf %165, %175 : vector<8x64xf32>
    %c0_58 = arith.constant 0 : index
    %c0_59 = arith.constant 0 : index
    %177 = vector.load %arg13[%c0_58, %c0_59] : memref<64x32xf32, #tpu.memory_space<vmem>>, vector<64x32xf32>
    %178 = arith.truncf %176 : vector<8x64xf32> to vector<8x64xbf16>
    %179 = arith.truncf %177 : vector<64x32xf32> to vector<64x32xbf16>
    %cst_60 = arith.constant dense<0.000000e+00> : vector<8x32xf32>
    %180 = tpu.matmul %178, %179, %cst_60 {dimension_numbers = #tpu.dot_dimension_numbers<[1], [0], [0], [1], [0, 0, 1, 1], [], []>} : vector<8x64xbf16>, vector<64x32xbf16>, vector<8x32xf32> -> vector<8x32xf32>
    %c0_61 = arith.constant 0 : index
    %c0_62 = arith.constant 0 : index
    %181 = vector.load %arg14[%c0_61, %c0_62] : memref<1x32xf32, #tpu.memory_space<vmem>>, vector<1x32xf32>
    %182 = vector.broadcast %181 : vector<1x32xf32> to vector<8x32xf32>
    %183 = arith.addf %180, %182 : vector<8x32xf32>
    %184 = arith.addf %183, %156 : vector<8x32xf32>
    %c0_63 = arith.constant 0 : index
    %c0_64 = arith.constant 0 : index
    %185 = vector.load %arg15[%c0_63, %c0_64] : memref<1x32xf32, #tpu.memory_space<vmem>>, vector<1x32xf32>
    %c0_65 = arith.constant 0 : index
    %c0_66 = arith.constant 0 : index
    %186 = vector.load %arg16[%c0_65, %c0_66] : memref<1x32xf32, #tpu.memory_space<vmem>>, vector<1x32xf32>
    %cst_67 = arith.constant dense<0.000000e+00> : vector<8xf32>
    %187 = vector.multi_reduction <add>, %184, %cst_67 [1] : vector<8x32xf32> to vector<8xf32>
    %188 = vector.shape_cast %187 : vector<8xf32> to vector<8x1xf32>
    %cst_68 = arith.constant 3.200000e+01 : f32
    %189 = vector.broadcast %cst_68 : f32 to vector<8x1xf32>
    %190 = arith.divf %188, %189 : vector<8x1xf32>
    %191 = vector.broadcast %190 : vector<8x1xf32> to vector<8x32xf32>
    %192 = arith.subf %184, %191 : vector<8x32xf32>
    %193 = arith.mulf %192, %192 : vector<8x32xf32>
    %cst_69 = arith.constant dense<0.000000e+00> : vector<8xf32>
    %194 = vector.multi_reduction <add>, %193, %cst_69 [1] : vector<8x32xf32> to vector<8xf32>
    %195 = vector.shape_cast %194 : vector<8xf32> to vector<8x1xf32>
    %cst_70 = arith.constant 3.200000e+01 : f32
    %196 = vector.broadcast %cst_70 : f32 to vector<8x1xf32>
    %197 = arith.divf %195, %196 : vector<8x1xf32>
    %198 = vector.broadcast %190 : vector<8x1xf32> to vector<8x32xf32>
    %199 = arith.subf %184, %198 : vector<8x32xf32>
    %cst_71 = arith.constant 9.99999996E-13 : f32
    %200 = vector.broadcast %cst_71 : f32 to vector<8x1xf32>
    %201 = arith.addf %197, %200 : vector<8x1xf32>
    %202 = math.rsqrt %201 : vector<8x1xf32>
    %203 = vector.broadcast %202 : vector<8x1xf32> to vector<8x32xf32>
    %204 = arith.mulf %199, %203 : vector<8x32xf32>
    %205 = vector.broadcast %185 : vector<1x32xf32> to vector<8x32xf32>
    %206 = arith.mulf %204, %205 : vector<8x32xf32>
    %207 = vector.broadcast %186 : vector<1x32xf32> to vector<8x32xf32>
    %208 = arith.addf %206, %207 : vector<8x32xf32>
    %c0_72 = arith.constant 0 : index
    %c0_73 = arith.constant 0 : index
    %c0_74 = arith.constant 0 : index
    %209 = vector.load %arg17[%c0_72, %c0_73, %c0_74] : memref<1x8x32xf32, #tpu.memory_space<vmem>>, vector<1x8x32xf32>
    %210 = vector.shape_cast %209 : vector<1x8x32xf32> to vector<8x32xf32>
    %211 = vector.shape_cast %208 : vector<8x32xf32> to vector<1x8x32xf32>
    tpu.vector_store %arg17[%c0_72, %c0_73, %c0_74], %211 {strides = array<i32>} : memref<1x8x32xf32, #tpu.memory_space<vmem>>, vector<1x8x32xf32>,
    return
  }
  func.func @transform_0(%arg0: i32) -> (i32, i32, i32) {
    %c0_i32 = arith.constant 0 : i32
    %c0_i32_0 = arith.constant 0 : i32
    %c0_i32_1 = arith.constant 0 : i32
    return %arg0, %c0_i32, %c0_i32_0 : i32, i32, i32
  }
  func.func @transform_1(%arg0: i32) -> (i32, i32, i32) {
    %c0_i32 = arith.constant 0 : i32
    %c0_i32_0 = arith.constant 0 : i32
    %c0_i32_1 = arith.constant 0 : i32
    return %arg0, %c0_i32, %c0_i32_0 : i32, i32, i32
  }
  func.func @transform_2(%arg0: i32) -> (i32, i32) {
    %c0_i32 = arith.constant 0 : i32
    %c0_i32_0 = arith.constant 0 : i32
    %c0_i32_1 = arith.constant 0 : i32
    return %c0_i32, %c0_i32_0 : i32, i32
  }
  func.func @transform_3(%arg0: i32) -> (i32, i32) {
    %c0_i32 = arith.constant 0 : i32
    %c0_i32_0 = arith.constant 0 : i32
    %c0_i32_1 = arith.constant 0 : i32
    return %c0_i32, %c0_i32_0 : i32, i32
  }
  func.func @transform_4(%arg0: i32) -> (i32, i32) {
    %c0_i32 = arith.constant 0 : i32
    %c0_i32_0 = arith.constant 0 : i32
    %c0_i32_1 = arith.constant 0 : i32
    return %c0_i32, %c0_i32_0 : i32, i32
  }
  func.func @transform_5(%arg0: i32) -> (i32, i32) {
    %c0_i32 = arith.constant 0 : i32
    %c0_i32_0 = arith.constant 0 : i32
    %c0_i32_1 = arith.constant 0 : i32
    return %c0_i32, %c0_i32_0 : i32, i32
  }
  func.func @transform_6(%arg0: i32) -> (i32, i32) {
    %c0_i32 = arith.constant 0 : i32
    %c0_i32_0 = arith.constant 0 : i32
    %c0_i32_1 = arith.constant 0 : i32
    return %c0_i32, %c0_i32_0 : i32, i32
  }
  func.func @transform_7(%arg0: i32) -> (i32, i32) {
    %c0_i32 = arith.constant 0 : i32
    %c0_i32_0 = arith.constant 0 : i32
    %c0_i32_1 = arith.constant 0 : i32
    return %c0_i32, %c0_i32_0 : i32, i32
  }
  func.func @transform_8(%arg0: i32) -> (i32, i32) {
    %c0_i32 = arith.constant 0 : i32
    %c0_i32_0 = arith.constant 0 : i32
    %c0_i32_1 = arith.constant 0 : i32
    return %c0_i32, %c0_i32_0 : i32, i32
  }
  func.func @transform_9(%arg0: i32) -> (i32, i32) {
    %c0_i32 = arith.constant 0 : i32
    %c0_i32_0 = arith.constant 0 : i32
    %c0_i32_1 = arith.constant 0 : i32
    return %c0_i32, %c0_i32_0 : i32, i32
  }
  func.func @transform_10(%arg0: i32) -> (i32, i32) {
    %c0_i32 = arith.constant 0 : i32
    %c0_i32_0 = arith.constant 0 : i32
    %c0_i32_1 = arith.constant 0 : i32
    return %c0_i32, %c0_i32_0 : i32, i32
  }
  func.func @transform_11(%arg0: i32) -> (i32, i32) {
    %c0_i32 = arith.constant 0 : i32
    %c0_i32_0 = arith.constant 0 : i32
    %c0_i32_1 = arith.constant 0 : i32
    return %c0_i32, %c0_i32_0 : i32, i32
  }
  func.func @transform_12(%arg0: i32) -> (i32, i32) {
    %c0_i32 = arith.constant 0 : i32
    %c0_i32_0 = arith.constant 0 : i32
    %c0_i32_1 = arith.constant 0 : i32
    return %c0_i32, %c0_i32_0 : i32, i32
  }
  func.func @transform_13(%arg0: i32) -> (i32, i32) {
    %c0_i32 = arith.constant 0 : i32
    %c0_i32_0 = arith.constant 0 : i32
    %c0_i32_1 = arith.constant 0 : i32
    return %c0_i32, %c0_i32_0 : i32, i32
  }
  func.func @transform_14(%arg0: i32) -> (i32, i32) {
    %c0_i32 = arith.constant 0 : i32
    %c0_i32_0 = arith.constant 0 : i32
    %c0_i32_1 = arith.constant 0 : i32
    return %c0_i32, %c0_i32_0 : i32, i32
  }
  func.func @transform_15(%arg0: i32) -> (i32, i32) {
    %c0_i32 = arith.constant 0 : i32
    %c0_i32_0 = arith.constant 0 : i32
    %c0_i32_1 = arith.constant 0 : i32
    return %c0_i32, %c0_i32_0 : i32, i32
  }
  func.func @transform_16(%arg0: i32) -> (i32, i32, i32) {
    %c0_i32 = arith.constant 0 : i32
    %c0_i32_0 = arith.constant 0 : i32
    %c0_i32_1 = arith.constant 0 : i32
    return %arg0, %c0_i32, %c0_i32_0 : i32, i32, i32
  }
}

module attributes {stable_mosaic.version = 11 : i64} {
  func.func @_encoder_layer_kernel(%arg0: i32, %arg1: memref<1x8x32xf32, #tpu.memory_space<vmem>>, %arg2: memref<1x1x8xf32, #tpu.memory_space<vmem>>, %arg3: memref<32x96xf32, #tpu.memory_space<vmem>>, %arg4: memref<1x96xf32, #tpu.memory_space<vmem>>, %arg5: memref<32x32xf32, #tpu.memory_space<vmem>>, %arg6: memref<1x32xf32, #tpu.memory_space<vmem>>, %arg7: memref<1x32xf32, #tpu.memory_space<vmem>>, %arg8: memref<1x32xf32, #tpu.memory_space<vmem>>, %arg9: memref<32x64xf32, #tpu.memory_space<vmem>>, %arg10: memref<1x64xf32, #tpu.memory_space<vmem>>, %arg11: memref<64x32xf32, #tpu.memory_space<vmem>>, %arg12: memref<1x32xf32, #tpu.memory_space<vmem>>, %arg13: memref<1x32xf32, #tpu.memory_space<vmem>>, %arg14: memref<1x32xf32, #tpu.memory_space<vmem>>, %arg15: memref<32x32xf32, #tpu.memory_space<vmem>>, %arg16: memref<1x32xf32, #tpu.memory_space<vmem>>, %arg17: memref<1x8x32xf32, #tpu.memory_space<vmem>>, %arg18: memref<1x1x32xf32, #tpu.memory_space<vmem>>) attributes {dimension_semantics = [#tpu.dimension_semantics<parallel>], iteration_bounds = array<i64: 2>, scalar_prefetch = 0 : i64, scratch_operands = 0 : i64, tpu.core_type = #tpu.core_type<tc>, window_params = [{transform_indices = @transform_0, window_bounds = array<i64: 1, 8, 32>}, {transform_indices = @transform_1, window_bounds = array<i64: 1, 1, 8>}, {pipeline_mode = #tpu.pipeline_mode<synchronous>, transform_indices = @transform_2, window_bounds = array<i64: 32, 96>}, {pipeline_mode = #tpu.pipeline_mode<synchronous>, transform_indices = @transform_3, window_bounds = array<i64: 1, 96>}, {pipeline_mode = #tpu.pipeline_mode<synchronous>, transform_indices = @transform_4, window_bounds = array<i64: 32, 32>}, {pipeline_mode = #tpu.pipeline_mode<synchronous>, transform_indices = @transform_5, window_bounds = array<i64: 1, 32>}, {pipeline_mode = #tpu.pipeline_mode<synchronous>, transform_indices = @transform_6, window_bounds = array<i64: 1, 32>}, {pipeline_mode = #tpu.pipeline_mode<synchronous>, transform_indices = @transform_7, window_bounds = array<i64: 1, 32>}, {pipeline_mode = #tpu.pipeline_mode<synchronous>, transform_indices = @transform_8, window_bounds = array<i64: 32, 64>}, {pipeline_mode = #tpu.pipeline_mode<synchronous>, transform_indices = @transform_9, window_bounds = array<i64: 1, 64>}, {pipeline_mode = #tpu.pipeline_mode<synchronous>, transform_indices = @transform_10, window_bounds = array<i64: 64, 32>}, {pipeline_mode = #tpu.pipeline_mode<synchronous>, transform_indices = @transform_11, window_bounds = array<i64: 1, 32>}, {pipeline_mode = #tpu.pipeline_mode<synchronous>, transform_indices = @transform_12, window_bounds = array<i64: 1, 32>}, {pipeline_mode = #tpu.pipeline_mode<synchronous>, transform_indices = @transform_13, window_bounds = array<i64: 1, 32>}, {pipeline_mode = #tpu.pipeline_mode<synchronous>, transform_indices = @transform_14, window_bounds = array<i64: 32, 32>}, {pipeline_mode = #tpu.pipeline_mode<synchronous>, transform_indices = @transform_15, window_bounds = array<i64: 1, 32>}, {transform_indices = @transform_16, window_bounds = array<i64: 1, 8, 32>}, {transform_indices = @transform_17, window_bounds = array<i64: 1, 1, 32>}]} {
    %c0 = arith.constant 0 : index
    %c0_0 = arith.constant 0 : index
    %c0_1 = arith.constant 0 : index
    %0 = vector.load %arg1[%c0, %c0_0, %c0_1] : memref<1x8x32xf32, #tpu.memory_space<vmem>>, vector<1x8x32xf32>
    %1 = vector.shape_cast %0 : vector<1x8x32xf32> to vector<8x32xf32>
    %c0_2 = arith.constant 0 : index
    %c0_3 = arith.constant 0 : index
    %c0_4 = arith.constant 0 : index
    %2 = vector.load %arg2[%c0_2, %c0_3, %c0_4] : memref<1x1x8xf32, #tpu.memory_space<vmem>>, vector<1x1x8xf32>
    %3 = vector.shape_cast %2 : vector<1x1x8xf32> to vector<1x8xf32>
    %c0_5 = arith.constant 0 : index
    %c0_6 = arith.constant 0 : index
    %4 = vector.load %arg3[%c0_5, %c0_6] : memref<32x96xf32, #tpu.memory_space<vmem>>, vector<32x96xf32>
    %5 = arith.truncf %1 : vector<8x32xf32> to vector<8x32xbf16>
    %6 = arith.truncf %4 : vector<32x96xf32> to vector<32x96xbf16>
    %cst = arith.constant dense<0.000000e+00> : vector<8x96xf32>
    %7 = tpu.matmul %5, %6, %cst {dimension_numbers = #tpu.dot_dimension_numbers<[1], [0], [0], [1], [0, 0, 1, 1], [], []>} : vector<8x32xbf16>, vector<32x96xbf16>, vector<8x96xf32> -> vector<8x96xf32>
    %c0_7 = arith.constant 0 : index
    %c0_8 = arith.constant 0 : index
    %8 = vector.load %arg4[%c0_7, %c0_8] : memref<1x96xf32, #tpu.memory_space<vmem>>, vector<1x96xf32>
    %9 = vector.broadcast %8 : vector<1x96xf32> to vector<8x96xf32>
    %10 = arith.addf %7, %9 : vector<8x96xf32>
    %11 = vector.extract_strided_slice %10 {offsets = [0, 0], sizes = [8, 32], strides = [1, 1]} : vector<8x96xf32> to vector<8x32xf32>
    %cst_9 = arith.constant 0.353553385 : f32
    %12 = vector.broadcast %cst_9 : f32 to vector<8x32xf32>
    %13 = arith.mulf %11, %12 : vector<8x32xf32>
    %14 = vector.extract_strided_slice %10 {offsets = [0, 32], sizes = [8, 32], strides = [1, 1]} : vector<8x96xf32> to vector<8x32xf32>
    %15 = vector.extract_strided_slice %10 {offsets = [0, 64], sizes = [8, 32], strides = [1, 1]} : vector<8x96xf32> to vector<8x32xf32>
    %16 = vector.extract_strided_slice %13 {offsets = [0, 0], sizes = [8, 8], strides = [1, 1]} : vector<8x32xf32> to vector<8x8xf32>
    %17 = vector.extract_strided_slice %14 {offsets = [0, 0], sizes = [8, 8], strides = [1, 1]} : vector<8x32xf32> to vector<8x8xf32>
    %18 = vector.extract_strided_slice %15 {offsets = [0, 0], sizes = [8, 8], strides = [1, 1]} : vector<8x32xf32> to vector<8x8xf32>
    %19 = arith.truncf %16 : vector<8x8xf32> to vector<8x8xbf16>
    %20 = arith.truncf %17 : vector<8x8xf32> to vector<8x8xbf16>
    %cst_10 = arith.constant dense<0.000000e+00> : vector<8x8xf32>
    %21 = tpu.matmul %19, %20, %cst_10 {dimension_numbers = #tpu.dot_dimension_numbers<[1], [1], [0], [0], [0, 0, 1, 0], [], []>} : vector<8x8xbf16>, vector<8x8xbf16>, vector<8x8xf32> -> vector<8x8xf32>
    %22 = vector.broadcast %3 : vector<1x8xf32> to vector<8x8xf32>
    %23 = arith.addf %21, %22 : vector<8x8xf32>
    %cst_11 = arith.constant dense<0xFF800000> : vector<8xf32>
    %24 = vector.multi_reduction <maximumf>, %23, %cst_11 [1] : vector<8x8xf32> to vector<8xf32>
    %25 = vector.shape_cast %24 : vector<8xf32> to vector<8x1xf32>
    %26 = vector.broadcast %25 : vector<8x1xf32> to vector<8x8xf32>
    %27 = arith.subf %23, %26 : vector<8x8xf32>
    %28 = math.exp %27 : vector<8x8xf32>
    %cst_12 = arith.constant dense<0.000000e+00> : vector<8xf32>
    %29 = vector.multi_reduction <add>, %28, %cst_12 [1] : vector<8x8xf32> to vector<8xf32>
    %30 = vector.shape_cast %29 : vector<8xf32> to vector<8x1xf32>
    %31 = tpu.reciprocal %30 {approx = true} : vector<8x1xf32> -> vector<8x1xf32>
    %32 = vector.broadcast %31 : vector<8x1xf32> to vector<8x8xf32>
    %33 = arith.mulf %28, %32 : vector<8x8xf32>
    %34 = arith.truncf %33 : vector<8x8xf32> to vector<8x8xbf16>
    %35 = arith.truncf %18 : vector<8x8xf32> to vector<8x8xbf16>
    %cst_13 = arith.constant dense<0.000000e+00> : vector<8x8xf32>
    %36 = tpu.matmul %34, %35, %cst_13 {dimension_numbers = #tpu.dot_dimension_numbers<[1], [0], [0], [1], [0, 0, 1, 1], [], []>} : vector<8x8xbf16>, vector<8x8xbf16>, vector<8x8xf32> -> vector<8x8xf32>
    %37 = vector.extract_strided_slice %13 {offsets = [0, 8], sizes = [8, 8], strides = [1, 1]} : vector<8x32xf32> to vector<8x8xf32>
    %38 = vector.extract_strided_slice %14 {offsets = [0, 8], sizes = [8, 8], strides = [1, 1]} : vector<8x32xf32> to vector<8x8xf32>
    %39 = vector.extract_strided_slice %15 {offsets = [0, 8], sizes = [8, 8], strides = [1, 1]} : vector<8x32xf32> to vector<8x8xf32>
    %40 = arith.truncf %37 : vector<8x8xf32> to vector<8x8xbf16>
    %41 = arith.truncf %38 : vector<8x8xf32> to vector<8x8xbf16>
    %cst_14 = arith.constant dense<0.000000e+00> : vector<8x8xf32>
    %42 = tpu.matmul %40, %41, %cst_14 {dimension_numbers = #tpu.dot_dimension_numbers<[1], [1], [0], [0], [0, 0, 1, 0], [], []>} : vector<8x8xbf16>, vector<8x8xbf16>, vector<8x8xf32> -> vector<8x8xf32>
    %43 = vector.broadcast %3 : vector<1x8xf32> to vector<8x8xf32>
    %44 = arith.addf %42, %43 : vector<8x8xf32>
    %cst_15 = arith.constant dense<0xFF800000> : vector<8xf32>
    %45 = vector.multi_reduction <maximumf>, %44, %cst_15 [1] : vector<8x8xf32> to vector<8xf32>
    %46 = vector.shape_cast %45 : vector<8xf32> to vector<8x1xf32>
    %47 = vector.broadcast %46 : vector<8x1xf32> to vector<8x8xf32>
    %48 = arith.subf %44, %47 : vector<8x8xf32>
    %49 = math.exp %48 : vector<8x8xf32>
    %cst_16 = arith.constant dense<0.000000e+00> : vector<8xf32>
    %50 = vector.multi_reduction <add>, %49, %cst_16 [1] : vector<8x8xf32> to vector<8xf32>
    %51 = vector.shape_cast %50 : vector<8xf32> to vector<8x1xf32>
    %52 = tpu.reciprocal %51 {approx = true} : vector<8x1xf32> -> vector<8x1xf32>
    %53 = vector.broadcast %52 : vector<8x1xf32> to vector<8x8xf32>
    %54 = arith.mulf %49, %53 : vector<8x8xf32>
    %55 = arith.truncf %54 : vector<8x8xf32> to vector<8x8xbf16>
    %56 = arith.truncf %39 : vector<8x8xf32> to vector<8x8xbf16>
    %cst_17 = arith.constant dense<0.000000e+00> : vector<8x8xf32>
    %57 = tpu.matmul %55, %56, %cst_17 {dimension_numbers = #tpu.dot_dimension_numbers<[1], [0], [0], [1], [0, 0, 1, 1], [], []>} : vector<8x8xbf16>, vector<8x8xbf16>, vector<8x8xf32> -> vector<8x8xf32>
    %58 = vector.extract_strided_slice %13 {offsets = [0, 16], sizes = [8, 8], strides = [1, 1]} : vector<8x32xf32> to vector<8x8xf32>
    %59 = vector.extract_strided_slice %14 {offsets = [0, 16], sizes = [8, 8], strides = [1, 1]} : vector<8x32xf32> to vector<8x8xf32>
    %60 = vector.extract_strided_slice %15 {offsets = [0, 16], sizes = [8, 8], strides = [1, 1]} : vector<8x32xf32> to vector<8x8xf32>
    %61 = arith.truncf %58 : vector<8x8xf32> to vector<8x8xbf16>
    %62 = arith.truncf %59 : vector<8x8xf32> to vector<8x8xbf16>
    %cst_18 = arith.constant dense<0.000000e+00> : vector<8x8xf32>
    %63 = tpu.matmul %61, %62, %cst_18 {dimension_numbers = #tpu.dot_dimension_numbers<[1], [1], [0], [0], [0, 0, 1, 0], [], []>} : vector<8x8xbf16>, vector<8x8xbf16>, vector<8x8xf32> -> vector<8x8xf32>
    %64 = vector.broadcast %3 : vector<1x8xf32> to vector<8x8xf32>
    %65 = arith.addf %63, %64 : vector<8x8xf32>
    %cst_19 = arith.constant dense<0xFF800000> : vector<8xf32>
    %66 = vector.multi_reduction <maximumf>, %65, %cst_19 [1] : vector<8x8xf32> to vector<8xf32>
    %67 = vector.shape_cast %66 : vector<8xf32> to vector<8x1xf32>
    %68 = vector.broadcast %67 : vector<8x1xf32> to vector<8x8xf32>
    %69 = arith.subf %65, %68 : vector<8x8xf32>
    %70 = math.exp %69 : vector<8x8xf32>
    %cst_20 = arith.constant dense<0.000000e+00> : vector<8xf32>
    %71 = vector.multi_reduction <add>, %70, %cst_20 [1] : vector<8x8xf32> to vector<8xf32>
    %72 = vector.shape_cast %71 : vector<8xf32> to vector<8x1xf32>
    %73 = tpu.reciprocal %72 {approx = true} : vector<8x1xf32> -> vector<8x1xf32>
    %74 = vector.broadcast %73 : vector<8x1xf32> to vector<8x8xf32>
    %75 = arith.mulf %70, %74 : vector<8x8xf32>
    %76 = arith.truncf %75 : vector<8x8xf32> to vector<8x8xbf16>
    %77 = arith.truncf %60 : vector<8x8xf32> to vector<8x8xbf16>
    %cst_21 = arith.constant dense<0.000000e+00> : vector<8x8xf32>
    %78 = tpu.matmul %76, %77, %cst_21 {dimension_numbers = #tpu.dot_dimension_numbers<[1], [0], [0], [1], [0, 0, 1, 1], [], []>} : vector<8x8xbf16>, vector<8x8xbf16>, vector<8x8xf32> -> vector<8x8xf32>
    %79 = vector.extract_strided_slice %13 {offsets = [0, 24], sizes = [8, 8], strides = [1, 1]} : vector<8x32xf32> to vector<8x8xf32>
    %80 = vector.extract_strided_slice %14 {offsets = [0, 24], sizes = [8, 8], strides = [1, 1]} : vector<8x32xf32> to vector<8x8xf32>
    %81 = vector.extract_strided_slice %15 {offsets = [0, 24], sizes = [8, 8], strides = [1, 1]} : vector<8x32xf32> to vector<8x8xf32>
    %82 = arith.truncf %79 : vector<8x8xf32> to vector<8x8xbf16>
    %83 = arith.truncf %80 : vector<8x8xf32> to vector<8x8xbf16>
    %cst_22 = arith.constant dense<0.000000e+00> : vector<8x8xf32>
    %84 = tpu.matmul %82, %83, %cst_22 {dimension_numbers = #tpu.dot_dimension_numbers<[1], [1], [0], [0], [0, 0, 1, 0], [], []>} : vector<8x8xbf16>, vector<8x8xbf16>, vector<8x8xf32> -> vector<8x8xf32>
    %85 = vector.broadcast %3 : vector<1x8xf32> to vector<8x8xf32>
    %86 = arith.addf %84, %85 : vector<8x8xf32>
    %cst_23 = arith.constant dense<0xFF800000> : vector<8xf32>
    %87 = vector.multi_reduction <maximumf>, %86, %cst_23 [1] : vector<8x8xf32> to vector<8xf32>
    %88 = vector.shape_cast %87 : vector<8xf32> to vector<8x1xf32>
    %89 = vector.broadcast %88 : vector<8x1xf32> to vector<8x8xf32>
    %90 = arith.subf %86, %89 : vector<8x8xf32>
    %91 = math.exp %90 : vector<8x8xf32>
    %cst_24 = arith.constant dense<0.000000e+00> : vector<8xf32>
    %92 = vector.multi_reduction <add>, %91, %cst_24 [1] : vector<8x8xf32> to vector<8xf32>
    %93 = vector.shape_cast %92 : vector<8xf32> to vector<8x1xf32>
    %94 = tpu.reciprocal %93 {approx = true} : vector<8x1xf32> -> vector<8x1xf32>
    %95 = vector.broadcast %94 : vector<8x1xf32> to vector<8x8xf32>
    %96 = arith.mulf %91, %95 : vector<8x8xf32>
    %97 = arith.truncf %96 : vector<8x8xf32> to vector<8x8xbf16>
    %98 = arith.truncf %81 : vector<8x8xf32> to vector<8x8xbf16>
    %cst_25 = arith.constant dense<0.000000e+00> : vector<8x8xf32>
    %99 = tpu.matmul %97, %98, %cst_25 {dimension_numbers = #tpu.dot_dimension_numbers<[1], [0], [0], [1], [0, 0, 1, 1], [], []>} : vector<8x8xbf16>, vector<8x8xbf16>, vector<8x8xf32> -> vector<8x8xf32>
    %100 = tpu.concatenate %36, %57, %78, %99 in 1 : vector<8x8xf32>, vector<8x8xf32>, vector<8x8xf32>, vector<8x8xf32> -> vector<8x32xf32>
    %c0_26 = arith.constant 0 : index
    %c0_27 = arith.constant 0 : index
    %101 = vector.load %arg5[%c0_26, %c0_27] : memref<32x32xf32, #tpu.memory_space<vmem>>, vector<32x32xf32>
    %102 = arith.truncf %100 : vector<8x32xf32> to vector<8x32xbf16>
    %103 = arith.truncf %101 : vector<32x32xf32> to vector<32x32xbf16>
    %cst_28 = arith.constant dense<0.000000e+00> : vector<8x32xf32>
    %104 = tpu.matmul %102, %103, %cst_28 {dimension_numbers = #tpu.dot_dimension_numbers<[1], [0], [0], [1], [0, 0, 1, 1], [], []>} : vector<8x32xbf16>, vector<32x32xbf16>, vector<8x32xf32> -> vector<8x32xf32>
    %c0_29 = arith.constant 0 : index
    %c0_30 = arith.constant 0 : index
    %105 = vector.load %arg6[%c0_29, %c0_30] : memref<1x32xf32, #tpu.memory_space<vmem>>, vector<1x32xf32>
    %106 = vector.broadcast %105 : vector<1x32xf32> to vector<8x32xf32>
    %107 = arith.addf %104, %106 : vector<8x32xf32>
    %108 = arith.addf %107, %1 : vector<8x32xf32>
    %c0_31 = arith.constant 0 : index
    %c0_32 = arith.constant 0 : index
    %109 = vector.load %arg7[%c0_31, %c0_32] : memref<1x32xf32, #tpu.memory_space<vmem>>, vector<1x32xf32>
    %c0_33 = arith.constant 0 : index
    %c0_34 = arith.constant 0 : index
    %110 = vector.load %arg8[%c0_33, %c0_34] : memref<1x32xf32, #tpu.memory_space<vmem>>, vector<1x32xf32>
    %cst_35 = arith.constant dense<0.000000e+00> : vector<8xf32>
    %111 = vector.multi_reduction <add>, %108, %cst_35 [1] : vector<8x32xf32> to vector<8xf32>
    %112 = vector.shape_cast %111 : vector<8xf32> to vector<8x1xf32>
    %cst_36 = arith.constant 3.200000e+01 : f32
    %113 = vector.broadcast %cst_36 : f32 to vector<8x1xf32>
    %114 = arith.divf %112, %113 : vector<8x1xf32>
    %115 = vector.broadcast %114 : vector<8x1xf32> to vector<8x32xf32>
    %116 = arith.subf %108, %115 : vector<8x32xf32>
    %117 = arith.mulf %116, %116 : vector<8x32xf32>
    %cst_37 = arith.constant dense<0.000000e+00> : vector<8xf32>
    %118 = vector.multi_reduction <add>, %117, %cst_37 [1] : vector<8x32xf32> to vector<8xf32>
    %119 = vector.shape_cast %118 : vector<8xf32> to vector<8x1xf32>
    %cst_38 = arith.constant 3.200000e+01 : f32
    %120 = vector.broadcast %cst_38 : f32 to vector<8x1xf32>
    %121 = arith.divf %119, %120 : vector<8x1xf32>
    %122 = vector.broadcast %114 : vector<8x1xf32> to vector<8x32xf32>
    %123 = arith.subf %108, %122 : vector<8x32xf32>
    %cst_39 = arith.constant 9.99999996E-13 : f32
    %124 = vector.broadcast %cst_39 : f32 to vector<8x1xf32>
    %125 = arith.addf %121, %124 : vector<8x1xf32>
    %126 = math.rsqrt %125 : vector<8x1xf32>
    %127 = vector.broadcast %126 : vector<8x1xf32> to vector<8x32xf32>
    %128 = arith.mulf %123, %127 : vector<8x32xf32>
    %129 = vector.broadcast %109 : vector<1x32xf32> to vector<8x32xf32>
    %130 = arith.mulf %128, %129 : vector<8x32xf32>
    %131 = vector.broadcast %110 : vector<1x32xf32> to vector<8x32xf32>
    %132 = arith.addf %130, %131 : vector<8x32xf32>
    %c0_40 = arith.constant 0 : index
    %c0_41 = arith.constant 0 : index
    %133 = vector.load %arg9[%c0_40, %c0_41] : memref<32x64xf32, #tpu.memory_space<vmem>>, vector<32x64xf32>
    %134 = arith.truncf %132 : vector<8x32xf32> to vector<8x32xbf16>
    %135 = arith.truncf %133 : vector<32x64xf32> to vector<32x64xbf16>
    %cst_42 = arith.constant dense<0.000000e+00> : vector<8x64xf32>
    %136 = tpu.matmul %134, %135, %cst_42 {dimension_numbers = #tpu.dot_dimension_numbers<[1], [0], [0], [1], [0, 0, 1, 1], [], []>} : vector<8x32xbf16>, vector<32x64xbf16>, vector<8x64xf32> -> vector<8x64xf32>
    %c0_43 = arith.constant 0 : index
    %c0_44 = arith.constant 0 : index
    %137 = vector.load %arg10[%c0_43, %c0_44] : memref<1x64xf32, #tpu.memory_space<vmem>>, vector<1x64xf32>
    %138 = vector.broadcast %137 : vector<1x64xf32> to vector<8x64xf32>
    %139 = arith.addf %136, %138 : vector<8x64xf32>
    %cst_45 = arith.constant 5.000000e-01 : f32
    %140 = vector.broadcast %cst_45 : f32 to vector<8x64xf32>
    %141 = arith.mulf %140, %139 : vector<8x64xf32>
    %cst_46 = arith.constant 4.471500e-02 : f32
    %142 = vector.broadcast %cst_46 : f32 to vector<8x64xf32>
    %143 = arith.mulf %142, %139 : vector<8x64xf32>
    %144 = arith.mulf %143, %139 : vector<8x64xf32>
    %145 = arith.mulf %144, %139 : vector<8x64xf32>
    %146 = arith.addf %139, %145 : vector<8x64xf32>
    %cst_47 = arith.constant 0.797884583 : f32
    %147 = vector.broadcast %cst_47 : f32 to vector<8x64xf32>
    %148 = arith.mulf %147, %146 : vector<8x64xf32>
    %149 = math.tanh %148 : vector<8x64xf32>
    %cst_48 = arith.constant 1.000000e+00 : f32
    %150 = vector.broadcast %cst_48 : f32 to vector<8x64xf32>
    %151 = arith.addf %150, %149 : vector<8x64xf32>
    %152 = arith.mulf %141, %151 : vector<8x64xf32>
    %c0_49 = arith.constant 0 : index
    %c0_50 = arith.constant 0 : index
    %153 = vector.load %arg11[%c0_49, %c0_50] : memref<64x32xf32, #tpu.memory_space<vmem>>, vector<64x32xf32>
    %154 = arith.truncf %152 : vector<8x64xf32> to vector<8x64xbf16>
    %155 = arith.truncf %153 : vector<64x32xf32> to vector<64x32xbf16>
    %cst_51 = arith.constant dense<0.000000e+00> : vector<8x32xf32>
    %156 = tpu.matmul %154, %155, %cst_51 {dimension_numbers = #tpu.dot_dimension_numbers<[1], [0], [0], [1], [0, 0, 1, 1], [], []>} : vector<8x64xbf16>, vector<64x32xbf16>, vector<8x32xf32> -> vector<8x32xf32>
    %c0_52 = arith.constant 0 : index
    %c0_53 = arith.constant 0 : index
    %157 = vector.load %arg12[%c0_52, %c0_53] : memref<1x32xf32, #tpu.memory_space<vmem>>, vector<1x32xf32>
    %158 = vector.broadcast %157 : vector<1x32xf32> to vector<8x32xf32>
    %159 = arith.addf %156, %158 : vector<8x32xf32>
    %160 = arith.addf %159, %132 : vector<8x32xf32>
    %c0_54 = arith.constant 0 : index
    %c0_55 = arith.constant 0 : index
    %161 = vector.load %arg13[%c0_54, %c0_55] : memref<1x32xf32, #tpu.memory_space<vmem>>, vector<1x32xf32>
    %c0_56 = arith.constant 0 : index
    %c0_57 = arith.constant 0 : index
    %162 = vector.load %arg14[%c0_56, %c0_57] : memref<1x32xf32, #tpu.memory_space<vmem>>, vector<1x32xf32>
    %cst_58 = arith.constant dense<0.000000e+00> : vector<8xf32>
    %163 = vector.multi_reduction <add>, %160, %cst_58 [1] : vector<8x32xf32> to vector<8xf32>
    %164 = vector.shape_cast %163 : vector<8xf32> to vector<8x1xf32>
    %cst_59 = arith.constant 3.200000e+01 : f32
    %165 = vector.broadcast %cst_59 : f32 to vector<8x1xf32>
    %166 = arith.divf %164, %165 : vector<8x1xf32>
    %167 = vector.broadcast %166 : vector<8x1xf32> to vector<8x32xf32>
    %168 = arith.subf %160, %167 : vector<8x32xf32>
    %169 = arith.mulf %168, %168 : vector<8x32xf32>
    %cst_60 = arith.constant dense<0.000000e+00> : vector<8xf32>
    %170 = vector.multi_reduction <add>, %169, %cst_60 [1] : vector<8x32xf32> to vector<8xf32>
    %171 = vector.shape_cast %170 : vector<8xf32> to vector<8x1xf32>
    %cst_61 = arith.constant 3.200000e+01 : f32
    %172 = vector.broadcast %cst_61 : f32 to vector<8x1xf32>
    %173 = arith.divf %171, %172 : vector<8x1xf32>
    %174 = vector.broadcast %166 : vector<8x1xf32> to vector<8x32xf32>
    %175 = arith.subf %160, %174 : vector<8x32xf32>
    %cst_62 = arith.constant 9.99999996E-13 : f32
    %176 = vector.broadcast %cst_62 : f32 to vector<8x1xf32>
    %177 = arith.addf %173, %176 : vector<8x1xf32>
    %178 = math.rsqrt %177 : vector<8x1xf32>
    %179 = vector.broadcast %178 : vector<8x1xf32> to vector<8x32xf32>
    %180 = arith.mulf %175, %179 : vector<8x32xf32>
    %181 = vector.broadcast %161 : vector<1x32xf32> to vector<8x32xf32>
    %182 = arith.mulf %180, %181 : vector<8x32xf32>
    %183 = vector.broadcast %162 : vector<1x32xf32> to vector<8x32xf32>
    %184 = arith.addf %182, %183 : vector<8x32xf32>
    %c0_63 = arith.constant 0 : index
    %c0_64 = arith.constant 0 : index
    %c0_65 = arith.constant 0 : index
    %185 = vector.load %arg17[%c0_63, %c0_64, %c0_65] : memref<1x8x32xf32, #tpu.memory_space<vmem>>, vector<1x8x32xf32>
    %186 = vector.shape_cast %185 : vector<1x8x32xf32> to vector<8x32xf32>
    %187 = vector.shape_cast %184 : vector<8x32xf32> to vector<1x8x32xf32>
    tpu.vector_store %arg17[%c0_63, %c0_64, %c0_65], %187 {strides = array<i32>} : memref<1x8x32xf32, #tpu.memory_space<vmem>>, vector<1x8x32xf32>,
    %188 = vector.extract_strided_slice %184 {offsets = [0, 0], sizes = [1, 32], strides = [1, 1]} : vector<8x32xf32> to vector<1x32xf32>
    %c0_66 = arith.constant 0 : index
    %c0_67 = arith.constant 0 : index
    %189 = vector.load %arg15[%c0_66, %c0_67] : memref<32x32xf32, #tpu.memory_space<vmem>>, vector<32x32xf32>
    %190 = arith.truncf %188 : vector<1x32xf32> to vector<1x32xbf16>
    %191 = arith.truncf %189 : vector<32x32xf32> to vector<32x32xbf16>
    %cst_68 = arith.constant dense<0.000000e+00> : vector<1x32xf32>
    %192 = tpu.matmul %190, %191, %cst_68 {dimension_numbers = #tpu.dot_dimension_numbers<[1], [0], [0], [1], [0, 0, 1, 1], [], []>} : vector<1x32xbf16>, vector<32x32xbf16>, vector<1x32xf32> -> vector<1x32xf32>
    %c0_69 = arith.constant 0 : index
    %c0_70 = arith.constant 0 : index
    %193 = vector.load %arg16[%c0_69, %c0_70] : memref<1x32xf32, #tpu.memory_space<vmem>>, vector<1x32xf32>
    %194 = arith.addf %192, %193 : vector<1x32xf32>
    %195 = math.tanh %194 : vector<1x32xf32>
    %c0_71 = arith.constant 0 : index
    %c0_72 = arith.constant 0 : index
    %c0_73 = arith.constant 0 : index
    %196 = vector.load %arg18[%c0_71, %c0_72, %c0_73] : memref<1x1x32xf32, #tpu.memory_space<vmem>>, vector<1x1x32xf32>
    %197 = vector.shape_cast %196 : vector<1x1x32xf32> to vector<1x32xf32>
    %198 = vector.shape_cast %195 : vector<1x32xf32> to vector<1x1x32xf32>
    tpu.vector_store %arg18[%c0_71, %c0_72, %c0_73], %198 {strides = array<i32>} : memref<1x1x32xf32, #tpu.memory_space<vmem>>, vector<1x1x32xf32>,
    return
  }
  func.func @transform_0(%arg0: i32) -> (i32, i32, i32) {
    %c0_i32 = arith.constant 0 : i32
    %c0_i32_0 = arith.constant 0 : i32
    %c0_i32_1 = arith.constant 0 : i32
    return %arg0, %c0_i32, %c0_i32_0 : i32, i32, i32
  }
  func.func @transform_1(%arg0: i32) -> (i32, i32, i32) {
    %c0_i32 = arith.constant 0 : i32
    %c0_i32_0 = arith.constant 0 : i32
    %c0_i32_1 = arith.constant 0 : i32
    return %arg0, %c0_i32, %c0_i32_0 : i32, i32, i32
  }
  func.func @transform_2(%arg0: i32) -> (i32, i32) {
    %c0_i32 = arith.constant 0 : i32
    %c0_i32_0 = arith.constant 0 : i32
    %c0_i32_1 = arith.constant 0 : i32
    return %c0_i32, %c0_i32_0 : i32, i32
  }
  func.func @transform_3(%arg0: i32) -> (i32, i32) {
    %c0_i32 = arith.constant 0 : i32
    %c0_i32_0 = arith.constant 0 : i32
    %c0_i32_1 = arith.constant 0 : i32
    return %c0_i32, %c0_i32_0 : i32, i32
  }
  func.func @transform_4(%arg0: i32) -> (i32, i32) {
    %c0_i32 = arith.constant 0 : i32
    %c0_i32_0 = arith.constant 0 : i32
    %c0_i32_1 = arith.constant 0 : i32
    return %c0_i32, %c0_i32_0 : i32, i32
  }
  func.func @transform_5(%arg0: i32) -> (i32, i32) {
    %c0_i32 = arith.constant 0 : i32
    %c0_i32_0 = arith.constant 0 : i32
    %c0_i32_1 = arith.constant 0 : i32
    return %c0_i32, %c0_i32_0 : i32, i32
  }
  func.func @transform_6(%arg0: i32) -> (i32, i32) {
    %c0_i32 = arith.constant 0 : i32
    %c0_i32_0 = arith.constant 0 : i32
    %c0_i32_1 = arith.constant 0 : i32
    return %c0_i32, %c0_i32_0 : i32, i32
  }
  func.func @transform_7(%arg0: i32) -> (i32, i32) {
    %c0_i32 = arith.constant 0 : i32
    %c0_i32_0 = arith.constant 0 : i32
    %c0_i32_1 = arith.constant 0 : i32
    return %c0_i32, %c0_i32_0 : i32, i32
  }
  func.func @transform_8(%arg0: i32) -> (i32, i32) {
    %c0_i32 = arith.constant 0 : i32
    %c0_i32_0 = arith.constant 0 : i32
    %c0_i32_1 = arith.constant 0 : i32
    return %c0_i32, %c0_i32_0 : i32, i32
  }
  func.func @transform_9(%arg0: i32) -> (i32, i32) {
    %c0_i32 = arith.constant 0 : i32
    %c0_i32_0 = arith.constant 0 : i32
    %c0_i32_1 = arith.constant 0 : i32
    return %c0_i32, %c0_i32_0 : i32, i32
  }
  func.func @transform_10(%arg0: i32) -> (i32, i32) {
    %c0_i32 = arith.constant 0 : i32
    %c0_i32_0 = arith.constant 0 : i32
    %c0_i32_1 = arith.constant 0 : i32
    return %c0_i32, %c0_i32_0 : i32, i32
  }
  func.func @transform_11(%arg0: i32) -> (i32, i32) {
    %c0_i32 = arith.constant 0 : i32
    %c0_i32_0 = arith.constant 0 : i32
    %c0_i32_1 = arith.constant 0 : i32
    return %c0_i32, %c0_i32_0 : i32, i32
  }
  func.func @transform_12(%arg0: i32) -> (i32, i32) {
    %c0_i32 = arith.constant 0 : i32
    %c0_i32_0 = arith.constant 0 : i32
    %c0_i32_1 = arith.constant 0 : i32
    return %c0_i32, %c0_i32_0 : i32, i32
  }
  func.func @transform_13(%arg0: i32) -> (i32, i32) {
    %c0_i32 = arith.constant 0 : i32
    %c0_i32_0 = arith.constant 0 : i32
    %c0_i32_1 = arith.constant 0 : i32
    return %c0_i32, %c0_i32_0 : i32, i32
  }
  func.func @transform_14(%arg0: i32) -> (i32, i32) {
    %c0_i32 = arith.constant 0 : i32
    %c0_i32_0 = arith.constant 0 : i32
    %c0_i32_1 = arith.constant 0 : i32
    return %c0_i32, %c0_i32_0 : i32, i32
  }
  func.func @transform_15(%arg0: i32) -> (i32, i32) {
    %c0_i32 = arith.constant 0 : i32
    %c0_i32_0 = arith.constant 0 : i32
    %c0_i32_1 = arith.constant 0 : i32
    return %c0_i32, %c0_i32_0 : i32, i32
  }
  func.func @transform_16(%arg0: i32) -> (i32, i32, i32) {
    %c0_i32 = arith.constant 0 : i32
    %c0_i32_0 = arith.constant 0 : i32
    %c0_i32_1 = arith.constant 0 : i32
    return %arg0, %c0_i32, %c0_i32_0 : i32, i32, i32
  }
  func.func @transform_17(%arg0: i32) -> (i32, i32, i32) {
    %c0_i32 = arith.constant 0 : i32
    %c0_i32_0 = arith.constant 0 : i32
    %c0_i32_1 = arith.constant 0 : i32
    return %arg0, %c0_i32, %c0_i32_0 : i32, i32, i32
  }
}

</mosaic_0001>

<llo_original>
// kernel: bert_forward.3
$region0: #{bert_forward.3}
  #allocation0 [shape = 'u32[]', space=smem, size = 0x4, offset = 0x4, fixed_abs, tag = 'smem constant byte address 0x4 - core index']
  #allocation1 [shape = 'u32[144,128]{1,0:T(1,128)}', space=vmem, size = 0x12000, scoped, tag = 'internal scratch']
  %s0 = inlined_call_operand.vmem [shape: f32[2,8,32], index: 0, kind: input, shape index: {}]
  %s1 = inlined_call_operand.vmem [shape: f32[2,1,8], index: 1, kind: input, shape index: {}]
  %s2 = inlined_call_operand.vmem [shape: f32[32,96], index: 2, kind: input, shape index: {}]
  %s3 = inlined_call_operand.vmem [shape: f32[1,96], index: 3, kind: input, shape index: {}]
  %s4 = inlined_call_operand.vmem [shape: f32[32,32], index: 4, kind: input, shape index: {}]
  %s5 = inlined_call_operand.vmem [shape: f32[1,32], index: 5, kind: input, shape index: {}]
  %s6 = inlined_call_operand.vmem [shape: f32[1,32], index: 6, kind: input, shape index: {}]
  %s7 = inlined_call_operand.vmem [shape: f32[1,32], index: 7, kind: input, shape index: {}]
  %s8 = inlined_call_operand.vmem [shape: f32[32,64], index: 8, kind: input, shape index: {}]
  %s9 = inlined_call_operand.vmem [shape: f32[1,64], index: 9, kind: input, shape index: {}]
  %s10 = inlined_call_operand.vmem [shape: f32[64,32], index: 10, kind: input, shape index: {}]
  %s11 = inlined_call_operand.vmem [shape: f32[1,32], index: 11, kind: input, shape index: {}]
  %s12 = inlined_call_operand.vmem [shape: f32[1,32], index: 12, kind: input, shape index: {}]
  %s13 = inlined_call_operand.vmem [shape: f32[1,32], index: 13, kind: input, shape index: {}]
  %s14 = inlined_call_operand.vmem [shape: f32[32,32], index: 14, kind: input, shape index: {}]
  %s15 = inlined_call_operand.vmem [shape: f32[1,32], index: 15, kind: input, shape index: {}]
  %s16 = inlined_call_operand.hbm [shape: f32[2,8,32], index: 16, kind: output, shape index: {0}]
  %s17 = inlined_call_operand.hbm [shape: f32[2,1,32], index: 17, kind: output, shape index: {1}]
  %18 = xla_tuple %s16, %s17
  %s19 = sld [smem:[#allocation0]]
  $region105: #{bert_forward.3} parent=0
    _
  %s21 = ssub.s32 1, %s19
  %s22 = scalar_select 0, %s21, %s19
  $region1: #{bert_forward.3} parent=0
    #allocation2 [shape = 'u8[8192]{0}', space=vmem, size = 0x2000, scoped, tag = 'output window, operand 0']
    #allocation3 [shape = 's32[2]{0}', space=sflag, size = 0x8, scoped, tag = 'scoped memory for bert_forward.3']
    #allocation4 [shape = 'u8[1024]{0}', space=vmem, size = 0x400, scoped, tag = 'output window, operand 1']
    #allocation5 [shape = 's32[2]{0}', space=sflag, size = 0x8, scoped, tag = 'scoped memory for bert_forward.3']
    %23 = vsyncpa [#allocation3], 0
    %s24 = scalar_lea.sflag [#allocation3], 1
    %25 = vsyncpa %s24, 0
    %26 = vsyncpa [#allocation5], 0
    %s27 = scalar_lea.sflag [#allocation5], 1
    %28 = vsyncpa %s27, 0
    loop: start=0, step=1, limit=4
    $region2: #{bert_forward.3} parent=1 // loop_pre_header
      _
    $region3: #{bert_forward.3} parent=1 // loop_header
      %s30 = sphi 0, %s34
      %p31 = scmp.ge.s32.totalorder %s30, 4
      %s40 = sphi 0, %s42
      %s43 = sphi 0, %s40
      %s44 = sphi 0, %s43
      %s60 = sphi 0, %s44
      %s66 = sphi 0, %s68
      %s69 = sphi 0, %s66
      %s70 = sphi 0, %s69
      %s86 = sphi 0, %s70
      %s90 = sphi 0, %s90
      %s92 = sphi 0, %s90
      %s93 = sphi 0, %s92
      %s107 = sphi 0, %s93
      %s111 = sphi 0, %s111
      %s113 = sphi 0, %s111
      %s114 = sphi 0, %s113
      %s128 = sphi 0, %s114
      %s132 = sphi 0, %s132
      %s134 = sphi 0, %s132
      %s135 = sphi 0, %s134
      %s149 = sphi 0, %s135
      %s153 = sphi 0, %s153
      %s155 = sphi 0, %s153
      %s156 = sphi 0, %s155
      %s170 = sphi 0, %s156
      %s174 = sphi 0, %s174
      %s176 = sphi 0, %s174
      %s177 = sphi 0, %s176
      %s191 = sphi 0, %s177
      %s195 = sphi 0, %s195
      %s197 = sphi 0, %s195
      %s198 = sphi 0, %s197
      %s212 = sphi 0, %s198
      %s216 = sphi 0, %s216
      %s218 = sphi 0, %s216
      %s219 = sphi 0, %s218
      %s233 = sphi 0, %s219
      %s237 = sphi 0, %s237
      %s239 = sphi 0, %s237
      %s240 = sphi 0, %s239
      %s254 = sphi 0, %s240
      %s258 = sphi 0, %s258
      %s260 = sphi 0, %s258
      %s261 = sphi 0, %s260
      %s275 = sphi 0, %s261
      %s279 = sphi 0, %s279
      %s281 = sphi 0, %s279
      %s282 = sphi 0, %s281
      %s296 = sphi 0, %s282
      %s300 = sphi 0, %s300
      %s302 = sphi 0, %s300
      %s303 = sphi 0, %s302
      %s317 = sphi 0, %s303
      %s321 = sphi 0, %s321
      %s323 = sphi 0, %s321
      %s324 = sphi 0, %s323
      %s338 = sphi 0, %s324
      %s342 = sphi 0, %s342
      %s344 = sphi 0, %s342
      %s345 = sphi 0, %s344
      %s359 = sphi 0, %s345
      %s363 = sphi 0, %s363
      %s365 = sphi 0, %s363
      %s366 = sphi 0, %s365
      %s380 = sphi 0, %s366
      %s386 = sphi 0, %s388
      %s389 = sphi 0, %s386
      %s390 = sphi 0, %s389
      %s406 = sphi 0, %s390
      %s412 = sphi 0, %s414
      %s415 = sphi 0, %s412
      %s416 = sphi 0, %s415
      %s432 = sphi 0, %s416
    $region4: #{bert_forward.3} parent=1 // loop_header_branch
      %33 = sbr.rel (%p31) target = $region8
    $region5: #{bert_forward.3} parent=1 // loop_body
      %s35 = ssub.s32 %s30, 1
      %s36 = ssub.s32 %s30, 2
      %s37 = sadd.s32 %s30, 1
      %s38 = ssub.s32 %s30, %s37
      %p39 = scmp.eq.s32.totalorder %s38, 0
      %s41 = sadd.s32 %s40, 1
      %s42 = scalar_select %p39, %s40, %s41
      %p45 = pneg %p39
      %p46 = scmp.eq.s32.totalorder %s30, 1
      %p47 = por %p45, %p46
      %p48 = scmp.ne.s32.totalorder %s40, %s43
      %p49 = scmp.eq.s32.totalorder %s30, 0
      %p50 = por %p48, %p49
      %p51 = scmp.ne.s32.totalorder %s40, %s43
      %p52 = scmp.eq.s32.totalorder %s35, 1
      %p53 = por %p51, %p52
      %p54 = scmp.ne.s32.totalorder %s43, %s44
      %p55 = scmp.eq.s32.totalorder %s35, 0
      %p56 = por %p54, %p55
      %p57 = scmp.ne.s32.totalorder %s43, %s44
      %p58 = scmp.eq.s32.totalorder %s36, 1
      %p59 = por %p57, %p58
      %p61 = scmp.ne.s32.totalorder %s44, %s60
      %p62 = scmp.eq.s32.totalorder %s36, 0
      %p63 = por %p61, %p62
      %s64 = ssub.s32 %s30, %s37
      %p65 = scmp.eq.s32.totalorder %s64, 0
      %s67 = sadd.s32 %s66, 1
      %s68 = scalar_select %p65, %s66, %s67
      %p71 = pneg %p65
      %p72 = scmp.eq.s32.totalorder %s30, 1
      %p73 = por %p71, %p72
      %p74 = scmp.ne.s32.totalorder %s66, %s69
      %p75 = scmp.eq.s32.totalorder %s30, 0
      %p76 = por %p74, %p75
      %p77 = scmp.ne.s32.totalorder %s66, %s69
      %p78 = scmp.eq.s32.totalorder %s35, 1
      %p79 = por %p77, %p78
      %p80 = scmp.ne.s32.totalorder %s69, %s70
      %p81 = scmp.eq.s32.totalorder %s35, 0
      %p82 = por %p80, %p81
      %p83 = scmp.ne.s32.totalorder %s69, %s70
      %p84 = scmp.eq.s32.totalorder %s36, 1
      %p85 = por %p83, %p84
      %p87 = scmp.ne.s32.totalorder %s70, %s86
      %p88 = scmp.eq.s32.totalorder %s36, 0
      %p89 = por %p87, %p88
      %s91 = sadd.s32 %s90, 1
      %p94 = scmp.eq.s32.totalorder %s30, 1
      %p95 = scmp.ne.s32.totalorder %s90, %s92
      %p96 = scmp.eq.s32.totalorder %s30, 0
      %p97 = por %p95, %p96
      %p98 = scmp.ne.s32.totalorder %s90, %s92
      %p99 = scmp.eq.s32.totalorder %s35, 1
      %p100 = por %p98, %p99
      %p101 = scmp.ne.s32.totalorder %s92, %s93
      %p102 = scmp.eq.s32.totalorder %s35, 0
      %p103 = por %p101, %p102
      %p104 = scmp.ne.s32.totalorder %s92, %s93
      %p105 = scmp.eq.s32.totalorder %s36, 1
      %p106 = por %p104, %p105
      %p108 = scmp.ne.s32.totalorder %s93, %s107
      %p109 = scmp.eq.s32.totalorder %s36, 0
      %p110 = por %p108, %p109
      %s112 = sadd.s32 %s111, 1
      %p115 = scmp.eq.s32.totalorder %s30, 1
      %p116 = scmp.ne.s32.totalorder %s111, %s113
      %p117 = scmp.eq.s32.totalorder %s30, 0
      %p118 = por %p116, %p117
      %p119 = scmp.ne.s32.totalorder %s111, %s113
      %p120 = scmp.eq.s32.totalorder %s35, 1
      %p121 = por %p119, %p120
      %p122 = scmp.ne.s32.totalorder %s113, %s114
      %p123 = scmp.eq.s32.totalorder %s35, 0
      %p124 = por %p122, %p123
      %p125 = scmp.ne.s32.totalorder %s113, %s114
      %p126 = scmp.eq.s32.totalorder %s36, 1
      %p127 = por %p125, %p126
      %p129 = scmp.ne.s32.totalorder %s114, %s128
      %p130 = scmp.eq.s32.totalorder %s36, 0
      %p131 = por %p129, %p130
      %s133 = sadd.s32 %s132, 1
      %p136 = scmp.eq.s32.totalorder %s30, 1
      %p137 = scmp.ne.s32.totalorder %s132, %s134
      %p138 = scmp.eq.s32.totalorder %s30, 0
      %p139 = por %p137, %p138
      %p140 = scmp.ne.s32.totalorder %s132, %s134
      %p141 = scmp.eq.s32.totalorder %s35, 1
      %p142 = por %p140, %p141
      %p143 = scmp.ne.s32.totalorder %s134, %s135
      %p144 = scmp.eq.s32.totalorder %s35, 0
      %p145 = por %p143, %p144
      %p146 = scmp.ne.s32.totalorder %s134, %s135
      %p147 = scmp.eq.s32.totalorder %s36, 1
      %p148 = por %p146, %p147
      %p150 = scmp.ne.s32.totalorder %s135, %s149
      %p151 = scmp.eq.s32.totalorder %s36, 0
      %p152 = por %p150, %p151
      %s154 = sadd.s32 %s153, 1
      %p157 = scmp.eq.s32.totalorder %s30, 1
      %p158 = scmp.ne.s32.totalorder %s153, %s155
      %p159 = scmp.eq.s32.totalorder %s30, 0
      %p160 = por %p158, %p159
      %p161 = scmp.ne.s32.totalorder %s153, %s155
      %p162 = scmp.eq.s32.totalorder %s35, 1
      %p163 = por %p161, %p162
      %p164 = scmp.ne.s32.totalorder %s155, %s156
      %p165 = scmp.eq.s32.totalorder %s35, 0
      %p166 = por %p164, %p165
      %p167 = scmp.ne.s32.totalorder %s155, %s156
      %p168 = scmp.eq.s32.totalorder %s36, 1
      %p169 = por %p167, %p168
      %p171 = scmp.ne.s32.totalorder %s156, %s170
      %p172 = scmp.eq.s32.totalorder %s36, 0
      %p173 = por %p171, %p172
      %s175 = sadd.s32 %s174, 1
      %p178 = scmp.eq.s32.totalorder %s30, 1
      %p179 = scmp.ne.s32.totalorder %s174, %s176
      %p180 = scmp.eq.s32.totalorder %s30, 0
      %p181 = por %p179, %p180
      %p182 = scmp.ne.s32.totalorder %s174, %s176
      %p183 = scmp.eq.s32.totalorder %s35, 1
      %p184 = por %p182, %p183
      %p185 = scmp.ne.s32.totalorder %s176, %s177
      %p186 = scmp.eq.s32.totalorder %s35, 0
      %p187 = por %p185, %p186
      %p188 = scmp.ne.s32.totalorder %s176, %s177
      %p189 = scmp.eq.s32.totalorder %s36, 1
      %p190 = por %p188, %p189
      %p192 = scmp.ne.s32.totalorder %s177, %s191
      %p193 = scmp.eq.s32.totalorder %s36, 0
      %p194 = por %p192, %p193
      %s196 = sadd.s32 %s195, 1
      %p199 = scmp.eq.s32.totalorder %s30, 1
      %p200 = scmp.ne.s32.totalorder %s195, %s197
      %p201 = scmp.eq.s32.totalorder %s30, 0
      %p202 = por %p200, %p201
      %p203 = scmp.ne.s32.totalorder %s195, %s197
      %p204 = scmp.eq.s32.totalorder %s35, 1
      %p205 = por %p203, %p204
      %p206 = scmp.ne.s32.totalorder %s197, %s198
      %p207 = scmp.eq.s32.totalorder %s35, 0
      %p208 = por %p206, %p207
      %p209 = scmp.ne.s32.totalorder %s197, %s198
      %p210 = scmp.eq.s32.totalorder %s36, 1
      %p211 = por %p209, %p210
      %p213 = scmp.ne.s32.totalorder %s198, %s212
      %p214 = scmp.eq.s32.totalorder %s36, 0
      %p215 = por %p213, %p214
      %s217 = sadd.s32 %s216, 1
      %p220 = scmp.eq.s32.totalorder %s30, 1
      %p221 = scmp.ne.s32.totalorder %s216, %s218
      %p222 = scmp.eq.s32.totalorder %s30, 0
      %p223 = por %p221, %p222
      %p224 = scmp.ne.s32.totalorder %s216, %s218
      %p225 = scmp.eq.s32.totalorder %s35, 1
      %p226 = por %p224, %p225
      %p227 = scmp.ne.s32.totalorder %s218, %s219
      %p228 = scmp.eq.s32.totalorder %s35, 0
      %p229 = por %p227, %p228
      %p230 = scmp.ne.s32.totalorder %s218, %s219
      %p231 = scmp.eq.s32.totalorder %s36, 1
      %p232 = por %p230, %p231
      %p234 = scmp.ne.s32.totalorder %s219, %s233
      %p235 = scmp.eq.s32.totalorder %s36, 0
      %p236 = por %p234, %p235
      %s238 = sadd.s32 %s237, 1
      %p241 = scmp.eq.s32.totalorder %s30, 1
      %p242 = scmp.ne.s32.totalorder %s237, %s239
      %p243 = scmp.eq.s32.totalorder %s30, 0
      %p244 = por %p242, %p243
      %p245 = scmp.ne.s32.totalorder %s237, %s239
      %p246 = scmp.eq.s32.totalorder %s35, 1
      %p247 = por %p245, %p246
      %p248 = scmp.ne.s32.totalorder %s239, %s240
      %p249 = scmp.eq.s32.totalorder %s35, 0
      %p250 = por %p248, %p249
      %p251 = scmp.ne.s32.totalorder %s239, %s240
      %p252 = scmp.eq.s32.totalorder %s36, 1
      %p253 = por %p251, %p252
      %p255 = scmp.ne.s32.totalorder %s240, %s254
      %p256 = scmp.eq.s32.totalorder %s36, 0
      %p257 = por %p255, %p256
      %s259 = sadd.s32 %s258, 1
      %p262 = scmp.eq.s32.totalorder %s30, 1
      %p263 = scmp.ne.s32.totalorder %s258, %s260
      %p264 = scmp.eq.s32.totalorder %s30, 0
      %p265 = por %p263, %p264
      %p266 = scmp.ne.s32.totalorder %s258, %s260
      %p267 = scmp.eq.s32.totalorder %s35, 1
      %p268 = por %p266, %p267
      %p269 = scmp.ne.s32.totalorder %s260, %s261
      %p270 = scmp.eq.s32.totalorder %s35, 0
      %p271 = por %p269, %p270
      %p272 = scmp.ne.s32.totalorder %s260, %s261
      %p273 = scmp.eq.s32.totalorder %s36, 1
      %p274 = por %p272, %p273
      %p276 = scmp.ne.s32.totalorder %s261, %s275
      %p277 = scmp.eq.s32.totalorder %s36, 0
      %p278 = por %p276, %p277
      %s280 = sadd.s32 %s279, 1
      %p283 = scmp.eq.s32.totalorder %s30, 1
      %p284 = scmp.ne.s32.totalorder %s279, %s281
      %p285 = scmp.eq.s32.totalorder %s30, 0
      %p286 = por %p284, %p285
      %p287 = scmp.ne.s32.totalorder %s279, %s281
      %p288 = scmp.eq.s32.totalorder %s35, 1
      %p289 = por %p287, %p288
      %p290 = scmp.ne.s32.totalorder %s281, %s282
      %p291 = scmp.eq.s32.totalorder %s35, 0
      %p292 = por %p290, %p291
      %p293 = scmp.ne.s32.totalorder %s281, %s282
      %p294 = scmp.eq.s32.totalorder %s36, 1
      %p295 = por %p293, %p294
      %p297 = scmp.ne.s32.totalorder %s282, %s296
      %p298 = scmp.eq.s32.totalorder %s36, 0
      %p299 = por %p297, %p298
      %s301 = sadd.s32 %s300, 1
      %p304 = scmp.eq.s32.totalorder %s30, 1
      %p305 = scmp.ne.s32.totalorder %s300, %s302
      %p306 = scmp.eq.s32.totalorder %s30, 0
      %p307 = por %p305, %p306
      %p308 = scmp.ne.s32.totalorder %s300, %s302
      %p309 = scmp.eq.s32.totalorder %s35, 1
      %p310 = por %p308, %p309
      %p311 = scmp.ne.s32.totalorder %s302, %s303
      %p312 = scmp.eq.s32.totalorder %s35, 0
      %p313 = por %p311, %p312
      %p314 = scmp.ne.s32.totalorder %s302, %s303
      %p315 = scmp.eq.s32.totalorder %s36, 1
      %p316 = por %p314, %p315
      %p318 = scmp.ne.s32.totalorder %s303, %s317
      %p319 = scmp.eq.s32.totalorder %s36, 0
      %p320 = por %p318, %p319
      %s322 = sadd.s32 %s321, 1
      %p325 = scmp.eq.s32.totalorder %s30, 1
      %p326 = scmp.ne.s32.totalorder %s321, %s323
      %p327 = scmp.eq.s32.totalorder %s30, 0
      %p328 = por %p326, %p327
      %p329 = scmp.ne.s32.totalorder %s321, %s323
      %p330 = scmp.eq.s32.totalorder %s35, 1
      %p331 = por %p329, %p330
      %p332 = scmp.ne.s32.totalorder %s323, %s324
      %p333 = scmp.eq.s32.totalorder %s35, 0
      %p334 = por %p332, %p333
      %p335 = scmp.ne.s32.totalorder %s323, %s324
      %p336 = scmp.eq.s32.totalorder %s36, 1
      %p337 = por %p335, %p336
      %p339 = scmp.ne.s32.totalorder %s324, %s338
      %p340 = scmp.eq.s32.totalorder %s36, 0
      %p341 = por %p339, %p340
      %s343 = sadd.s32 %s342, 1
      %p346 = scmp.eq.s32.totalorder %s30, 1
      %p347 = scmp.ne.s32.totalorder %s342, %s344
      %p348 = scmp.eq.s32.totalorder %s30, 0
      %p349 = por %p347, %p348
      %p350 = scmp.ne.s32.totalorder %s342, %s344
      %p351 = scmp.eq.s32.totalorder %s35, 1
      %p352 = por %p350, %p351
      %p353 = scmp.ne.s32.totalorder %s344, %s345
      %p354 = scmp.eq.s32.totalorder %s35, 0
      %p355 = por %p353, %p354
      %p356 = scmp.ne.s32.totalorder %s344, %s345
      %p357 = scmp.eq.s32.totalorder %s36, 1
      %p358 = por %p356, %p357
      %p360 = scmp.ne.s32.totalorder %s345, %s359
      %p361 = scmp.eq.s32.totalorder %s36, 0
      %p362 = por %p360, %p361
      %s364 = sadd.s32 %s363, 1
      %p367 = scmp.eq.s32.totalorder %s30, 1
      %p368 = scmp.ne.s32.totalorder %s363, %s365
      %p369 = scmp.eq.s32.totalorder %s30, 0
      %p370 = por %p368, %p369
      %p371 = scmp.ne.s32.totalorder %s363, %s365
      %p372 = scmp.eq.s32.totalorder %s35, 1
      %p373 = por %p371, %p372
      %p374 = scmp.ne.s32.totalorder %s365, %s366
      %p375 = scmp.eq.s32.totalorder %s35, 0
      %p376 = por %p374, %p375
      %p377 = scmp.ne.s32.totalorder %s365, %s366
      %p378 = scmp.eq.s32.totalorder %s36, 1
      %p379 = por %p377, %p378
      %p381 = scmp.ne.s32.totalorder %s366, %s380
      %p382 = scmp.eq.s32.totalorder %s36, 0
      %p383 = por %p381, %p382
      %s384 = ssub.s32 %s30, %s37
      %p385 = scmp.eq.s32.totalorder %s384, 0
      %s387 = sadd.s32 %s386, 1
      %s388 = scalar_select %p385, %s386, %s387
      %p391 = pneg %p385
      %p392 = scmp.eq.s32.totalorder %s30, 1
      %p393 = por %p391, %p392
      %p394 = scmp.ne.s32.totalorder %s386, %s389
      %p395 = scmp.eq.s32.totalorder %s30, 0
      %p396 = por %p394, %p395
      %p397 = scmp.ne.s32.totalorder %s386, %s389
      %p398 = scmp.eq.s32.totalorder %s35, 1
      %p399 = por %p397, %p398
      %p400 = scmp.ne.s32.totalorder %s389, %s390
      %p401 = scmp.eq.s32.totalorder %s35, 0
      %p402 = por %p400, %p401
      %p403 = scmp.ne.s32.totalorder %s389, %s390
      %p404 = scmp.eq.s32.totalorder %s36, 1
      %p405 = por %p403, %p404
      %p407 = scmp.ne.s32.totalorder %s390, %s406
      %p408 = scmp.eq.s32.totalorder %s36, 0
      %p409 = por %p407, %p408
      %s410 = ssub.s32 %s30, %s37
      %p411 = scmp.eq.s32.totalorder %s410, 0
      %s413 = sadd.s32 %s412, 1
      %s414 = scalar_select %p411, %s412, %s413
      %p417 = pneg %p411
      %p418 = scmp.eq.s32.totalorder %s30, 1
      %p419 = por %p417, %p418
      %p420 = scmp.ne.s32.totalorder %s412, %s415
      %p421 = scmp.eq.s32.totalorder %s30, 0
      %p422 = por %p420, %p421
      %p423 = scmp.ne.s32.totalorder %s412, %s415
      %p424 = scmp.eq.s32.totalorder %s35, 1
      %p425 = por %p423, %p424
      %p426 = scmp.ne.s32.totalorder %s415, %s416
      %p427 = scmp.eq.s32.totalorder %s35, 0
      %p428 = por %p426, %p427
      %p429 = scmp.ne.s32.totalorder %s415, %s416
      %p430 = scmp.eq.s32.totalorder %s36, 1
      %p431 = por %p429, %p430
      %p433 = scmp.ne.s32.totalorder %s416, %s432
      %p434 = scmp.eq.s32.totalorder %s36, 0
      %p435 = por %p433, %p434
      %p436 = scmp.le.s32.totalorder 1, %s30
      %p437 = scmp.lt.s32.totalorder %s30, 3
      %p438 = pnand %p436, %p437
      %p439 = pneg %p438
      // Predicated region
      $region9: #{bert_forward.3} parent=5 // pred_check
        _
      $region10: #{bert_forward.3} parent=5 // pred_check_branch
        %441 = sbr.rel (%p438) target = $region12
      $region11: #{bert_forward.3} parent=5 // pred_region
        %s442 = ssub.s32 %s30, 1
        // Predicated region
        $region13: #{bert_forward.3} parent=11 // pred_check
          %p443 = pneg %p103
        $region14: #{bert_forward.3} parent=11 // pred_check_branch
          %445 = sbr.rel (%p443) target = $region16
        $region15: #{bert_forward.3} parent=11 // pred_region
          _
        $region16: #{bert_forward.3} parent=11 // pred_fallthru
          _
        // Predicated region
        $region17: #{bert_forward.3} parent=11 // pred_check
          %p446 = pneg %p124
        $region18: #{bert_forward.3} parent=11 // pred_check_branch
          %448 = sbr.rel (%p446) target = $region20
        $region19: #{bert_forward.3} parent=11 // pred_region
          _
        $region20: #{bert_forward.3} parent=11 // pred_fallthru
          _
        // Predicated region
        $region21: #{bert_forward.3} parent=11 // pred_check
          %p449 = pneg %p145
        $region22: #{bert_forward.3} parent=11 // pred_check_branch
          %451 = sbr.rel (%p449) target = $region24
        $region23: #{bert_forward.3} parent=11 // pred_region
          _
        $region24: #{bert_forward.3} parent=11 // pred_fallthru
          _
        // Predicated region
        $region25: #{bert_forward.3} parent=11 // pred_check
          %p452 = pneg %p166
        $region26: #{bert_forward.3} parent=11 // pred_check_branch
          %454 = sbr.rel (%p452) target = $region28
        $region27: #{bert_forward.3} parent=11 // pred_region
          _
        $region28: #{bert_forward.3} parent=11 // pred_fallthru
          _
        // Predicated region
        $region29: #{bert_forward.3} parent=11 // pred_check
          %p455 = pneg %p187
        $region30: #{bert_forward.3} parent=11 // pred_check_branch
          %457 = sbr.rel (%p455) target = $region32
        $region31: #{bert_forward.3} parent=11 // pred_region
          _
        $region32: #{bert_forward.3} parent=11 // pred_fallthru
          _
        // Predicated region
        $region33: #{bert_forward.3} parent=11 // pred_check
          %p458 = pneg %p208
        $region34: #{bert_forward.3} parent=11 // pred_check_branch
          %460 = sbr.rel (%p458) target = $region36
        $region35: #{bert_forward.3} parent=11 // pred_region
          _
        $region36: #{bert_forward.3} parent=11 // pred_fallthru
          _
        // Predicated region
        $region37: #{bert_forward.3} parent=11 // pred_check
          %p461 = pneg %p229
        $region38: #{bert_forward.3} parent=11 // pred_check_branch
          %463 = sbr.rel (%p461) target = $region40
        $region39: #{bert_forward.3} parent=11 // pred_region
          _
        $region40: #{bert_forward.3} parent=11 // pred_fallthru
          _
        // Predicated region
        $region41: #{bert_forward.3} parent=11 // pred_check
          %p464 = pneg %p250
        $region42: #{bert_forward.3} parent=11 // pred_check_branch
          %466 = sbr.rel (%p464) target = $region44
        $region43: #{bert_forward.3} parent=11 // pred_region
          _
        $region44: #{bert_forward.3} parent=11 // pred_fallthru
          _
        // Predicated region
        $region45: #{bert_forward.3} parent=11 // pred_check
          %p467 = pneg %p271
        $region46: #{bert_forward.3} parent=11 // pred_check_branch
          %469 = sbr.rel (%p467) target = $region48
        $region47: #{bert_forward.3} parent=11 // pred_region
          _
        $region48: #{bert_forward.3} parent=11 // pred_fallthru
          _
        // Predicated region
        $region49: #{bert_forward.3} parent=11 // pred_check
          %p470 = pneg %p292
        $region50: #{bert_forward.3} parent=11 // pred_check_branch
          %472 = sbr.rel (%p470) target = $region52
        $region51: #{bert_forward.3} parent=11 // pred_region
          _
        $region52: #{bert_forward.3} parent=11 // pred_fallthru
          _
        // Predicated region
        $region53: #{bert_forward.3} parent=11 // pred_check
          %p473 = pneg %p313
        $region54: #{bert_forward.3} parent=11 // pred_check_branch
          %475 = sbr.rel (%p473) target = $region56
        $region55: #{bert_forward.3} parent=11 // pred_region
          _
        $region56: #{bert_forward.3} parent=11 // pred_fallthru
          _
        // Predicated region
        $region57: #{bert_forward.3} parent=11 // pred_check
          %p476 = pneg %p334
        $region58: #{bert_forward.3} parent=11 // pred_check_branch
          %478 = sbr.rel (%p476) target = $region60
        $region59: #{bert_forward.3} parent=11 // pred_region
          _
        $region60: #{bert_forward.3} parent=11 // pred_fallthru
          _
        // Predicated region
        $region61: #{bert_forward.3} parent=11 // pred_check
          %p479 = pneg %p355
        $region62: #{bert_forward.3} parent=11 // pred_check_branch
          %481 = sbr.rel (%p479) target = $region64
        $region63: #{bert_forward.3} parent=11 // pred_region
          _
        $region64: #{bert_forward.3} parent=11 // pred_fallthru
          _
        // Predicated region
        $region65: #{bert_forward.3} parent=11 // pred_check
          %p482 = pneg %p376
        $region66: #{bert_forward.3} parent=11 // pred_check_branch
          %484 = sbr.rel (%p482) target = $region68
        $region67: #{bert_forward.3} parent=11 // pred_region
          _
        $region68: #{bert_forward.3} parent=11 // pred_fallthru
          _
      $region12: #{bert_forward.3} parent=5 // pred_fallthru
        _
      %p485 = scmp.lt.s32.totalorder %s30, 2
      // Predicated region
      $region69: #{bert_forward.3} parent=5 // pred_check
        %p486 = pneg %p485
      $region70: #{bert_forward.3} parent=5 // pred_check_branch
        %488 = sbr.rel (%p486) target = $region72
      $region71: #{bert_forward.3} parent=5 // pred_region
        // Predicated region
        $region73: #{bert_forward.3} parent=71 // pred_check
          %p489 = pneg %p50
        $region74: #{bert_forward.3} parent=71 // pred_check_branch
          %491 = sbr.rel (%p489) target = $region76
        $region75: #{bert_forward.3} parent=71 // pred_region
          %p492 = scmp.lt.s32.totalorder %s30, 1
          %s493 = scalar_select %p492, %s30, 1
          %s494 = smul.addr %s493, 8
          %s495 = scalar_lea.vmem %s0, %s494
        $region76: #{bert_forward.3} parent=71 // pred_fallthru
          _
        // Predicated region
        $region77: #{bert_forward.3} parent=71 // pred_check
          %p496 = pneg %p76
        $region78: #{bert_forward.3} parent=71 // pred_check_branch
          %498 = sbr.rel (%p496) target = $region80
        $region79: #{bert_forward.3} parent=71 // pred_region
          %p499 = scmp.lt.s32.totalorder %s30, 1
          %s500 = scalar_select %p499, %s30, 1
          %s501 = scalar_lea.vmem %s1, %s500
        $region80: #{bert_forward.3} parent=71 // pred_fallthru
          _
      $region72: #{bert_forward.3} parent=5 // pred_fallthru
        _
      %p502 = scmp.le.s32.totalorder 1, %s30
      %p503 = scmp.lt.s32.totalorder %s30, 3
      %p504 = pnand %p502, %p503
      %p505 = pneg %p504
      // Predicated region
      $region81: #{bert_forward.3} parent=5 // pred_check
        _
      $region82: #{bert_forward.3} parent=5 // pred_check_branch
        %507 = sbr.rel (%p504) target = $region84
      $region83: #{bert_forward.3} parent=5 // pred_region
        %s508 = ssub.s32 %s30, 1
        %p509 = scmp.lt.s32.totalorder %s35, 1
        %s510 = scalar_select %p509, %s35, 1
        %s511 = smul.addr %s510, 8
        %s512 = scalar_lea.vmem %s0, %s511
        %p513 = pneg %p56
        %p514 = pneg %p53
        %p515 = scmp.lt.s32.totalorder %s35, 1
        %s516 = scalar_select %p515, %s35, 1
        %s517 = scalar_lea.vmem %s1, %s516
        %p518 = pneg %p82
        %p519 = pneg %p79
        %p520 = pneg %p103
        %p521 = pneg %p100
        %p522 = pneg %p124
        %p523 = pneg %p121
        %p524 = pneg %p145
        %p525 = pneg %p142
        %p526 = pneg %p166
        %p527 = pneg %p163
        %p528 = pneg %p187
        %p529 = pneg %p184
        %p530 = pneg %p208
        %p531 = pneg %p205
        %p532 = pneg %p229
        %p533 = pneg %p226
        %p534 = pneg %p250
        %p535 = pneg %p247
        %p536 = pneg %p271
        %p537 = pneg %p268
        %p538 = pneg %p292
        %p539 = pneg %p289
        %p540 = pneg %p313
        %p541 = pneg %p310
        %p542 = pneg %p334
        %p543 = pneg %p331
        %p544 = pneg %p355
        %p545 = pneg %p352
        %p546 = pneg %p376
        %p547 = pneg %p373
        %p548 = pneg %p402
        %p549 = pneg %p399
        %s550 = sand.u32 %s389, 1
        %s551 = scalar_lea.sflag [#allocation3], %s550
        %s552 = sand.u32 %s389, 1
        %s553 = smul.addr %s552, 8
        %s554 = scalar_lea.vmem [#allocation2], %s553
        %p555 = pneg %p428
        %p556 = pneg %p425
        %s557 = sand.u32 %s415, 1
        %s558 = scalar_lea.sflag [#allocation5], %s557
        %s559 = sand.u32 %s415, 1
        %s560 = scalar_lea.vmem [#allocation4], %s559
        %p561 = scmp.lt.s32.totalorder %s35, 1
        %s562 = scalar_select %p561, %s35, 1
        %s563 = smul.addr %s562, 8
        %s564 = scalar_lea.vmem %s0, %s563
        %p565 = scmp.lt.s32.totalorder %s35, 1
        %s566 = scalar_select %p565, %s35, 1
        %s567 = scalar_lea.vmem %s1, %s566
        %v569 = vld [vmem:[%s564] sm:$0xff]
        %v570 = vld [vmem:[%s567] sm:$0x1]
        %v571 = vld [vmem:[%s2] sm:$0xff]
        %v572 = vld [vmem:[%s2 + $0x8] sm:$0xff]
        %v573 = vld [vmem:[%s2 + $0x10] sm:$0xff]
        %v574 = vld [vmem:[%s2 + $0x18] sm:$0xff]
        %v575 = vpack.c.bf16 %v569, %v569
        %v576 = vpack.c.bf16 %v572, %v571
        %v577 = vpack.c.bf16 %v574, %v573
        %v578 = vld [vmem:[%s3] sm:$0x1]
        %v580 = vlaneseq
        %v581 = vshrl.u32 %v580, 7
        %v582 = vsub.s32 0, %v581
        %v583 = vrot.slane %v578, %v582
        %vm585 = vcmask 261120
        %v587 = vsel %vm585, %v575, 0
        %589 = vmatprep.subr.bf16.mxu0 0
        %590 = vmatpush1.bf16.msra.mxu0 %v576
        %591 = vmatprep.subr.bf16.mxu0 0
        %592 = vmatpush1.bf16.msra.mxu0 %v577
        %593 = vmatprep.subr.bf16.mxu0 0
        %594 = vmatpush1.bf16.msra.mxu0 0
        %595 = vmatprep.subr.bf16.mxu0 0
        %596 = vmatpush1.bf16.msra.mxu0 0
        %597 = vmatprep.subr.bf16.mxu0 0
        %598 = vmatpush1.bf16.msra.mxu0 0
        %599 = vmatprep.subr.bf16.mxu0 0
        %600 = vmatpush1.bf16.msra.mxu0 0
        %601 = vmatprep.subr.bf16.mxu0 0
        %602 = vmatpush1.bf16.msra.mxu0 0
        %603 = vmatprep.subr.bf16.mxu0 0
        %604 = vmatpush1.bf16.msra.mxu0 0
        %605 = vmatprep.subr.bf16.mxu0 0
        %606 = vmatpush1.bf16.msra.mxu0 0
        %607 = vmatprep.subr.bf16.mxu0 0
        %608 = vmatpush1.bf16.msra.mxu0 0
        %609 = vmatprep.subr.bf16.mxu0 0
        %610 = vmatpush1.bf16.msra.mxu0 0
        %611 = vmatprep.subr.bf16.mxu0 0
        %612 = vmatpush1.bf16.msra.mxu0 0
        %613 = vmatprep.subr.bf16.mxu0 0
        %614 = vmatpush1.bf16.msra.mxu0 0
        %615 = vmatprep.subr.bf16.mxu0 0
        %616 = vmatpush1.bf16.msra.mxu0 0
        %617 = vmatprep.subr.bf16.mxu0 0
        %618 = vmatpush1.bf16.msra.mxu0 0
        %619 = vmatprep.subr.bf16.mxu0 0
        %620 = vmatpush1.bf16.msra.mxu0 0
        %621 = vmatprep.mubr.bf16.mxu0 0
        %622 = vmatmul.mubr.bf16.gmra.mrb[0].mxu0 %v587
        %v623 = vpop.f32.mrb[0].mxu0
        %v624 = vadd.f32 %v583, %v623
        %v625 = vpop.f32.mrb[0].mxu0
        %v626 = vpop.f32.mrb[0].mxu0
        %v627 = vpop.f32.mrb[0].mxu0
        %628 = vdwg.mxu0
        %v629 = vmul.f32 %v624, 0.35355338
        %v630 = vpack.c.bf16 %v629, %v629
        %v631 = vpack.c.bf16 %v624, %v624
        %v633 = vlaneseq
        %v634 = vshrl.u32 %v633, 7
        %v635 = vsub.s32 0, %v634
        %v636 = vrot.slane %v570, %v635
        %639 = vrot.lane.b32.xlu0 %v631, 96
        %v640 = vpop.permute.xlu0 %639
        %vm641 = vcmask 64512
        %v643 = vsel %vm641, %v630, 0
        %v646 = vsel %vm641, %v640, 0
        %648 = vmatprep.subr.bf16.mxu0 0
        %649 = vmatpush1.bf16.xpose.msra.mxu0 %v646
        %650 = vmatprep.subr.bf16.mxu0 0
        %651 = vmatpush1.bf16.xpose.msra.mxu0 0
        %652 = vmatprep.subr.bf16.mxu0 0
        %653 = vmatpush1.bf16.xpose.msra.mxu0 0
        %654 = vmatprep.subr.bf16.mxu0 0
        %655 = vmatpush1.bf16.xpose.msra.mxu0 0
        %656 = vmatprep.subr.bf16.mxu0 0
        %657 = vmatpush1.bf16.xpose.msra.mxu0 0
        %658 = vmatprep.subr.bf16.mxu0 0
        %659 = vmatpush1.bf16.xpose.msra.mxu0 0
        %660 = vmatprep.subr.bf16.mxu0 0
        %661 = vmatpush1.bf16.xpose.msra.mxu0 0
        %662 = vmatprep.subr.bf16.mxu0 0
        %663 = vmatpush1.bf16.xpose.msra.mxu0 0
        %664 = vmatprep.subr.bf16.mxu0 0
        %665 = vmatpush1.bf16.xpose.msra.mxu0 0
        %666 = vmatprep.subr.bf16.mxu0 0
        %667 = vmatpush1.bf16.xpose.msra.mxu0 0
        %668 = vmatprep.subr.bf16.mxu0 0
        %669 = vmatpush1.bf16.xpose.msra.mxu0 0
        %670 = vmatprep.subr.bf16.mxu0 0
        %671 = vmatpush1.bf16.xpose.msra.mxu0 0
        %672 = vmatprep.subr.bf16.mxu0 0
        %673 = vmatpush1.bf16.xpose.msra.mxu0 0
        %674 = vmatprep.subr.bf16.mxu0 0
        %675 = vmatpush1.bf16.xpose.msra.mxu0 0
        %676 = vmatprep.subr.bf16.mxu0 0
        %677 = vmatpush1.bf16.xpose.msra.mxu0 0
        %678 = vmatprep.subr.bf16.mxu0 0
        %679 = vmatpush1.bf16.xpose.msra.mxu0 0
        %680 = vmatprep.mubr.bf16.mxu0 0
        %681 = vmatmul.mubr.bf16.gmra.mrb[0].mxu0 %v643
        %v682 = vpop.f32.mrb[0].mxu0
        %v683 = vadd.f32 %v636, %v682
        %v684 = vpop.f32.mrb[0].mxu0
        %v685 = vpop.f32.mrb[0].mxu0
        %v686 = vpop.f32.mrb[0].mxu0
        %687 = vdwg.mxu0
        %v688 = vsel %vm641, %v683, -inf
        %689 = vmax.xlane.f32.xlu0 %v688
        %v690 = vpop.xlane.xlu0 %689
        %v691 = vsub.f32 %v683, %v690
        %v692 = vmul.f32 %v691, 1.442695
        %v693 = vpow.pop %v692
        %v694 = vsel %vm641, %v693, 0.0
        %695 = vadd.xlane.f32.xlu0 %v694
        %v696 = vpop.xlane.xlu0 %695
        %v697 = vrcp.pop %v696
        %v698 = vmul.f32 %v693, %v697
        %v699 = vpack.c.bf16 %v698, %v698
        %700 = vrot.lane.b32.xlu0 %v631, 64
        %v701 = vpop.permute.xlu0 %700
        %v703 = vsel %vm641, %v699, 0
        %vm705 = vcmask 1043456
        %v707 = vsel %vm705, %v701, 0
        %709 = vmatprep.subr.bf16.mxu0 0
        %710 = vmatpush1.bf16.msra.mxu0 %v707
        %711 = vmatprep.subr.bf16.mxu0 0
        %712 = vmatpush1.bf16.msra.mxu0 0
        %713 = vmatprep.subr.bf16.mxu0 0
        %714 = vmatpush1.bf16.msra.mxu0 0
        %715 = vmatprep.subr.bf16.mxu0 0
        %716 = vmatpush1.bf16.msra.mxu0 0
        %717 = vmatprep.subr.bf16.mxu0 0
        %718 = vmatpush1.bf16.msra.mxu0 0
        %719 = vmatprep.subr.bf16.mxu0 0
        %720 = vmatpush1.bf16.msra.mxu0 0
        %721 = vmatprep.subr.bf16.mxu0 0
        %722 = vmatpush1.bf16.msra.mxu0 0
        %723 = vmatprep.subr.bf16.mxu0 0
        %724 = vmatpush1.bf16.msra.mxu0 0
        %725 = vmatprep.subr.bf16.mxu0 0
        %726 = vmatpush1.bf16.msra.mxu0 0
        %727 = vmatprep.subr.bf16.mxu0 0
        %728 = vmatpush1.bf16.msra.mxu0 0
        %729 = vmatprep.subr.bf16.mxu0 0
        %730 = vmatpush1.bf16.msra.mxu0 0
        %731 = vmatprep.subr.bf16.mxu0 0
        %732 = vmatpush1.bf16.msra.mxu0 0
        %733 = vmatprep.subr.bf16.mxu0 0
        %734 = vmatpush1.bf16.msra.mxu0 0
        %735 = vmatprep.subr.bf16.mxu0 0
        %736 = vmatpush1.bf16.msra.mxu0 0
        %737 = vmatprep.subr.bf16.mxu0 0
        %738 = vmatpush1.bf16.msra.mxu0 0
        %739 = vmatprep.subr.bf16.mxu0 0
        %740 = vmatpush1.bf16.msra.mxu0 0
        %741 = vmatprep.mubr.bf16.mxu0 0
        %742 = vmatmul.mubr.bf16.gmra.mrb[0].mxu0 %v703
        %v743 = vpop.f32.mrb[0].mxu0
        %v744 = vadd.f32 0.0, %v743
        %v745 = vpop.f32.mrb[0].mxu0
        %v746 = vpop.f32.mrb[0].mxu0
        %v747 = vpop.f32.mrb[0].mxu0
        %748 = vdwg.mxu0
        %750 = vrot.lane.b32.xlu0 %v630, 120
        %v751 = vpop.permute.xlu0 %750
        %752 = vrot.lane.b32.xlu0 %v631, 88
        %v753 = vpop.permute.xlu0 %752
        %v755 = vsel %vm641, %v751, 0
        %v758 = vsel %vm641, %v753, 0
        %760 = vmatprep.subr.bf16.mxu0 0
        %761 = vmatpush1.bf16.xpose.msra.mxu0 %v758
        %762 = vmatprep.subr.bf16.mxu0 0
        %763 = vmatpush1.bf16.xpose.msra.mxu0 0
        %764 = vmatprep.subr.bf16.mxu0 0
        %765 = vmatpush1.bf16.xpose.msra.mxu0 0
        %766 = vmatprep.subr.bf16.mxu0 0
        %767 = vmatpush1.bf16.xpose.msra.mxu0 0
        %768 = vmatprep.subr.bf16.mxu0 0
        %769 = vmatpush1.bf16.xpose.msra.mxu0 0
        %770 = vmatprep.subr.bf16.mxu0 0
        %771 = vmatpush1.bf16.xpose.msra.mxu0 0
        %772 = vmatprep.subr.bf16.mxu0 0
        %773 = vmatpush1.bf16.xpose.msra.mxu0 0
        %774 = vmatprep.subr.bf16.mxu0 0
        %775 = vmatpush1.bf16.xpose.msra.mxu0 0
        %776 = vmatprep.subr.bf16.mxu0 0
        %777 = vmatpush1.bf16.xpose.msra.mxu0 0
        %778 = vmatprep.subr.bf16.mxu0 0
        %779 = vmatpush1.bf16.xpose.msra.mxu0 0
        %780 = vmatprep.subr.bf16.mxu0 0
        %781 = vmatpush1.bf16.xpose.msra.mxu0 0
        %782 = vmatprep.subr.bf16.mxu0 0
        %783 = vmatpush1.bf16.xpose.msra.mxu0 0
        %784 = vmatprep.subr.bf16.mxu0 0
        %785 = vmatpush1.bf16.xpose.msra.mxu0 0
        %786 = vmatprep.subr.bf16.mxu0 0
        %787 = vmatpush1.bf16.xpose.msra.mxu0 0
        %788 = vmatprep.subr.bf16.mxu0 0
        %789 = vmatpush1.bf16.xpose.msra.mxu0 0
        %790 = vmatprep.subr.bf16.mxu0 0
        %791 = vmatpush1.bf16.xpose.msra.mxu0 0
        %792 = vmatprep.mubr.bf16.mxu0 0
        %793 = vmatmul.mubr.bf16.gmra.mrb[0].mxu0 %v755
        %v794 = vpop.f32.mrb[0].mxu0
        %v795 = vadd.f32 %v636, %v794
        %v796 = vpop.f32.mrb[0].mxu0
        %v797 = vpop.f32.mrb[0].mxu0
        %v798 = vpop.f32.mrb[0].mxu0
        %799 = vdwg.mxu0
        %v800 = vsel %vm641, %v795, -inf
        %801 = vmax.xlane.f32.xlu0 %v800
        %v802 = vpop.xlane.xlu0 %801
        %v803 = vsub.f32 %v795, %v802
        %v804 = vmul.f32 %v803, 1.442695
        %v805 = vpow.pop %v804
        %v806 = vsel %vm641, %v805, 0.0
        %807 = vadd.xlane.f32.xlu0 %v806
        %v808 = vpop.xlane.xlu0 %807
        %v809 = vrcp.pop %v808
        %v810 = vmul.f32 %v805, %v809
        %v811 = vpack.c.bf16 %v810, %v810
        %812 = vrot.lane.b32.xlu0 %v631, 56
        %v813 = vpop.permute.xlu0 %812
        %v815 = vsel %vm641, %v811, 0
        %v818 = vsel %vm705, %v813, 0
        %820 = vmatprep.subr.bf16.mxu0 0
        %821 = vmatpush1.bf16.msra.mxu0 %v818
        %822 = vmatprep.subr.bf16.mxu0 0
        %823 = vmatpush1.bf16.msra.mxu0 0
        %824 = vmatprep.subr.bf16.mxu0 0
        %825 = vmatpush1.bf16.msra.mxu0 0
        %826 = vmatprep.subr.bf16.mxu0 0
        %827 = vmatpush1.bf16.msra.mxu0 0
        %828 = vmatprep.subr.bf16.mxu0 0
        %829 = vmatpush1.bf16.msra.mxu0 0
        %830 = vmatprep.subr.bf16.mxu0 0
        %831 = vmatpush1.bf16.msra.mxu0 0
        %832 = vmatprep.subr.bf16.mxu0 0
        %833 = vmatpush1.bf16.msra.mxu0 0
        %834 = vmatprep.subr.bf16.mxu0 0
        %835 = vmatpush1.bf16.msra.mxu0 0
        %836 = vmatprep.subr.bf16.mxu0 0
        %837 = vmatpush1.bf16.msra.mxu0 0
        %838 = vmatprep.subr.bf16.mxu0 0
        %839 = vmatpush1.bf16.msra.mxu0 0
        %840 = vmatprep.subr.bf16.mxu0 0
        %841 = vmatpush1.bf16.msra.mxu0 0
        %842 = vmatprep.subr.bf16.mxu0 0
        %843 = vmatpush1.bf16.msra.mxu0 0
        %844 = vmatprep.subr.bf16.mxu0 0
        %845 = vmatpush1.bf16.msra.mxu0 0
        %846 = vmatprep.subr.bf16.mxu0 0
        %847 = vmatpush1.bf16.msra.mxu0 0
        %848 = vmatprep.subr.bf16.mxu0 0
        %849 = vmatpush1.bf16.msra.mxu0 0
        %850 = vmatprep.subr.bf16.mxu0 0
        %851 = vmatpush1.bf16.msra.mxu0 0
        %852 = vmatprep.mubr.bf16.mxu0 0
        %853 = vmatmul.mubr.bf16.gmra.mrb[0].mxu0 %v815
        %v854 = vpop.f32.mrb[0].mxu0
        %v855 = vadd.f32 0.0, %v854
        %v856 = vpop.f32.mrb[0].mxu0
        %v857 = vpop.f32.mrb[0].mxu0
        %v858 = vpop.f32.mrb[0].mxu0
        %859 = vdwg.mxu0
        %860 = vrot.lane.b32.xlu0 %v630, 112
        %v861 = vpop.permute.xlu0 %860
        %862 = vrot.lane.b32.xlu0 %v631, 80
        %v863 = vpop.permute.xlu0 %862
        %v865 = vsel %vm641, %v861, 0
        %v868 = vsel %vm641, %v863, 0
        %870 = vmatprep.subr.bf16.mxu0 0
        %871 = vmatpush1.bf16.xpose.msra.mxu0 %v868
        %872 = vmatprep.subr.bf16.mxu0 0
        %873 = vmatpush1.bf16.xpose.msra.mxu0 0
        %874 = vmatprep.subr.bf16.mxu0 0
        %875 = vmatpush1.bf16.xpose.msra.mxu0 0
        %876 = vmatprep.subr.bf16.mxu0 0
        %877 = vmatpush1.bf16.xpose.msra.mxu0 0
        %878 = vmatprep.subr.bf16.mxu0 0
        %879 = vmatpush1.bf16.xpose.msra.mxu0 0
        %880 = vmatprep.subr.bf16.mxu0 0
        %881 = vmatpush1.bf16.xpose.msra.mxu0 0
        %882 = vmatprep.subr.bf16.mxu0 0
        %883 = vmatpush1.bf16.xpose.msra.mxu0 0
        %884 = vmatprep.subr.bf16.mxu0 0
        %885 = vmatpush1.bf16.xpose.msra.mxu0 0
        %886 = vmatprep.subr.bf16.mxu0 0
        %887 = vmatpush1.bf16.xpose.msra.mxu0 0
        %888 = vmatprep.subr.bf16.mxu0 0
        %889 = vmatpush1.bf16.xpose.msra.mxu0 0
        %890 = vmatprep.subr.bf16.mxu0 0
        %891 = vmatpush1.bf16.xpose.msra.mxu0 0
        %892 = vmatprep.subr.bf16.mxu0 0
        %893 = vmatpush1.bf16.xpose.msra.mxu0 0
        %894 = vmatprep.subr.bf16.mxu0 0
        %895 = vmatpush1.bf16.xpose.msra.mxu0 0
        %896 = vmatprep.subr.bf16.mxu0 0
        %897 = vmatpush1.bf16.xpose.msra.mxu0 0
        %898 = vmatprep.subr.bf16.mxu0 0
        %899 = vmatpush1.bf16.xpose.msra.mxu0 0
        %900 = vmatprep.subr.bf16.mxu0 0
        %901 = vmatpush1.bf16.xpose.msra.mxu0 0
        %902 = vmatprep.mubr.bf16.mxu0 0
        %903 = vmatmul.mubr.bf16.gmra.mrb[0].mxu0 %v865
        %v904 = vpop.f32.mrb[0].mxu0
        %v905 = vadd.f32 %v636, %v904
        %v906 = vpop.f32.mrb[0].mxu0
        %v907 = vpop.f32.mrb[0].mxu0
        %v908 = vpop.f32.mrb[0].mxu0
        %909 = vdwg.mxu0
        %v910 = vsel %vm641, %v905, -inf
        %911 = vmax.xlane.f32.xlu0 %v910
        %v912 = vpop.xlane.xlu0 %911
        %v913 = vsub.f32 %v905, %v912
        %v914 = vmul.f32 %v913, 1.442695
        %v915 = vpow.pop %v914
        %v916 = vsel %vm641, %v915, 0.0
        %917 = vadd.xlane.f32.xlu0 %v916
        %v918 = vpop.xlane.xlu0 %917
        %v919 = vrcp.pop %v918
        %v920 = vmul.f32 %v915, %v919
        %v921 = vpack.c.bf16 %v920, %v920
        %922 = vrot.lane.b32.xlu0 %v631, 48
        %v923 = vpop.permute.xlu0 %922
        %v925 = vsel %vm641, %v921, 0
        %v928 = vsel %vm705, %v923, 0
        %930 = vmatprep.subr.bf16.mxu0 0
        %931 = vmatpush1.bf16.msra.mxu0 %v928
        %932 = vmatprep.subr.bf16.mxu0 0
        %933 = vmatpush1.bf16.msra.mxu0 0
        %934 = vmatprep.subr.bf16.mxu0 0
        %935 = vmatpush1.bf16.msra.mxu0 0
        %936 = vmatprep.subr.bf16.mxu0 0
        %937 = vmatpush1.bf16.msra.mxu0 0
        %938 = vmatprep.subr.bf16.mxu0 0
        %939 = vmatpush1.bf16.msra.mxu0 0
        %940 = vmatprep.subr.bf16.mxu0 0
        %941 = vmatpush1.bf16.msra.mxu0 0
        %942 = vmatprep.subr.bf16.mxu0 0
        %943 = vmatpush1.bf16.msra.mxu0 0
        %944 = vmatprep.subr.bf16.mxu0 0
        %945 = vmatpush1.bf16.msra.mxu0 0
        %946 = vmatprep.subr.bf16.mxu0 0
        %947 = vmatpush1.bf16.msra.mxu0 0
        %948 = vmatprep.subr.bf16.mxu0 0
        %949 = vmatpush1.bf16.msra.mxu0 0
        %950 = vmatprep.subr.bf16.mxu0 0
        %951 = vmatpush1.bf16.msra.mxu0 0
        %952 = vmatprep.subr.bf16.mxu0 0
        %953 = vmatpush1.bf16.msra.mxu0 0
        %954 = vmatprep.subr.bf16.mxu0 0
        %955 = vmatpush1.bf16.msra.mxu0 0
        %956 = vmatprep.subr.bf16.mxu0 0
        %957 = vmatpush1.bf16.msra.mxu0 0
        %958 = vmatprep.subr.bf16.mxu0 0
        %959 = vmatpush1.bf16.msra.mxu0 0
        %960 = vmatprep.subr.bf16.mxu0 0
        %961 = vmatpush1.bf16.msra.mxu0 0
        %962 = vmatprep.mubr.bf16.mxu0 0
        %963 = vmatmul.mubr.bf16.gmra.mrb[0].mxu0 %v925
        %v964 = vpop.f32.mrb[0].mxu0
        %v965 = vadd.f32 0.0, %v964
        %v966 = vpop.f32.mrb[0].mxu0
        %v967 = vpop.f32.mrb[0].mxu0
        %v968 = vpop.f32.mrb[0].mxu0
        %969 = vdwg.mxu0
        %970 = vrot.lane.b32.xlu0 %v630, 104
        %v971 = vpop.permute.xlu0 %970
        %972 = vrot.lane.b32.xlu0 %v631, 72
        %v973 = vpop.permute.xlu0 %972
        %v975 = vsel %vm641, %v971, 0
        %v978 = vsel %vm641, %v973, 0
        %980 = vmatprep.subr.bf16.mxu0 0
        %981 = vmatpush1.bf16.xpose.msra.mxu0 %v978
        %982 = vmatprep.subr.bf16.mxu0 0
        %983 = vmatpush1.bf16.xpose.msra.mxu0 0
        %984 = vmatprep.subr.bf16.mxu0 0
        %985 = vmatpush1.bf16.xpose.msra.mxu0 0
        %986 = vmatprep.subr.bf16.mxu0 0
        %987 = vmatpush1.bf16.xpose.msra.mxu0 0
        %988 = vmatprep.subr.bf16.mxu0 0
        %989 = vmatpush1.bf16.xpose.msra.mxu0 0
        %990 = vmatprep.subr.bf16.mxu0 0
        %991 = vmatpush1.bf16.xpose.msra.mxu0 0
        %992 = vmatprep.subr.bf16.mxu0 0
        %993 = vmatpush1.bf16.xpose.msra.mxu0 0
        %994 = vmatprep.subr.bf16.mxu0 0
        %995 = vmatpush1.bf16.xpose.msra.mxu0 0
        %996 = vmatprep.subr.bf16.mxu0 0
        %997 = vmatpush1.bf16.xpose.msra.mxu0 0
        %998 = vmatprep.subr.bf16.mxu0 0
        %999 = vmatpush1.bf16.xpose.msra.mxu0 0
        %1000 = vmatprep.subr.bf16.mxu0 0
        %1001 = vmatpush1.bf16.xpose.msra.mxu0 0
        %1002 = vmatprep.subr.bf16.mxu0 0
        %1003 = vmatpush1.bf16.xpose.msra.mxu0 0
        %1004 = vmatprep.subr.bf16.mxu0 0
        %1005 = vmatpush1.bf16.xpose.msra.mxu0 0
        %1006 = vmatprep.subr.bf16.mxu0 0
        %1007 = vmatpush1.bf16.xpose.msra.mxu0 0
        %1008 = vmatprep.subr.bf16.mxu0 0
        %1009 = vmatpush1.bf16.xpose.msra.mxu0 0
        %1010 = vmatprep.subr.bf16.mxu0 0
        %1011 = vmatpush1.bf16.xpose.msra.mxu0 0
        %1012 = vmatprep.mubr.bf16.mxu0 0
        %1013 = vmatmul.mubr.bf16.gmra.mrb[0].mxu0 %v975
        %v1014 = vpop.f32.mrb[0].mxu0
        %v1015 = vadd.f32 %v636, %v1014
        %v1016 = vpop.f32.mrb[0].mxu0
        %v1017 = vpop.f32.mrb[0].mxu0
        %v1018 = vpop.f32.mrb[0].mxu0
        %1019 = vdwg.mxu0
        %v1020 = vsel %vm641, %v1015, -inf
        %1021 = vmax.xlane.f32.xlu0 %v1020
        %v1022 = vpop.xlane.xlu0 %1021
        %v1023 = vsub.f32 %v1015, %v1022
        %v1024 = vmul.f32 %v1023, 1.442695
        %v1025 = vpow.pop %v1024
        %v1026 = vsel %vm641, %v1025, 0.0
        %1027 = vadd.xlane.f32.xlu0 %v1026
        %v1028 = vpop.xlane.xlu0 %1027
        %v1029 = vrcp.pop %v1028
        %v1030 = vmul.f32 %v1025, %v1029
        %v1031 = vpack.c.bf16 %v1030, %v1030
        %1032 = vrot.lane.b32.xlu0 %v631, 40
        %v1033 = vpop.permute.xlu0 %1032
        %v1035 = vsel %vm641, %v1031, 0
        %v1038 = vsel %vm705, %v1033, 0
        %1040 = vmatprep.subr.bf16.mxu0 0
        %1041 = vmatpush1.bf16.msra.mxu0 %v1038
        %1042 = vmatprep.subr.bf16.mxu0 0
        %1043 = vmatpush1.bf16.msra.mxu0 0
        %1044 = vmatprep.subr.bf16.mxu0 0
        %1045 = vmatpush1.bf16.msra.mxu0 0
        %1046 = vmatprep.subr.bf16.mxu0 0
        %1047 = vmatpush1.bf16.msra.mxu0 0
        %1048 = vmatprep.subr.bf16.mxu0 0
        %1049 = vmatpush1.bf16.msra.mxu0 0
        %1050 = vmatprep.subr.bf16.mxu0 0
        %1051 = vmatpush1.bf16.msra.mxu0 0
        %1052 = vmatprep.subr.bf16.mxu0 0
        %1053 = vmatpush1.bf16.msra.mxu0 0
        %1054 = vmatprep.subr.bf16.mxu0 0
        %1055 = vmatpush1.bf16.msra.mxu0 0
        %1056 = vmatprep.subr.bf16.mxu0 0
        %1057 = vmatpush1.bf16.msra.mxu0 0
        %1058 = vmatprep.subr.bf16.mxu0 0
        %1059 = vmatpush1.bf16.msra.mxu0 0
        %1060 = vmatprep.subr.bf16.mxu0 0
        %1061 = vmatpush1.bf16.msra.mxu0 0
        %1062 = vmatprep.subr.bf16.mxu0 0
        %1063 = vmatpush1.bf16.msra.mxu0 0
        %1064 = vmatprep.subr.bf16.mxu0 0
        %1065 = vmatpush1.bf16.msra.mxu0 0
        %1066 = vmatprep.subr.bf16.mxu0 0
        %1067 = vmatpush1.bf16.msra.mxu0 0
        %1068 = vmatprep.subr.bf16.mxu0 0
        %1069 = vmatpush1.bf16.msra.mxu0 0
        %1070 = vmatprep.subr.bf16.mxu0 0
        %1071 = vmatpush1.bf16.msra.mxu0 0
        %1072 = vmatprep.mubr.bf16.mxu0 0
        %1073 = vmatmul.mubr.bf16.gmra.mrb[0].mxu0 %v1035
        %v1074 = vpop.f32.mrb[0].mxu0
        %v1075 = vadd.f32 0.0, %v1074
        %v1076 = vpop.f32.mrb[0].mxu0
        %v1077 = vpop.f32.mrb[0].mxu0
        %v1078 = vpop.f32.mrb[0].mxu0
        %1079 = vdwg.mxu0
        %1081 = vrot.lane.b32.xlu0 %v855, 8
        %v1082 = vpop.permute.xlu0 %1081
        %1085 = vrot.lane.b32.xlu0 %v965, 16
        %v1086 = vpop.permute.xlu0 %1085
        %1089 = vrot.lane.b32.xlu0 %v1075, 24
        %v1090 = vpop.permute.xlu0 %1089
        %v1092 = vsel %vm641, %v744, %v1082
        %vm1093 = vcmask 130048
        %v1094 = vsel %vm1093, %v1092, %v1086
        %vm1095 = vcmask 195584
        %v1096 = vsel %vm1095, %v1094, %v1090
        %v1097 = vld [vmem:[%s4] sm:$0xff]
        %v1098 = vld [vmem:[%s4 + $0x8] sm:$0xff]
        %v1099 = vld [vmem:[%s4 + $0x10] sm:$0xff]
        %v1100 = vld [vmem:[%s4 + $0x18] sm:$0xff]
        %v1101 = vpack.c.bf16 %v1096, %v1096
        %v1102 = vpack.c.bf16 %v1098, %v1097
        %v1103 = vpack.c.bf16 %v1100, %v1099
        %v1104 = vld [vmem:[%s5] sm:$0x1]
        %v1106 = vlaneseq
        %v1107 = vshrl.u32 %v1106, 7
        %v1108 = vsub.s32 0, %v1107
        %v1109 = vrot.slane %v1104, %v1108
        %v1112 = vsel %vm585, %v1101, 0
        %1114 = vmatprep.subr.bf16.mxu0 0
        %1115 = vmatpush1.bf16.msra.mxu0 %v1102
        %1116 = vmatprep.subr.bf16.mxu0 0
        %1117 = vmatpush1.bf16.msra.mxu0 %v1103
        %1118 = vmatprep.subr.bf16.mxu0 0
        %1119 = vmatpush1.bf16.msra.mxu0 0
        %1120 = vmatprep.subr.bf16.mxu0 0
        %1121 = vmatpush1.bf16.msra.mxu0 0
        %1122 = vmatprep.subr.bf16.mxu0 0
        %1123 = vmatpush1.bf16.msra.mxu0 0
        %1124 = vmatprep.subr.bf16.mxu0 0
        %1125 = vmatpush1.bf16.msra.mxu0 0
        %1126 = vmatprep.subr.bf16.mxu0 0
        %1127 = vmatpush1.bf16.msra.mxu0 0
        %1128 = vmatprep.subr.bf16.mxu0 0
        %1129 = vmatpush1.bf16.msra.mxu0 0
        %1130 = vmatprep.subr.bf16.mxu0 0
        %1131 = vmatpush1.bf16.msra.mxu0 0
        %1132 = vmatprep.subr.bf16.mxu0 0
        %1133 = vmatpush1.bf16.msra.mxu0 0
        %1134 = vmatprep.subr.bf16.mxu0 0
        %1135 = vmatpush1.bf16.msra.mxu0 0
        %1136 = vmatprep.subr.bf16.mxu0 0
        %1137 = vmatpush1.bf16.msra.mxu0 0
        %1138 = vmatprep.subr.bf16.mxu0 0
        %1139 = vmatpush1.bf16.msra.mxu0 0
        %1140 = vmatprep.subr.bf16.mxu0 0
        %1141 = vmatpush1.bf16.msra.mxu0 0
        %1142 = vmatprep.subr.bf16.mxu0 0
        %1143 = vmatpush1.bf16.msra.mxu0 0
        %1144 = vmatprep.subr.bf16.mxu0 0
        %1145 = vmatpush1.bf16.msra.mxu0 0
        %1146 = vmatprep.mubr.bf16.mxu0 0
        %1147 = vmatmul.mubr.bf16.gmra.mrb[0].mxu0 %v1112
        %v1148 = vpop.f32.mrb[0].mxu0
        %v1149 = vadd.f32 %v1109, %v1148
        %v1150 = vpop.f32.mrb[0].mxu0
        %v1151 = vpop.f32.mrb[0].mxu0
        %v1152 = vpop.f32.mrb[0].mxu0
        %1153 = vdwg.mxu0
        %v1154 = vadd.f32 %v1149, %v569
        %v1155 = vld [vmem:[%s6] sm:$0x1]
        %v1156 = vld [vmem:[%s7] sm:$0x1]
        %v1157 = vsel %vm585, %v1154, 0.0
        %1158 = vadd.xlane.f32.xlu0 %v1157
        %v1159 = vpop.xlane.xlu0 %1158
        %v1160 = vrcp.pop 32.0
        %v1161 = vmul.f32 %v1159, %v1160
        %v1162 = vsub.f32 %v1154, %v1161
        %v1163 = vmul.f32 %v1162, %v1162
        %v1164 = vsel %vm585, %v1163, 0.0
        %1165 = vadd.xlane.f32.xlu0 %v1164
        %v1166 = vpop.xlane.xlu0 %1165
        %v1167 = vmul.f32 %v1166, %v1160
        %v1168 = vadd.f32 %v1167, 1e-12
        %v1169 = vrsqrt.pop %v1168
        %v1170 = vmul.f32 %v1162, %v1169
        %v1172 = vlaneseq
        %v1173 = vshrl.u32 %v1172, 7
        %v1174 = vsub.s32 0, %v1173
        %v1175 = vrot.slane %v1155, %v1174
        %v1177 = vmul.f32 %v1170, %v1175
        %v1179 = vlaneseq
        %v1180 = vshrl.u32 %v1179, 7
        %v1181 = vsub.s32 0, %v1180
        %v1182 = vrot.slane %v1156, %v1181
        %v1184 = vadd.f32 %v1177, %v1182
        %v1185 = vld [vmem:[%s8] sm:$0xff]
        %v1186 = vld [vmem:[%s8 + $0x8] sm:$0xff]
        %v1187 = vld [vmem:[%s8 + $0x10] sm:$0xff]
        %v1188 = vld [vmem:[%s8 + $0x18] sm:$0xff]
        %v1189 = vpack.c.bf16 %v1184, %v1184
        %v1190 = vpack.c.bf16 %v1186, %v1185
        %v1191 = vpack.c.bf16 %v1188, %v1187
        %v1192 = vld [vmem:[%s9] sm:$0x1]
        %v1194 = vlaneseq
        %v1195 = vshrl.u32 %v1194, 7
        %v1196 = vsub.s32 0, %v1195
        %v1197 = vrot.slane %v1192, %v1196
        %v1200 = vsel %vm585, %v1189, 0
        %1202 = vmatprep.subr.bf16.mxu0 0
        %1203 = vmatpush1.bf16.msra.mxu0 %v1190
        %1204 = vmatprep.subr.bf16.mxu0 0
        %1205 = vmatpush1.bf16.msra.mxu0 %v1191
        %1206 = vmatprep.subr.bf16.mxu0 0
        %1207 = vmatpush1.bf16.msra.mxu0 0
        %1208 = vmatprep.subr.bf16.mxu0 0
        %1209 = vmatpush1.bf16.msra.mxu0 0
        %1210 = vmatprep.subr.bf16.mxu0 0
        %1211 = vmatpush1.bf16.msra.mxu0 0
        %1212 = vmatprep.subr.bf16.mxu0 0
        %1213 = vmatpush1.bf16.msra.mxu0 0
        %1214 = vmatprep.subr.bf16.mxu0 0
        %1215 = vmatpush1.bf16.msra.mxu0 0
        %1216 = vmatprep.subr.bf16.mxu0 0
        %1217 = vmatpush1.bf16.msra.mxu0 0
        %1218 = vmatprep.subr.bf16.mxu0 0
        %1219 = vmatpush1.bf16.msra.mxu0 0
        %1220 = vmatprep.subr.bf16.mxu0 0
        %1221 = vmatpush1.bf16.msra.mxu0 0
        %1222 = vmatprep.subr.bf16.mxu0 0
        %1223 = vmatpush1.bf16.msra.mxu0 0
        %1224 = vmatprep.subr.bf16.mxu0 0
        %1225 = vmatpush1.bf16.msra.mxu0 0
        %1226 = vmatprep.subr.bf16.mxu0 0
        %1227 = vmatpush1.bf16.msra.mxu0 0
        %1228 = vmatprep.subr.bf16.mxu0 0
        %1229 = vmatpush1.bf16.msra.mxu0 0
        %1230 = vmatprep.subr.bf16.mxu0 0
        %1231 = vmatpush1.bf16.msra.mxu0 0
        %1232 = vmatprep.subr.bf16.mxu0 0
        %1233 = vmatpush1.bf16.msra.mxu0 0
        %1234 = vmatprep.mubr.bf16.mxu0 0
        %1235 = vmatmul.mubr.bf16.gmra.mrb[0].mxu0 %v1200
        %v1236 = vpop.f32.mrb[0].mxu0
        %v1237 = vadd.f32 %v1197, %v1236
        %v1238 = vpop.f32.mrb[0].mxu0
        %v1239 = vpop.f32.mrb[0].mxu0
        %v1240 = vpop.f32.mrb[0].mxu0
        %1241 = vdwg.mxu0
        %v1242 = vmul.f32 %v1237, 0.5
        %v1243 = vmul.f32 %v1237, 0.044715
        %v1244 = vmul.f32 %v1243, %v1237
        %v1245 = vmul.f32 %v1244, %v1237
        %v1246 = vadd.f32 %v1237, %v1245
        %v1247 = vmul.f32 %v1246, 0.7978846
        %v1248 = vtanh.pop %v1247
        %v1249 = vadd.f32 %v1248, 1.0
        %v1250 = vmul.f32 %v1242, %v1249
        %v1251 = vld [vmem:[%s10] sm:$0xff]
        %v1252 = vld [vmem:[%s10 + $0x8] sm:$0xff]
        %v1253 = vld [vmem:[%s10 + $0x10] sm:$0xff]
        %v1254 = vld [vmem:[%s10 + $0x18] sm:$0xff]
        %v1255 = vld [vmem:[%s10 + $0x20] sm:$0xff]
        %v1256 = vld [vmem:[%s10 + $0x28] sm:$0xff]
        %v1257 = vld [vmem:[%s10 + $0x30] sm:$0xff]
        %v1258 = vld [vmem:[%s10 + $0x38] sm:$0xff]
        %v1259 = vpack.c.bf16 %v1250, %v1250
        %v1260 = vpack.c.bf16 %v1252, %v1251
        %v1261 = vpack.c.bf16 %v1254, %v1253
        %v1262 = vpack.c.bf16 %v1256, %v1255
        %v1263 = vpack.c.bf16 %v1258, %v1257
        %v1264 = vld [vmem:[%s11] sm:$0x1]
        %v1266 = vlaneseq
        %v1267 = vshrl.u32 %v1266, 7
        %v1268 = vsub.s32 0, %v1267
        %v1269 = vrot.slane %v1264, %v1268
        %vm1271 = vcmask 523264
        %v1273 = vsel %vm1271, %v1259, 0
        %1275 = vmatprep.subr.bf16.mxu0 0
        %1276 = vmatpush1.bf16.msra.mxu0 %v1260
        %1277 = vmatprep.subr.bf16.mxu0 0
        %1278 = vmatpush1.bf16.msra.mxu0 %v1261
        %1279 = vmatprep.subr.bf16.mxu0 0
        %1280 = vmatpush1.bf16.msra.mxu0 %v1262
        %1281 = vmatprep.subr.bf16.mxu0 0
        %1282 = vmatpush1.bf16.msra.mxu0 %v1263
        %1283 = vmatprep.subr.bf16.mxu0 0
        %1284 = vmatpush1.bf16.msra.mxu0 0
        %1285 = vmatprep.subr.bf16.mxu0 0
        %1286 = vmatpush1.bf16.msra.mxu0 0
        %1287 = vmatprep.subr.bf16.mxu0 0
        %1288 = vmatpush1.bf16.msra.mxu0 0
        %1289 = vmatprep.subr.bf16.mxu0 0
        %1290 = vmatpush1.bf16.msra.mxu0 0
        %1291 = vmatprep.subr.bf16.mxu0 0
        %1292 = vmatpush1.bf16.msra.mxu0 0
        %1293 = vmatprep.subr.bf16.mxu0 0
        %1294 = vmatpush1.bf16.msra.mxu0 0
        %1295 = vmatprep.subr.bf16.mxu0 0
        %1296 = vmatpush1.bf16.msra.mxu0 0
        %1297 = vmatprep.subr.bf16.mxu0 0
        %1298 = vmatpush1.bf16.msra.mxu0 0
        %1299 = vmatprep.subr.bf16.mxu0 0
        %1300 = vmatpush1.bf16.msra.mxu0 0
        %1301 = vmatprep.subr.bf16.mxu0 0
        %1302 = vmatpush1.bf16.msra.mxu0 0
        %1303 = vmatprep.subr.bf16.mxu0 0
        %1304 = vmatpush1.bf16.msra.mxu0 0
        %1305 = vmatprep.subr.bf16.mxu0 0
        %1306 = vmatpush1.bf16.msra.mxu0 0
        %1307 = vmatprep.mubr.bf16.mxu0 0
        %1308 = vmatmul.mubr.bf16.gmra.mrb[0].mxu0 %v1273
        %v1309 = vpop.f32.mrb[0].mxu0
        %v1310 = vadd.f32 %v1269, %v1309
        %v1311 = vpop.f32.mrb[0].mxu0
        %v1312 = vpop.f32.mrb[0].mxu0
        %v1313 = vpop.f32.mrb[0].mxu0
        %1314 = vdwg.mxu0
        %v1315 = vadd.f32 %v1310, %v1184
        %v1316 = vld [vmem:[%s12] sm:$0x1]
        %v1317 = vld [vmem:[%s13] sm:$0x1]
        %v1318 = vsel %vm585, %v1315, 0.0
        %1319 = vadd.xlane.f32.xlu0 %v1318
        %v1320 = vpop.xlane.xlu0 %1319
        %v1321 = vmul.f32 %v1320, %v1160
        %v1322 = vsub.f32 %v1315, %v1321
        %v1323 = vmul.f32 %v1322, %v1322
        %v1324 = vsel %vm585, %v1323, 0.0
        %1325 = vadd.xlane.f32.xlu0 %v1324
        %v1326 = vpop.xlane.xlu0 %1325
        %v1327 = vmul.f32 %v1326, %v1160
        %v1328 = vadd.f32 %v1327, 1e-12
        %v1329 = vrsqrt.pop %v1328
        %v1330 = vmul.f32 %v1322, %v1329
        %v1332 = vlaneseq
        %v1333 = vshrl.u32 %v1332, 7
        %v1334 = vsub.s32 0, %v1333
        %v1335 = vrot.slane %v1316, %v1334
        %v1337 = vmul.f32 %v1330, %v1335
        %v1339 = vlaneseq
        %v1340 = vshrl.u32 %v1339, 7
        %v1341 = vsub.s32 0, %v1340
        %v1342 = vrot.slane %v1317, %v1341
        %v1344 = vadd.f32 %v1337, %v1342
        %1345 = vst.msk [vmem:[%s554] sm:$0xff] %vm585, %v1344
        %v1346 = vld [vmem:[%s14] sm:$0xff]
        %v1347 = vld [vmem:[%s14 + $0x8] sm:$0xff]
        %v1348 = vld [vmem:[%s14 + $0x10] sm:$0xff]
        %v1349 = vld [vmem:[%s14 + $0x18] sm:$0xff]
        %v1350 = vpack.c.bf16 %v1344, %v1344
        %v1351 = vpack.c.bf16 %v1347, %v1346
        %v1352 = vpack.c.bf16 %v1349, %v1348
        %v1353 = vld [vmem:[%s15] sm:$0x1]
        %v1355 = vsel %vm585, %v1350, 0
        %1357 = vmatprep.subr.bf16.mxu0 0
        %1358 = vmatpush1.bf16.msra.mxu0 %v1351
        %1359 = vmatprep.subr.bf16.mxu0 0
        %1360 = vmatpush1.bf16.msra.mxu0 %v1352
        %1361 = vmatprep.subr.bf16.mxu0 0
        %1362 = vmatpush1.bf16.msra.mxu0 0
        %1363 = vmatprep.subr.bf16.mxu0 0
        %1364 = vmatpush1.bf16.msra.mxu0 0
        %1365 = vmatprep.subr.bf16.mxu0 0
        %1366 = vmatpush1.bf16.msra.mxu0 0
        %1367 = vmatprep.subr.bf16.mxu0 0
        %1368 = vmatpush1.bf16.msra.mxu0 0
        %1369 = vmatprep.subr.bf16.mxu0 0
        %1370 = vmatpush1.bf16.msra.mxu0 0
        %1371 = vmatprep.subr.bf16.mxu0 0
        %1372 = vmatpush1.bf16.msra.mxu0 0
        %1373 = vmatprep.subr.bf16.mxu0 0
        %1374 = vmatpush1.bf16.msra.mxu0 0
        %1375 = vmatprep.subr.bf16.mxu0 0
        %1376 = vmatpush1.bf16.msra.mxu0 0
        %1377 = vmatprep.subr.bf16.mxu0 0
        %1378 = vmatpush1.bf16.msra.mxu0 0
        %1379 = vmatprep.subr.bf16.mxu0 0
        %1380 = vmatpush1.bf16.msra.mxu0 0
        %1381 = vmatprep.subr.bf16.mxu0 0
        %1382 = vmatpush1.bf16.msra.mxu0 0
        %1383 = vmatprep.subr.bf16.mxu0 0
        %1384 = vmatpush1.bf16.msra.mxu0 0
        %1385 = vmatprep.subr.bf16.mxu0 0
        %1386 = vmatpush1.bf16.msra.mxu0 0
        %1387 = vmatprep.subr.bf16.mxu0 0
        %1388 = vmatpush1.bf16.msra.mxu0 0
        %1389 = vmatprep.mubr.bf16.mxu0 0
        %1390 = vmatmul.mubr.bf16.gmra.mrb[0].mxu0 %v1355
        %v1391 = vpop.f32.mrb[0].mxu0
        %v1392 = vadd.f32 %v1353, %v1391
        %v1393 = vpop.f32.mrb[0].mxu0
        %v1394 = vpop.f32.mrb[0].mxu0
        %v1395 = vpop.f32.mrb[0].mxu0
        %1396 = vdwg.mxu0
        %v1397 = vtanh.pop %v1392
        %vm1398 = vcmask 253952
        %1399 = vst.msk [vmem:[%s560] sm:$0x1] %vm1398, %v1397
        %s1400 = sand.u32 %s389, 1
        %s1401 = scalar_lea.sflag [#allocation3], %s1400
        %s1402 = sand.u32 %s389, 1
        %s1403 = smul.addr %s1402, 8
        %s1404 = scalar_lea.vmem [#allocation2], %s1403
        %s1405 = sand.u32 %s415, 1
        %s1406 = scalar_lea.sflag [#allocation5], %s1405
        %s1407 = sand.u32 %s415, 1
        %s1408 = scalar_lea.vmem [#allocation4], %s1407
        // Predicated region
        $region85: #{bert_forward.3} parent=83 // pred_check
          %p1409 = pneg %p399
        $region86: #{bert_forward.3} parent=83 // pred_check_branch
          %1411 = sbr.rel (%p1409) target = $region88
        $region87: #{bert_forward.3} parent=83 // pred_region
          %s1413 = ssub.s32 128, 128
          %1414 = vsyncadd %s1401, %s1413
          %s1415 = smul.addr %s35, 128
          %s1416 = scalar_lea.hbm %s16, %s1415
          %s1418 = sshll.u32 %s1404, 4
          %s1419 = int_to_ptr.vmem [resolvable:$true] %s1418
          %1421 = dma.vmem_to_hbm [thread:$0]  %s1419, 128, %s1416, %s1401
        $region88: #{bert_forward.3} parent=83 // pred_fallthru
          _
        // Predicated region
        $region89: #{bert_forward.3} parent=83 // pred_check
          %p1422 = pneg %p425
        $region90: #{bert_forward.3} parent=83 // pred_check_branch
          %1424 = sbr.rel (%p1422) target = $region92
        $region91: #{bert_forward.3} parent=83 // pred_region
          %s1426 = ssub.s32 16, 16
          %1427 = vsyncadd %s1406, %s1426
          %s1428 = smul.addr %s35, 16
          %s1429 = scalar_lea.hbm %s17, %s1428
          %s1431 = sshll.u32 %s1408, 4
          %s1432 = int_to_ptr.vmem [resolvable:$true] %s1431
          %1434 = dma.vmem_to_hbm [thread:$0]  %s1432, 16, %s1429, %s1406
        $region92: #{bert_forward.3} parent=83 // pred_fallthru
          _
      $region84: #{bert_forward.3} parent=5 // pred_fallthru
        _
      %p1435 = scmp.le.s32.totalorder 2, %s30
      // Predicated region
      $region93: #{bert_forward.3} parent=5 // pred_check
        %p1436 = pneg %p1435
      $region94: #{bert_forward.3} parent=5 // pred_check_branch
        %1438 = sbr.rel (%p1436) target = $region96
      $region95: #{bert_forward.3} parent=5 // pred_region
        %s1439 = ssub.s32 %s30, 2
        // Predicated region
        $region97: #{bert_forward.3} parent=95 // pred_check
          %p1440 = pneg %p405
        $region98: #{bert_forward.3} parent=95 // pred_check_branch
          %1442 = sbr.rel (%p1440) target = $region100
        $region99: #{bert_forward.3} parent=95 // pred_region
          %s1443 = sand.u32 %s390, 1
          %s1444 = scalar_lea.sflag [#allocation3], %s1443
          %s1445 = sand.u32 %s390, 1
          %s1446 = smul.addr %s1445, 8
          %s1447 = scalar_lea.vmem [#allocation2], %s1446
          %1448 = dma.done %s1444, 128
        $region100: #{bert_forward.3} parent=95 // pred_fallthru
          _
        // Predicated region
        $region101: #{bert_forward.3} parent=95 // pred_check
          %p1449 = pneg %p431
        $region102: #{bert_forward.3} parent=95 // pred_check_branch
          %1451 = sbr.rel (%p1449) target = $region104
        $region103: #{bert_forward.3} parent=95 // pred_region
          %s1452 = sand.u32 %s416, 1
          %s1453 = scalar_lea.sflag [#allocation5], %s1452
          %s1454 = sand.u32 %s416, 1
          %s1455 = scalar_lea.vmem [#allocation4], %s1454
          %1456 = dma.done %s1453, 16
        $region104: #{bert_forward.3} parent=95 // pred_fallthru
          _
      $region96: #{bert_forward.3} parent=5 // pred_fallthru
        _
    $region6: #{bert_forward.3} parent=1 // loop_footer
      %s34 = sadd.s32 1, %s30
    $region7: #{bert_forward.3} parent=1 // loop_footer_branch
      %29 = sbr.rel target = $region3
    $region8: #{bert_forward.3} parent=1 // loop_exit
      _
    %1457 = vsyncpa [#allocation3], 1
    %s1458 = scalar_lea.sflag [#allocation3], 1
    %1459 = vsyncpa %s1458, 1
    %1460 = vsyncpa [#allocation5], 1
    %s1461 = scalar_lea.sflag [#allocation5], 1
    %1462 = vsyncpa %s1461, 1

// kernel: bert_forward.2
$region0: #{bert_forward.2}
  #allocation0 [shape = 'u32[]', space=smem, size = 0x4, offset = 0x4, fixed_abs, tag = 'smem constant byte address 0x4 - core index']
  #allocation1 [shape = 'u32[144,128]{1,0:T(1,128)}', space=vmem, size = 0x12000, scoped, tag = 'internal scratch']
  %s0 = inlined_call_operand.vmem [shape: f32[2,8,32], index: 0, kind: input, shape index: {}]
  %s1 = inlined_call_operand.vmem [shape: f32[2,1,8], index: 1, kind: input, shape index: {}]
  %s2 = inlined_call_operand.vmem [shape: f32[1,32], index: 2, kind: input, shape index: {}]
  %s3 = inlined_call_operand.vmem [shape: f32[1,32], index: 3, kind: input, shape index: {}]
  %s4 = inlined_call_operand.vmem [shape: f32[32,96], index: 4, kind: input, shape index: {}]
  %s5 = inlined_call_operand.vmem [shape: f32[1,96], index: 5, kind: input, shape index: {}]
  %s6 = inlined_call_operand.vmem [shape: f32[32,32], index: 6, kind: input, shape index: {}]
  %s7 = inlined_call_operand.vmem [shape: f32[1,32], index: 7, kind: input, shape index: {}]
  %s8 = inlined_call_operand.vmem [shape: f32[1,32], index: 8, kind: input, shape index: {}]
  %s9 = inlined_call_operand.vmem [shape: f32[1,32], index: 9, kind: input, shape index: {}]
  %s10 = inlined_call_operand.vmem [shape: f32[32,64], index: 10, kind: input, shape index: {}]
  %s11 = inlined_call_operand.vmem [shape: f32[1,64], index: 11, kind: input, shape index: {}]
  %s12 = inlined_call_operand.vmem [shape: f32[64,32], index: 12, kind: input, shape index: {}]
  %s13 = inlined_call_operand.vmem [shape: f32[1,32], index: 13, kind: input, shape index: {}]
  %s14 = inlined_call_operand.vmem [shape: f32[1,32], index: 14, kind: input, shape index: {}]
  %s15 = inlined_call_operand.vmem [shape: f32[1,32], index: 15, kind: input, shape index: {}]
  %s16 = inlined_call_operand.vmem [shape: f32[2,8,32], index: 16, kind: output, shape index: {}]
  %s17 = sld [smem:[#allocation0]]
  $region97: #{bert_forward.2} parent=0
    _
  %s19 = ssub.s32 1, %s17
  %s20 = scalar_select 0, %s19, %s17
  loop: start=0, step=1, limit=4
  $region2: #{bert_forward.2} parent=0 // loop_pre_header
    _
  $region3: #{bert_forward.2} parent=0 // loop_header
    %s22 = sphi 0, %s26
    %p23 = scmp.ge.s32.totalorder %s22, 4
    %s32 = sphi 0, %s34
    %s35 = sphi 0, %s32
    %s36 = sphi 0, %s35
    %s52 = sphi 0, %s36
    %s58 = sphi 0, %s60
    %s61 = sphi 0, %s58
    %s62 = sphi 0, %s61
    %s78 = sphi 0, %s62
    %s82 = sphi 0, %s82
    %s84 = sphi 0, %s82
    %s85 = sphi 0, %s84
    %s99 = sphi 0, %s85
    %s103 = sphi 0, %s103
    %s105 = sphi 0, %s103
    %s106 = sphi 0, %s105
    %s120 = sphi 0, %s106
    %s124 = sphi 0, %s124
    %s126 = sphi 0, %s124
    %s127 = sphi 0, %s126
    %s141 = sphi 0, %s127
    %s145 = sphi 0, %s145
    %s147 = sphi 0, %s145
    %s148 = sphi 0, %s147
    %s162 = sphi 0, %s148
    %s166 = sphi 0, %s166
    %s168 = sphi 0, %s166
    %s169 = sphi 0, %s168
    %s183 = sphi 0, %s169
    %s187 = sphi 0, %s187
    %s189 = sphi 0, %s187
    %s190 = sphi 0, %s189
    %s204 = sphi 0, %s190
    %s208 = sphi 0, %s208
    %s210 = sphi 0, %s208
    %s211 = sphi 0, %s210
    %s225 = sphi 0, %s211
    %s229 = sphi 0, %s229
    %s231 = sphi 0, %s229
    %s232 = sphi 0, %s231
    %s246 = sphi 0, %s232
    %s250 = sphi 0, %s250
    %s252 = sphi 0, %s250
    %s253 = sphi 0, %s252
    %s267 = sphi 0, %s253
    %s271 = sphi 0, %s271
    %s273 = sphi 0, %s271
    %s274 = sphi 0, %s273
    %s288 = sphi 0, %s274
    %s292 = sphi 0, %s292
    %s294 = sphi 0, %s292
    %s295 = sphi 0, %s294
    %s309 = sphi 0, %s295
    %s313 = sphi 0, %s313
    %s315 = sphi 0, %s313
    %s316 = sphi 0, %s315
    %s330 = sphi 0, %s316
    %s334 = sphi 0, %s334
    %s336 = sphi 0, %s334
    %s337 = sphi 0, %s336
    %s351 = sphi 0, %s337
    %s355 = sphi 0, %s355
    %s357 = sphi 0, %s355
    %s358 = sphi 0, %s357
    %s372 = sphi 0, %s358
    %s378 = sphi 0, %s380
    %s381 = sphi 0, %s378
    %s382 = sphi 0, %s381
    %s398 = sphi 0, %s382
  $region4: #{bert_forward.2} parent=0 // loop_header_branch
    %25 = sbr.rel (%p23) target = $region8
  $region5: #{bert_forward.2} parent=0 // loop_body
    %s27 = ssub.s32 %s22, 1
    %s28 = ssub.s32 %s22, 2
    %s29 = sadd.s32 %s22, 1
    %s30 = ssub.s32 %s22, %s29
    %p31 = scmp.eq.s32.totalorder %s30, 0
    %s33 = sadd.s32 %s32, 1
    %s34 = scalar_select %p31, %s32, %s33
    %p37 = pneg %p31
    %p38 = scmp.eq.s32.totalorder %s22, 1
    %p39 = por %p37, %p38
    %p40 = scmp.ne.s32.totalorder %s32, %s35
    %p41 = scmp.eq.s32.totalorder %s22, 0
    %p42 = por %p40, %p41
    %p43 = scmp.ne.s32.totalorder %s32, %s35
    %p44 = scmp.eq.s32.totalorder %s27, 1
    %p45 = por %p43, %p44
    %p46 = scmp.ne.s32.totalorder %s35, %s36
    %p47 = scmp.eq.s32.totalorder %s27, 0
    %p48 = por %p46, %p47
    %p49 = scmp.ne.s32.totalorder %s35, %s36
    %p50 = scmp.eq.s32.totalorder %s28, 1
    %p51 = por %p49, %p50
    %p53 = scmp.ne.s32.totalorder %s36, %s52
    %p54 = scmp.eq.s32.totalorder %s28, 0
    %p55 = por %p53, %p54
    %s56 = ssub.s32 %s22, %s29
    %p57 = scmp.eq.s32.totalorder %s56, 0
    %s59 = sadd.s32 %s58, 1
    %s60 = scalar_select %p57, %s58, %s59
    %p63 = pneg %p57
    %p64 = scmp.eq.s32.totalorder %s22, 1
    %p65 = por %p63, %p64
    %p66 = scmp.ne.s32.totalorder %s58, %s61
    %p67 = scmp.eq.s32.totalorder %s22, 0
    %p68 = por %p66, %p67
    %p69 = scmp.ne.s32.totalorder %s58, %s61
    %p70 = scmp.eq.s32.totalorder %s27, 1
    %p71 = por %p69, %p70
    %p72 = scmp.ne.s32.totalorder %s61, %s62
    %p73 = scmp.eq.s32.totalorder %s27, 0
    %p74 = por %p72, %p73
    %p75 = scmp.ne.s32.totalorder %s61, %s62
    %p76 = scmp.eq.s32.totalorder %s28, 1
    %p77 = por %p75, %p76
    %p79 = scmp.ne.s32.totalorder %s62, %s78
    %p80 = scmp.eq.s32.totalorder %s28, 0
    %p81 = por %p79, %p80
    %s83 = sadd.s32 %s82, 1
    %p86 = scmp.eq.s32.totalorder %s22, 1
    %p87 = scmp.ne.s32.totalorder %s82, %s84
    %p88 = scmp.eq.s32.totalorder %s22, 0
    %p89 = por %p87, %p88
    %p90 = scmp.ne.s32.totalorder %s82, %s84
    %p91 = scmp.eq.s32.totalorder %s27, 1
    %p92 = por %p90, %p91
    %p93 = scmp.ne.s32.totalorder %s84, %s85
    %p94 = scmp.eq.s32.totalorder %s27, 0
    %p95 = por %p93, %p94
    %p96 = scmp.ne.s32.totalorder %s84, %s85
    %p97 = scmp.eq.s32.totalorder %s28, 1
    %p98 = por %p96, %p97
    %p100 = scmp.ne.s32.totalorder %s85, %s99
    %p101 = scmp.eq.s32.totalorder %s28, 0
    %p102 = por %p100, %p101
    %s104 = sadd.s32 %s103, 1
    %p107 = scmp.eq.s32.totalorder %s22, 1
    %p108 = scmp.ne.s32.totalorder %s103, %s105
    %p109 = scmp.eq.s32.totalorder %s22, 0
    %p110 = por %p108, %p109
    %p111 = scmp.ne.s32.totalorder %s103, %s105
    %p112 = scmp.eq.s32.totalorder %s27, 1
    %p113 = por %p111, %p112
    %p114 = scmp.ne.s32.totalorder %s105, %s106
    %p115 = scmp.eq.s32.totalorder %s27, 0
    %p116 = por %p114, %p115
    %p117 = scmp.ne.s32.totalorder %s105, %s106
    %p118 = scmp.eq.s32.totalorder %s28, 1
    %p119 = por %p117, %p118
    %p121 = scmp.ne.s32.totalorder %s106, %s120
    %p122 = scmp.eq.s32.totalorder %s28, 0
    %p123 = por %p121, %p122
    %s125 = sadd.s32 %s124, 1
    %p128 = scmp.eq.s32.totalorder %s22, 1
    %p129 = scmp.ne.s32.totalorder %s124, %s126
    %p130 = scmp.eq.s32.totalorder %s22, 0
    %p131 = por %p129, %p130
    %p132 = scmp.ne.s32.totalorder %s124, %s126
    %p133 = scmp.eq.s32.totalorder %s27, 1
    %p134 = por %p132, %p133
    %p135 = scmp.ne.s32.totalorder %s126, %s127
    %p136 = scmp.eq.s32.totalorder %s27, 0
    %p137 = por %p135, %p136
    %p138 = scmp.ne.s32.totalorder %s126, %s127
    %p139 = scmp.eq.s32.totalorder %s28, 1
    %p140 = por %p138, %p139
    %p142 = scmp.ne.s32.totalorder %s127, %s141
    %p143 = scmp.eq.s32.totalorder %s28, 0
    %p144 = por %p142, %p143
    %s146 = sadd.s32 %s145, 1
    %p149 = scmp.eq.s32.totalorder %s22, 1
    %p150 = scmp.ne.s32.totalorder %s145, %s147
    %p151 = scmp.eq.s32.totalorder %s22, 0
    %p152 = por %p150, %p151
    %p153 = scmp.ne.s32.totalorder %s145, %s147
    %p154 = scmp.eq.s32.totalorder %s27, 1
    %p155 = por %p153, %p154
    %p156 = scmp.ne.s32.totalorder %s147, %s148
    %p157 = scmp.eq.s32.totalorder %s27, 0
    %p158 = por %p156, %p157
    %p159 = scmp.ne.s32.totalorder %s147, %s148
    %p160 = scmp.eq.s32.totalorder %s28, 1
    %p161 = por %p159, %p160
    %p163 = scmp.ne.s32.totalorder %s148, %s162
    %p164 = scmp.eq.s32.totalorder %s28, 0
    %p165 = por %p163, %p164
    %s167 = sadd.s32 %s166, 1
    %p170 = scmp.eq.s32.totalorder %s22, 1
    %p171 = scmp.ne.s32.totalorder %s166, %s168
    %p172 = scmp.eq.s32.totalorder %s22, 0
    %p173 = por %p171, %p172
    %p174 = scmp.ne.s32.totalorder %s166, %s168
    %p175 = scmp.eq.s32.totalorder %s27, 1
    %p176 = por %p174, %p175
    %p177 = scmp.ne.s32.totalorder %s168, %s169
    %p178 = scmp.eq.s32.totalorder %s27, 0
    %p179 = por %p177, %p178
    %p180 = scmp.ne.s32.totalorder %s168, %s169
    %p181 = scmp.eq.s32.totalorder %s28, 1
    %p182 = por %p180, %p181
    %p184 = scmp.ne.s32.totalorder %s169, %s183
    %p185 = scmp.eq.s32.totalorder %s28, 0
    %p186 = por %p184, %p185
    %s188 = sadd.s32 %s187, 1
    %p191 = scmp.eq.s32.totalorder %s22, 1
    %p192 = scmp.ne.s32.totalorder %s187, %s189
    %p193 = scmp.eq.s32.totalorder %s22, 0
    %p194 = por %p192, %p193
    %p195 = scmp.ne.s32.totalorder %s187, %s189
    %p196 = scmp.eq.s32.totalorder %s27, 1
    %p197 = por %p195, %p196
    %p198 = scmp.ne.s32.totalorder %s189, %s190
    %p199 = scmp.eq.s32.totalorder %s27, 0
    %p200 = por %p198, %p199
    %p201 = scmp.ne.s32.totalorder %s189, %s190
    %p202 = scmp.eq.s32.totalorder %s28, 1
    %p203 = por %p201, %p202
    %p205 = scmp.ne.s32.totalorder %s190, %s204
    %p206 = scmp.eq.s32.totalorder %s28, 0
    %p207 = por %p205, %p206
    %s209 = sadd.s32 %s208, 1
    %p212 = scmp.eq.s32.totalorder %s22, 1
    %p213 = scmp.ne.s32.totalorder %s208, %s210
    %p214 = scmp.eq.s32.totalorder %s22, 0
    %p215 = por %p213, %p214
    %p216 = scmp.ne.s32.totalorder %s208, %s210
    %p217 = scmp.eq.s32.totalorder %s27, 1
    %p218 = por %p216, %p217
    %p219 = scmp.ne.s32.totalorder %s210, %s211
    %p220 = scmp.eq.s32.totalorder %s27, 0
    %p221 = por %p219, %p220
    %p222 = scmp.ne.s32.totalorder %s210, %s211
    %p223 = scmp.eq.s32.totalorder %s28, 1
    %p224 = por %p222, %p223
    %p226 = scmp.ne.s32.totalorder %s211, %s225
    %p227 = scmp.eq.s32.totalorder %s28, 0
    %p228 = por %p226, %p227
    %s230 = sadd.s32 %s229, 1
    %p233 = scmp.eq.s32.totalorder %s22, 1
    %p234 = scmp.ne.s32.totalorder %s229, %s231
    %p235 = scmp.eq.s32.totalorder %s22, 0
    %p236 = por %p234, %p235
    %p237 = scmp.ne.s32.totalorder %s229, %s231
    %p238 = scmp.eq.s32.totalorder %s27, 1
    %p239 = por %p237, %p238
    %p240 = scmp.ne.s32.totalorder %s231, %s232
    %p241 = scmp.eq.s32.totalorder %s27, 0
    %p242 = por %p240, %p241
    %p243 = scmp.ne.s32.totalorder %s231, %s232
    %p244 = scmp.eq.s32.totalorder %s28, 1
    %p245 = por %p243, %p244
    %p247 = scmp.ne.s32.totalorder %s232, %s246
    %p248 = scmp.eq.s32.totalorder %s28, 0
    %p249 = por %p247, %p248
    %s251 = sadd.s32 %s250, 1
    %p254 = scmp.eq.s32.totalorder %s22, 1
    %p255 = scmp.ne.s32.totalorder %s250, %s252
    %p256 = scmp.eq.s32.totalorder %s22, 0
    %p257 = por %p255, %p256
    %p258 = scmp.ne.s32.totalorder %s250, %s252
    %p259 = scmp.eq.s32.totalorder %s27, 1
    %p260 = por %p258, %p259
    %p261 = scmp.ne.s32.totalorder %s252, %s253
    %p262 = scmp.eq.s32.totalorder %s27, 0
    %p263 = por %p261, %p262
    %p264 = scmp.ne.s32.totalorder %s252, %s253
    %p265 = scmp.eq.s32.totalorder %s28, 1
    %p266 = por %p264, %p265
    %p268 = scmp.ne.s32.totalorder %s253, %s267
    %p269 = scmp.eq.s32.totalorder %s28, 0
    %p270 = por %p268, %p269
    %s272 = sadd.s32 %s271, 1
    %p275 = scmp.eq.s32.totalorder %s22, 1
    %p276 = scmp.ne.s32.totalorder %s271, %s273
    %p277 = scmp.eq.s32.totalorder %s22, 0
    %p278 = por %p276, %p277
    %p279 = scmp.ne.s32.totalorder %s271, %s273
    %p280 = scmp.eq.s32.totalorder %s27, 1
    %p281 = por %p279, %p280
    %p282 = scmp.ne.s32.totalorder %s273, %s274
    %p283 = scmp.eq.s32.totalorder %s27, 0
    %p284 = por %p282, %p283
    %p285 = scmp.ne.s32.totalorder %s273, %s274
    %p286 = scmp.eq.s32.totalorder %s28, 1
    %p287 = por %p285, %p286
    %p289 = scmp.ne.s32.totalorder %s274, %s288
    %p290 = scmp.eq.s32.totalorder %s28, 0
    %p291 = por %p289, %p290
    %s293 = sadd.s32 %s292, 1
    %p296 = scmp.eq.s32.totalorder %s22, 1
    %p297 = scmp.ne.s32.totalorder %s292, %s294
    %p298 = scmp.eq.s32.totalorder %s22, 0
    %p299 = por %p297, %p298
    %p300 = scmp.ne.s32.totalorder %s292, %s294
    %p301 = scmp.eq.s32.totalorder %s27, 1
    %p302 = por %p300, %p301
    %p303 = scmp.ne.s32.totalorder %s294, %s295
    %p304 = scmp.eq.s32.totalorder %s27, 0
    %p305 = por %p303, %p304
    %p306 = scmp.ne.s32.totalorder %s294, %s295
    %p307 = scmp.eq.s32.totalorder %s28, 1
    %p308 = por %p306, %p307
    %p310 = scmp.ne.s32.totalorder %s295, %s309
    %p311 = scmp.eq.s32.totalorder %s28, 0
    %p312 = por %p310, %p311
    %s314 = sadd.s32 %s313, 1
    %p317 = scmp.eq.s32.totalorder %s22, 1
    %p318 = scmp.ne.s32.totalorder %s313, %s315
    %p319 = scmp.eq.s32.totalorder %s22, 0
    %p320 = por %p318, %p319
    %p321 = scmp.ne.s32.totalorder %s313, %s315
    %p322 = scmp.eq.s32.totalorder %s27, 1
    %p323 = por %p321, %p322
    %p324 = scmp.ne.s32.totalorder %s315, %s316
    %p325 = scmp.eq.s32.totalorder %s27, 0
    %p326 = por %p324, %p325
    %p327 = scmp.ne.s32.totalorder %s315, %s316
    %p328 = scmp.eq.s32.totalorder %s28, 1
    %p329 = por %p327, %p328
    %p331 = scmp.ne.s32.totalorder %s316, %s330
    %p332 = scmp.eq.s32.totalorder %s28, 0
    %p333 = por %p331, %p332
    %s335 = sadd.s32 %s334, 1
    %p338 = scmp.eq.s32.totalorder %s22, 1
    %p339 = scmp.ne.s32.totalorder %s334, %s336
    %p340 = scmp.eq.s32.totalorder %s22, 0
    %p341 = por %p339, %p340
    %p342 = scmp.ne.s32.totalorder %s334, %s336
    %p343 = scmp.eq.s32.totalorder %s27, 1
    %p344 = por %p342, %p343
    %p345 = scmp.ne.s32.totalorder %s336, %s337
    %p346 = scmp.eq.s32.totalorder %s27, 0
    %p347 = por %p345, %p346
    %p348 = scmp.ne.s32.totalorder %s336, %s337
    %p349 = scmp.eq.s32.totalorder %s28, 1
    %p350 = por %p348, %p349
    %p352 = scmp.ne.s32.totalorder %s337, %s351
    %p353 = scmp.eq.s32.totalorder %s28, 0
    %p354 = por %p352, %p353
    %s356 = sadd.s32 %s355, 1
    %p359 = scmp.eq.s32.totalorder %s22, 1
    %p360 = scmp.ne.s32.totalorder %s355, %s357
    %p361 = scmp.eq.s32.totalorder %s22, 0
    %p362 = por %p360, %p361
    %p363 = scmp.ne.s32.totalorder %s355, %s357
    %p364 = scmp.eq.s32.totalorder %s27, 1
    %p365 = por %p363, %p364
    %p366 = scmp.ne.s32.totalorder %s357, %s358
    %p367 = scmp.eq.s32.totalorder %s27, 0
    %p368 = por %p366, %p367
    %p369 = scmp.ne.s32.totalorder %s357, %s358
    %p370 = scmp.eq.s32.totalorder %s28, 1
    %p371 = por %p369, %p370
    %p373 = scmp.ne.s32.totalorder %s358, %s372
    %p374 = scmp.eq.s32.totalorder %s28, 0
    %p375 = por %p373, %p374
    %s376 = ssub.s32 %s22, %s29
    %p377 = scmp.eq.s32.totalorder %s376, 0
    %s379 = sadd.s32 %s378, 1
    %s380 = scalar_select %p377, %s378, %s379
    %p383 = pneg %p377
    %p384 = scmp.eq.s32.totalorder %s22, 1
    %p385 = por %p383, %p384
    %p386 = scmp.ne.s32.totalorder %s378, %s381
    %p387 = scmp.eq.s32.totalorder %s22, 0
    %p388 = por %p386, %p387
    %p389 = scmp.ne.s32.totalorder %s378, %s381
    %p390 = scmp.eq.s32.totalorder %s27, 1
    %p391 = por %p389, %p390
    %p392 = scmp.ne.s32.totalorder %s381, %s382
    %p393 = scmp.eq.s32.totalorder %s27, 0
    %p394 = por %p392, %p393
    %p395 = scmp.ne.s32.totalorder %s381, %s382
    %p396 = scmp.eq.s32.totalorder %s28, 1
    %p397 = por %p395, %p396
    %p399 = scmp.ne.s32.totalorder %s382, %s398
    %p400 = scmp.eq.s32.totalorder %s28, 0
    %p401 = por %p399, %p400
    %p402 = scmp.le.s32.totalorder 1, %s22
    %p403 = scmp.lt.s32.totalorder %s22, 3
    %p404 = pnand %p402, %p403
    %p405 = pneg %p404
    // Predicated region
    $region9: #{bert_forward.2} parent=5 // pred_check
      _
    $region10: #{bert_forward.2} parent=5 // pred_check_branch
      %407 = sbr.rel (%p404) target = $region12
    $region11: #{bert_forward.2} parent=5 // pred_region
      %s408 = ssub.s32 %s22, 1
      // Predicated region
      $region13: #{bert_forward.2} parent=11 // pred_check
        %p409 = pneg %p95
      $region14: #{bert_forward.2} parent=11 // pred_check_branch
        %411 = sbr.rel (%p409) target = $region16
      $region15: #{bert_forward.2} parent=11 // pred_region
        _
      $region16: #{bert_forward.2} parent=11 // pred_fallthru
        _
      // Predicated region
      $region17: #{bert_forward.2} parent=11 // pred_check
        %p412 = pneg %p116
      $region18: #{bert_forward.2} parent=11 // pred_check_branch
        %414 = sbr.rel (%p412) target = $region20
      $region19: #{bert_forward.2} parent=11 // pred_region
        _
      $region20: #{bert_forward.2} parent=11 // pred_fallthru
        _
      // Predicated region
      $region21: #{bert_forward.2} parent=11 // pred_check
        %p415 = pneg %p137
      $region22: #{bert_forward.2} parent=11 // pred_check_branch
        %417 = sbr.rel (%p415) target = $region24
      $region23: #{bert_forward.2} parent=11 // pred_region
        _
      $region24: #{bert_forward.2} parent=11 // pred_fallthru
        _
      // Predicated region
      $region25: #{bert_forward.2} parent=11 // pred_check
        %p418 = pneg %p158
      $region26: #{bert_forward.2} parent=11 // pred_check_branch
        %420 = sbr.rel (%p418) target = $region28
      $region27: #{bert_forward.2} parent=11 // pred_region
        _
      $region28: #{bert_forward.2} parent=11 // pred_fallthru
        _
      // Predicated region
      $region29: #{bert_forward.2} parent=11 // pred_check
        %p421 = pneg %p179
      $region30: #{bert_forward.2} parent=11 // pred_check_branch
        %423 = sbr.rel (%p421) target = $region32
      $region31: #{bert_forward.2} parent=11 // pred_region
        _
      $region32: #{bert_forward.2} parent=11 // pred_fallthru
        _
      // Predicated region
      $region33: #{bert_forward.2} parent=11 // pred_check
        %p424 = pneg %p200
      $region34: #{bert_forward.2} parent=11 // pred_check_branch
        %426 = sbr.rel (%p424) target = $region36
      $region35: #{bert_forward.2} parent=11 // pred_region
        _
      $region36: #{bert_forward.2} parent=11 // pred_fallthru
        _
      // Predicated region
      $region37: #{bert_forward.2} parent=11 // pred_check
        %p427 = pneg %p221
      $region38: #{bert_forward.2} parent=11 // pred_check_branch
        %429 = sbr.rel (%p427) target = $region40
      $region39: #{bert_forward.2} parent=11 // pred_region
        _
      $region40: #{bert_forward.2} parent=11 // pred_fallthru
        _
      // Predicated region
      $region41: #{bert_forward.2} parent=11 // pred_check
        %p430 = pneg %p242
      $region42: #{bert_forward.2} parent=11 // pred_check_branch
        %432 = sbr.rel (%p430) target = $region44
      $region43: #{bert_forward.2} parent=11 // pred_region
        _
      $region44: #{bert_forward.2} parent=11 // pred_fallthru
        _
      // Predicated region
      $region45: #{bert_forward.2} parent=11 // pred_check
        %p433 = pneg %p263
      $region46: #{bert_forward.2} parent=11 // pred_check_branch
        %435 = sbr.rel (%p433) target = $region48
      $region47: #{bert_forward.2} parent=11 // pred_region
        _
      $region48: #{bert_forward.2} parent=11 // pred_fallthru
        _
      // Predicated region
      $region49: #{bert_forward.2} parent=11 // pred_check
        %p436 = pneg %p284
      $region50: #{bert_forward.2} parent=11 // pred_check_branch
        %438 = sbr.rel (%p436) target = $region52
      $region51: #{bert_forward.2} parent=11 // pred_region
        _
      $region52: #{bert_forward.2} parent=11 // pred_fallthru
        _
      // Predicated region
      $region53: #{bert_forward.2} parent=11 // pred_check
        %p439 = pneg %p305
      $region54: #{bert_forward.2} parent=11 // pred_check_branch
        %441 = sbr.rel (%p439) target = $region56
      $region55: #{bert_forward.2} parent=11 // pred_region
        _
      $region56: #{bert_forward.2} parent=11 // pred_fallthru
        _
      // Predicated region
      $region57: #{bert_forward.2} parent=11 // pred_check
        %p442 = pneg %p326
      $region58: #{bert_forward.2} parent=11 // pred_check_branch
        %444 = sbr.rel (%p442) target = $region60
      $region59: #{bert_forward.2} parent=11 // pred_region
        _
      $region60: #{bert_forward.2} parent=11 // pred_fallthru
        _
      // Predicated region
      $region61: #{bert_forward.2} parent=11 // pred_check
        %p445 = pneg %p347
      $region62: #{bert_forward.2} parent=11 // pred_check_branch
        %447 = sbr.rel (%p445) target = $region64
      $region63: #{bert_forward.2} parent=11 // pred_region
        _
      $region64: #{bert_forward.2} parent=11 // pred_fallthru
        _
      // Predicated region
      $region65: #{bert_forward.2} parent=11 // pred_check
        %p448 = pneg %p368
      $region66: #{bert_forward.2} parent=11 // pred_check_branch
        %450 = sbr.rel (%p448) target = $region68
      $region67: #{bert_forward.2} parent=11 // pred_region
        _
      $region68: #{bert_forward.2} parent=11 // pred_fallthru
        _
    $region12: #{bert_forward.2} parent=5 // pred_fallthru
      _
    %p451 = scmp.lt.s32.totalorder %s22, 2
    // Predicated region
    $region69: #{bert_forward.2} parent=5 // pred_check
      %p452 = pneg %p451
    $region70: #{bert_forward.2} parent=5 // pred_check_branch
      %454 = sbr.rel (%p452) target = $region72
    $region71: #{bert_forward.2} parent=5 // pred_region
      // Predicated region
      $region73: #{bert_forward.2} parent=71 // pred_check
        %p455 = pneg %p42
      $region74: #{bert_forward.2} parent=71 // pred_check_branch
        %457 = sbr.rel (%p455) target = $region76
      $region75: #{bert_forward.2} parent=71 // pred_region
        %p458 = scmp.lt.s32.totalorder %s22, 1
        %s459 = scalar_select %p458, %s22, 1
        %s460 = smul.addr %s459, 8
        %s461 = scalar_lea.vmem %s0, %s460
      $region76: #{bert_forward.2} parent=71 // pred_fallthru
        _
      // Predicated region
      $region77: #{bert_forward.2} parent=71 // pred_check
        %p462 = pneg %p68
      $region78: #{bert_forward.2} parent=71 // pred_check_branch
        %464 = sbr.rel (%p462) target = $region80
      $region79: #{bert_forward.2} parent=71 // pred_region
        %p465 = scmp.lt.s32.totalorder %s22, 1
        %s466 = scalar_select %p465, %s22, 1
        %s467 = scalar_lea.vmem %s1, %s466
      $region80: #{bert_forward.2} parent=71 // pred_fallthru
        _
    $region72: #{bert_forward.2} parent=5 // pred_fallthru
      _
    %p468 = scmp.le.s32.totalorder 1, %s22
    %p469 = scmp.lt.s32.totalorder %s22, 3
    %p470 = pnand %p468, %p469
    %p471 = pneg %p470
    // Predicated region
    $region81: #{bert_forward.2} parent=5 // pred_check
      _
    $region82: #{bert_forward.2} parent=5 // pred_check_branch
      %473 = sbr.rel (%p470) target = $region84
    $region83: #{bert_forward.2} parent=5 // pred_region
      %s474 = ssub.s32 %s22, 1
      %p475 = scmp.lt.s32.totalorder %s27, 1
      %s476 = scalar_select %p475, %s27, 1
      %s477 = smul.addr %s476, 8
      %s478 = scalar_lea.vmem %s0, %s477
      %p479 = pneg %p48
      %p480 = pneg %p45
      %p481 = scmp.lt.s32.totalorder %s27, 1
      %s482 = scalar_select %p481, %s27, 1
      %s483 = scalar_lea.vmem %s1, %s482
      %p484 = pneg %p74
      %p485 = pneg %p71
      %p486 = pneg %p95
      %p487 = pneg %p92
      %p488 = pneg %p116
      %p489 = pneg %p113
      %p490 = pneg %p137
      %p491 = pneg %p134
      %p492 = pneg %p158
      %p493 = pneg %p155
      %p494 = pneg %p179
      %p495 = pneg %p176
      %p496 = pneg %p200
      %p497 = pneg %p197
      %p498 = pneg %p221
      %p499 = pneg %p218
      %p500 = pneg %p242
      %p501 = pneg %p239
      %p502 = pneg %p263
      %p503 = pneg %p260
      %p504 = pneg %p284
      %p505 = pneg %p281
      %p506 = pneg %p305
      %p507 = pneg %p302
      %p508 = pneg %p326
      %p509 = pneg %p323
      %p510 = pneg %p347
      %p511 = pneg %p344
      %p512 = pneg %p368
      %p513 = pneg %p365
      %p514 = pneg %p394
      %p515 = pneg %p391
      %p516 = scmp.lt.s32.totalorder %s27, 1
      %s517 = scalar_select %p516, %s27, 1
      %s518 = smul.addr %s517, 8
      %s519 = scalar_lea.vmem %s16, %s518
      %p520 = scmp.lt.s32.totalorder %s27, 1
      %s521 = scalar_select %p520, %s27, 1
      %s522 = smul.addr %s521, 8
      %s523 = scalar_lea.vmem %s0, %s522
      %p524 = scmp.lt.s32.totalorder %s27, 1
      %s525 = scalar_select %p524, %s27, 1
      %s526 = scalar_lea.vmem %s1, %s525
      %p527 = scmp.lt.s32.totalorder %s27, 1
      %s528 = scalar_select %p527, %s27, 1
      %s529 = smul.addr %s528, 8
      %s530 = scalar_lea.vmem %s16, %s529
      %v532 = vld [vmem:[%s523] sm:$0xff]
      %v533 = vld [vmem:[%s2] sm:$0x1]
      %v534 = vld [vmem:[%s3] sm:$0x1]
      %vm535 = vcmask 261120
      %v536 = vsel %vm535, %v532, 0.0
      %537 = vadd.xlane.f32.xlu0 %v536
      %v538 = vpop.xlane.xlu0 %537
      %v539 = vrcp.pop 32.0
      %v540 = vmul.f32 %v538, %v539
      %v541 = vsub.f32 %v532, %v540
      %v542 = vmul.f32 %v541, %v541
      %v543 = vsel %vm535, %v542, 0.0
      %544 = vadd.xlane.f32.xlu0 %v543
      %v545 = vpop.xlane.xlu0 %544
      %v546 = vmul.f32 %v545, %v539
      %v547 = vadd.f32 %v546, 1e-12
      %v548 = vrsqrt.pop %v547
      %v549 = vmul.f32 %v541, %v548
      %v551 = vlaneseq
      %v552 = vshrl.u32 %v551, 7
      %v553 = vsub.s32 0, %v552
      %v554 = vrot.slane %v533, %v553
      %v556 = vmul.f32 %v549, %v554
      %v558 = vlaneseq
      %v559 = vshrl.u32 %v558, 7
      %v560 = vsub.s32 0, %v559
      %v561 = vrot.slane %v534, %v560
      %v563 = vadd.f32 %v556, %v561
      %v564 = vld [vmem:[%s526] sm:$0x1]
      %v565 = vld [vmem:[%s4] sm:$0xff]
      %v566 = vld [vmem:[%s4 + $0x8] sm:$0xff]
      %v567 = vld [vmem:[%s4 + $0x10] sm:$0xff]
      %v568 = vld [vmem:[%s4 + $0x18] sm:$0xff]
      %v569 = vpack.c.bf16 %v563, %v563
      %v570 = vpack.c.bf16 %v566, %v565
      %v571 = vpack.c.bf16 %v568, %v567
      %v572 = vld [vmem:[%s5] sm:$0x1]
      %v574 = vlaneseq
      %v575 = vshrl.u32 %v574, 7
      %v576 = vsub.s32 0, %v575
      %v577 = vrot.slane %v572, %v576
      %v580 = vsel %vm535, %v569, 0
      %582 = vmatprep.subr.bf16.mxu0 0
      %583 = vmatpush1.bf16.msra.mxu0 %v570
      %584 = vmatprep.subr.bf16.mxu0 0
      %585 = vmatpush1.bf16.msra.mxu0 %v571
      %586 = vmatprep.subr.bf16.mxu0 0
      %587 = vmatpush1.bf16.msra.mxu0 0
      %588 = vmatprep.subr.bf16.mxu0 0
      %589 = vmatpush1.bf16.msra.mxu0 0
      %590 = vmatprep.subr.bf16.mxu0 0
      %591 = vmatpush1.bf16.msra.mxu0 0
      %592 = vmatprep.subr.bf16.mxu0 0
      %593 = vmatpush1.bf16.msra.mxu0 0
      %594 = vmatprep.subr.bf16.mxu0 0
      %595 = vmatpush1.bf16.msra.mxu0 0
      %596 = vmatprep.subr.bf16.mxu0 0
      %597 = vmatpush1.bf16.msra.mxu0 0
      %598 = vmatprep.subr.bf16.mxu0 0
      %599 = vmatpush1.bf16.msra.mxu0 0
      %600 = vmatprep.subr.bf16.mxu0 0
      %601 = vmatpush1.bf16.msra.mxu0 0
      %602 = vmatprep.subr.bf16.mxu0 0
      %603 = vmatpush1.bf16.msra.mxu0 0
      %604 = vmatprep.subr.bf16.mxu0 0
      %605 = vmatpush1.bf16.msra.mxu0 0
      %606 = vmatprep.subr.bf16.mxu0 0
      %607 = vmatpush1.bf16.msra.mxu0 0
      %608 = vmatprep.subr.bf16.mxu0 0
      %609 = vmatpush1.bf16.msra.mxu0 0
      %610 = vmatprep.subr.bf16.mxu0 0
      %611 = vmatpush1.bf16.msra.mxu0 0
      %612 = vmatprep.subr.bf16.mxu0 0
      %613 = vmatpush1.bf16.msra.mxu0 0
      %614 = vmatprep.mubr.bf16.mxu0 0
      %615 = vmatmul.mubr.bf16.gmra.mrb[0].mxu0 %v580
      %v616 = vpop.f32.mrb[0].mxu0
      %v617 = vadd.f32 %v577, %v616
      %v618 = vpop.f32.mrb[0].mxu0
      %v619 = vpop.f32.mrb[0].mxu0
      %v620 = vpop.f32.mrb[0].mxu0
      %621 = vdwg.mxu0
      %v622 = vmul.f32 %v617, 0.35355338
      %v623 = vpack.c.bf16 %v622, %v622
      %v624 = vpack.c.bf16 %v617, %v617
      %v626 = vlaneseq
      %v627 = vshrl.u32 %v626, 7
      %v628 = vsub.s32 0, %v627
      %v629 = vrot.slane %v564, %v628
      %632 = vrot.lane.b32.xlu0 %v624, 96
      %v633 = vpop.permute.xlu0 %632
      %vm634 = vcmask 64512
      %v636 = vsel %vm634, %v623, 0
      %v639 = vsel %vm634, %v633, 0
      %641 = vmatprep.subr.bf16.mxu0 0
      %642 = vmatpush1.bf16.xpose.msra.mxu0 %v639
      %643 = vmatprep.subr.bf16.mxu0 0
      %644 = vmatpush1.bf16.xpose.msra.mxu0 0
      %645 = vmatprep.subr.bf16.mxu0 0
      %646 = vmatpush1.bf16.xpose.msra.mxu0 0
      %647 = vmatprep.subr.bf16.mxu0 0
      %648 = vmatpush1.bf16.xpose.msra.mxu0 0
      %649 = vmatprep.subr.bf16.mxu0 0
      %650 = vmatpush1.bf16.xpose.msra.mxu0 0
      %651 = vmatprep.subr.bf16.mxu0 0
      %652 = vmatpush1.bf16.xpose.msra.mxu0 0
      %653 = vmatprep.subr.bf16.mxu0 0
      %654 = vmatpush1.bf16.xpose.msra.mxu0 0
      %655 = vmatprep.subr.bf16.mxu0 0
      %656 = vmatpush1.bf16.xpose.msra.mxu0 0
      %657 = vmatprep.subr.bf16.mxu0 0
      %658 = vmatpush1.bf16.xpose.msra.mxu0 0
      %659 = vmatprep.subr.bf16.mxu0 0
      %660 = vmatpush1.bf16.xpose.msra.mxu0 0
      %661 = vmatprep.subr.bf16.mxu0 0
      %662 = vmatpush1.bf16.xpose.msra.mxu0 0
      %663 = vmatprep.subr.bf16.mxu0 0
      %664 = vmatpush1.bf16.xpose.msra.mxu0 0
      %665 = vmatprep.subr.bf16.mxu0 0
      %666 = vmatpush1.bf16.xpose.msra.mxu0 0
      %667 = vmatprep.subr.bf16.mxu0 0
      %668 = vmatpush1.bf16.xpose.msra.mxu0 0
      %669 = vmatprep.subr.bf16.mxu0 0
      %670 = vmatpush1.bf16.xpose.msra.mxu0 0
      %671 = vmatprep.subr.bf16.mxu0 0
      %672 = vmatpush1.bf16.xpose.msra.mxu0 0
      %673 = vmatprep.mubr.bf16.mxu0 0
      %674 = vmatmul.mubr.bf16.gmra.mrb[0].mxu0 %v636
      %v675 = vpop.f32.mrb[0].mxu0
      %v676 = vadd.f32 %v629, %v675
      %v677 = vpop.f32.mrb[0].mxu0
      %v678 = vpop.f32.mrb[0].mxu0
      %v679 = vpop.f32.mrb[0].mxu0
      %680 = vdwg.mxu0
      %v681 = vsel %vm634, %v676, -inf
      %682 = vmax.xlane.f32.xlu0 %v681
      %v683 = vpop.xlane.xlu0 %682
      %v684 = vsub.f32 %v676, %v683
      %v685 = vmul.f32 %v684, 1.442695
      %v686 = vpow.pop %v685
      %v687 = vsel %vm634, %v686, 0.0
      %688 = vadd.xlane.f32.xlu0 %v687
      %v689 = vpop.xlane.xlu0 %688
      %v690 = vrcp.pop %v689
      %v691 = vmul.f32 %v686, %v690
      %v692 = vpack.c.bf16 %v691, %v691
      %693 = vrot.lane.b32.xlu0 %v624, 64
      %v694 = vpop.permute.xlu0 %693
      %v696 = vsel %vm634, %v692, 0
      %vm698 = vcmask 1043456
      %v700 = vsel %vm698, %v694, 0
      %702 = vmatprep.subr.bf16.mxu0 0
      %703 = vmatpush1.bf16.msra.mxu0 %v700
      %704 = vmatprep.subr.bf16.mxu0 0
      %705 = vmatpush1.bf16.msra.mxu0 0
      %706 = vmatprep.subr.bf16.mxu0 0
      %707 = vmatpush1.bf16.msra.mxu0 0
      %708 = vmatprep.subr.bf16.mxu0 0
      %709 = vmatpush1.bf16.msra.mxu0 0
      %710 = vmatprep.subr.bf16.mxu0 0
      %711 = vmatpush1.bf16.msra.mxu0 0
      %712 = vmatprep.subr.bf16.mxu0 0
      %713 = vmatpush1.bf16.msra.mxu0 0
      %714 = vmatprep.subr.bf16.mxu0 0
      %715 = vmatpush1.bf16.msra.mxu0 0
      %716 = vmatprep.subr.bf16.mxu0 0
      %717 = vmatpush1.bf16.msra.mxu0 0
      %718 = vmatprep.subr.bf16.mxu0 0
      %719 = vmatpush1.bf16.msra.mxu0 0
      %720 = vmatprep.subr.bf16.mxu0 0
      %721 = vmatpush1.bf16.msra.mxu0 0
      %722 = vmatprep.subr.bf16.mxu0 0
      %723 = vmatpush1.bf16.msra.mxu0 0
      %724 = vmatprep.subr.bf16.mxu0 0
      %725 = vmatpush1.bf16.msra.mxu0 0
      %726 = vmatprep.subr.bf16.mxu0 0
      %727 = vmatpush1.bf16.msra.mxu0 0
      %728 = vmatprep.subr.bf16.mxu0 0
      %729 = vmatpush1.bf16.msra.mxu0 0
      %730 = vmatprep.subr.bf16.mxu0 0
      %731 = vmatpush1.bf16.msra.mxu0 0
      %732 = vmatprep.subr.bf16.mxu0 0
      %733 = vmatpush1.bf16.msra.mxu0 0
      %734 = vmatprep.mubr.bf16.mxu0 0
      %735 = vmatmul.mubr.bf16.gmra.mrb[0].mxu0 %v696
      %v736 = vpop.f32.mrb[0].mxu0
      %v737 = vadd.f32 0.0, %v736
      %v738 = vpop.f32.mrb[0].mxu0
      %v739 = vpop.f32.mrb[0].mxu0
      %v740 = vpop.f32.mrb[0].mxu0
      %741 = vdwg.mxu0
      %743 = vrot.lane.b32.xlu0 %v623, 120
      %v744 = vpop.permute.xlu0 %743
      %745 = vrot.lane.b32.xlu0 %v624, 88
      %v746 = vpop.permute.xlu0 %745
      %v748 = vsel %vm634, %v744, 0
      %v751 = vsel %vm634, %v746, 0
      %753 = vmatprep.subr.bf16.mxu0 0
      %754 = vmatpush1.bf16.xpose.msra.mxu0 %v751
      %755 = vmatprep.subr.bf16.mxu0 0
      %756 = vmatpush1.bf16.xpose.msra.mxu0 0
      %757 = vmatprep.subr.bf16.mxu0 0
      %758 = vmatpush1.bf16.xpose.msra.mxu0 0
      %759 = vmatprep.subr.bf16.mxu0 0
      %760 = vmatpush1.bf16.xpose.msra.mxu0 0
      %761 = vmatprep.subr.bf16.mxu0 0
      %762 = vmatpush1.bf16.xpose.msra.mxu0 0
      %763 = vmatprep.subr.bf16.mxu0 0
      %764 = vmatpush1.bf16.xpose.msra.mxu0 0
      %765 = vmatprep.subr.bf16.mxu0 0
      %766 = vmatpush1.bf16.xpose.msra.mxu0 0
      %767 = vmatprep.subr.bf16.mxu0 0
      %768 = vmatpush1.bf16.xpose.msra.mxu0 0
      %769 = vmatprep.subr.bf16.mxu0 0
      %770 = vmatpush1.bf16.xpose.msra.mxu0 0
      %771 = vmatprep.subr.bf16.mxu0 0
      %772 = vmatpush1.bf16.xpose.msra.mxu0 0
      %773 = vmatprep.subr.bf16.mxu0 0
      %774 = vmatpush1.bf16.xpose.msra.mxu0 0
      %775 = vmatprep.subr.bf16.mxu0 0
      %776 = vmatpush1.bf16.xpose.msra.mxu0 0
      %777 = vmatprep.subr.bf16.mxu0 0
      %778 = vmatpush1.bf16.xpose.msra.mxu0 0
      %779 = vmatprep.subr.bf16.mxu0 0
      %780 = vmatpush1.bf16.xpose.msra.mxu0 0
      %781 = vmatprep.subr.bf16.mxu0 0
      %782 = vmatpush1.bf16.xpose.msra.mxu0 0
      %783 = vmatprep.subr.bf16.mxu0 0
      %784 = vmatpush1.bf16.xpose.msra.mxu0 0
      %785 = vmatprep.mubr.bf16.mxu0 0
      %786 = vmatmul.mubr.bf16.gmra.mrb[0].mxu0 %v748
      %v787 = vpop.f32.mrb[0].mxu0
      %v788 = vadd.f32 %v629, %v787
      %v789 = vpop.f32.mrb[0].mxu0
      %v790 = vpop.f32.mrb[0].mxu0
      %v791 = vpop.f32.mrb[0].mxu0
      %792 = vdwg.mxu0
      %v793 = vsel %vm634, %v788, -inf
      %794 = vmax.xlane.f32.xlu0 %v793
      %v795 = vpop.xlane.xlu0 %794
      %v796 = vsub.f32 %v788, %v795
      %v797 = vmul.f32 %v796, 1.442695
      %v798 = vpow.pop %v797
      %v799 = vsel %vm634, %v798, 0.0
      %800 = vadd.xlane.f32.xlu0 %v799
      %v801 = vpop.xlane.xlu0 %800
      %v802 = vrcp.pop %v801
      %v803 = vmul.f32 %v798, %v802
      %v804 = vpack.c.bf16 %v803, %v803
      %805 = vrot.lane.b32.xlu0 %v624, 56
      %v806 = vpop.permute.xlu0 %805
      %v808 = vsel %vm634, %v804, 0
      %v811 = vsel %vm698, %v806, 0
      %813 = vmatprep.subr.bf16.mxu0 0
      %814 = vmatpush1.bf16.msra.mxu0 %v811
      %815 = vmatprep.subr.bf16.mxu0 0
      %816 = vmatpush1.bf16.msra.mxu0 0
      %817 = vmatprep.subr.bf16.mxu0 0
      %818 = vmatpush1.bf16.msra.mxu0 0
      %819 = vmatprep.subr.bf16.mxu0 0
      %820 = vmatpush1.bf16.msra.mxu0 0
      %821 = vmatprep.subr.bf16.mxu0 0
      %822 = vmatpush1.bf16.msra.mxu0 0
      %823 = vmatprep.subr.bf16.mxu0 0
      %824 = vmatpush1.bf16.msra.mxu0 0
      %825 = vmatprep.subr.bf16.mxu0 0
      %826 = vmatpush1.bf16.msra.mxu0 0
      %827 = vmatprep.subr.bf16.mxu0 0
      %828 = vmatpush1.bf16.msra.mxu0 0
      %829 = vmatprep.subr.bf16.mxu0 0
      %830 = vmatpush1.bf16.msra.mxu0 0
      %831 = vmatprep.subr.bf16.mxu0 0
      %832 = vmatpush1.bf16.msra.mxu0 0
      %833 = vmatprep.subr.bf16.mxu0 0
      %834 = vmatpush1.bf16.msra.mxu0 0
      %835 = vmatprep.subr.bf16.mxu0 0
      %836 = vmatpush1.bf16.msra.mxu0 0
      %837 = vmatprep.subr.bf16.mxu0 0
      %838 = vmatpush1.bf16.msra.mxu0 0
      %839 = vmatprep.subr.bf16.mxu0 0
      %840 = vmatpush1.bf16.msra.mxu0 0
      %841 = vmatprep.subr.bf16.mxu0 0
      %842 = vmatpush1.bf16.msra.mxu0 0
      %843 = vmatprep.subr.bf16.mxu0 0
      %844 = vmatpush1.bf16.msra.mxu0 0
      %845 = vmatprep.mubr.bf16.mxu0 0
      %846 = vmatmul.mubr.bf16.gmra.mrb[0].mxu0 %v808
      %v847 = vpop.f32.mrb[0].mxu0
      %v848 = vadd.f32 0.0, %v847
      %v849 = vpop.f32.mrb[0].mxu0
      %v850 = vpop.f32.mrb[0].mxu0
      %v851 = vpop.f32.mrb[0].mxu0
      %852 = vdwg.mxu0
      %853 = vrot.lane.b32.xlu0 %v623, 112
      %v854 = vpop.permute.xlu0 %853
      %855 = vrot.lane.b32.xlu0 %v624, 80
      %v856 = vpop.permute.xlu0 %855
      %v858 = vsel %vm634, %v854, 0
      %v861 = vsel %vm634, %v856, 0
      %863 = vmatprep.subr.bf16.mxu0 0
      %864 = vmatpush1.bf16.xpose.msra.mxu0 %v861
      %865 = vmatprep.subr.bf16.mxu0 0
      %866 = vmatpush1.bf16.xpose.msra.mxu0 0
      %867 = vmatprep.subr.bf16.mxu0 0
      %868 = vmatpush1.bf16.xpose.msra.mxu0 0
      %869 = vmatprep.subr.bf16.mxu0 0
      %870 = vmatpush1.bf16.xpose.msra.mxu0 0
      %871 = vmatprep.subr.bf16.mxu0 0
      %872 = vmatpush1.bf16.xpose.msra.mxu0 0
      %873 = vmatprep.subr.bf16.mxu0 0
      %874 = vmatpush1.bf16.xpose.msra.mxu0 0
      %875 = vmatprep.subr.bf16.mxu0 0
      %876 = vmatpush1.bf16.xpose.msra.mxu0 0
      %877 = vmatprep.subr.bf16.mxu0 0
      %878 = vmatpush1.bf16.xpose.msra.mxu0 0
      %879 = vmatprep.subr.bf16.mxu0 0
      %880 = vmatpush1.bf16.xpose.msra.mxu0 0
      %881 = vmatprep.subr.bf16.mxu0 0
      %882 = vmatpush1.bf16.xpose.msra.mxu0 0
      %883 = vmatprep.subr.bf16.mxu0 0
      %884 = vmatpush1.bf16.xpose.msra.mxu0 0
      %885 = vmatprep.subr.bf16.mxu0 0
      %886 = vmatpush1.bf16.xpose.msra.mxu0 0
      %887 = vmatprep.subr.bf16.mxu0 0
      %888 = vmatpush1.bf16.xpose.msra.mxu0 0
      %889 = vmatprep.subr.bf16.mxu0 0
      %890 = vmatpush1.bf16.xpose.msra.mxu0 0
      %891 = vmatprep.subr.bf16.mxu0 0
      %892 = vmatpush1.bf16.xpose.msra.mxu0 0
      %893 = vmatprep.subr.bf16.mxu0 0
      %894 = vmatpush1.bf16.xpose.msra.mxu0 0
      %895 = vmatprep.mubr.bf16.mxu0 0
      %896 = vmatmul.mubr.bf16.gmra.mrb[0].mxu0 %v858
      %v897 = vpop.f32.mrb[0].mxu0
      %v898 = vadd.f32 %v629, %v897
      %v899 = vpop.f32.mrb[0].mxu0
      %v900 = vpop.f32.mrb[0].mxu0
      %v901 = vpop.f32.mrb[0].mxu0
      %902 = vdwg.mxu0
      %v903 = vsel %vm634, %v898, -inf
      %904 = vmax.xlane.f32.xlu0 %v903
      %v905 = vpop.xlane.xlu0 %904
      %v906 = vsub.f32 %v898, %v905
      %v907 = vmul.f32 %v906, 1.442695
      %v908 = vpow.pop %v907
      %v909 = vsel %vm634, %v908, 0.0
      %910 = vadd.xlane.f32.xlu0 %v909
      %v911 = vpop.xlane.xlu0 %910
      %v912 = vrcp.pop %v911
      %v913 = vmul.f32 %v908, %v912
      %v914 = vpack.c.bf16 %v913, %v913
      %915 = vrot.lane.b32.xlu0 %v624, 48
      %v916 = vpop.permute.xlu0 %915
      %v918 = vsel %vm634, %v914, 0
      %v921 = vsel %vm698, %v916, 0
      %923 = vmatprep.subr.bf16.mxu0 0
      %924 = vmatpush1.bf16.msra.mxu0 %v921
      %925 = vmatprep.subr.bf16.mxu0 0
      %926 = vmatpush1.bf16.msra.mxu0 0
      %927 = vmatprep.subr.bf16.mxu0 0
      %928 = vmatpush1.bf16.msra.mxu0 0
      %929 = vmatprep.subr.bf16.mxu0 0
      %930 = vmatpush1.bf16.msra.mxu0 0
      %931 = vmatprep.subr.bf16.mxu0 0
      %932 = vmatpush1.bf16.msra.mxu0 0
      %933 = vmatprep.subr.bf16.mxu0 0
      %934 = vmatpush1.bf16.msra.mxu0 0
      %935 = vmatprep.subr.bf16.mxu0 0
      %936 = vmatpush1.bf16.msra.mxu0 0
      %937 = vmatprep.subr.bf16.mxu0 0
      %938 = vmatpush1.bf16.msra.mxu0 0
      %939 = vmatprep.subr.bf16.mxu0 0
      %940 = vmatpush1.bf16.msra.mxu0 0
      %941 = vmatprep.subr.bf16.mxu0 0
      %942 = vmatpush1.bf16.msra.mxu0 0
      %943 = vmatprep.subr.bf16.mxu0 0
      %944 = vmatpush1.bf16.msra.mxu0 0
      %945 = vmatprep.subr.bf16.mxu0 0
      %946 = vmatpush1.bf16.msra.mxu0 0
      %947 = vmatprep.subr.bf16.mxu0 0
      %948 = vmatpush1.bf16.msra.mxu0 0
      %949 = vmatprep.subr.bf16.mxu0 0
      %950 = vmatpush1.bf16.msra.mxu0 0
      %951 = vmatprep.subr.bf16.mxu0 0
      %952 = vmatpush1.bf16.msra.mxu0 0
      %953 = vmatprep.subr.bf16.mxu0 0
      %954 = vmatpush1.bf16.msra.mxu0 0
      %955 = vmatprep.mubr.bf16.mxu0 0
      %956 = vmatmul.mubr.bf16.gmra.mrb[0].mxu0 %v918
      %v957 = vpop.f32.mrb[0].mxu0
      %v958 = vadd.f32 0.0, %v957
      %v959 = vpop.f32.mrb[0].mxu0
      %v960 = vpop.f32.mrb[0].mxu0
      %v961 = vpop.f32.mrb[0].mxu0
      %962 = vdwg.mxu0
      %963 = vrot.lane.b32.xlu0 %v623, 104
      %v964 = vpop.permute.xlu0 %963
      %965 = vrot.lane.b32.xlu0 %v624, 72
      %v966 = vpop.permute.xlu0 %965
      %v968 = vsel %vm634, %v964, 0
      %v971 = vsel %vm634, %v966, 0
      %973 = vmatprep.subr.bf16.mxu0 0
      %974 = vmatpush1.bf16.xpose.msra.mxu0 %v971
      %975 = vmatprep.subr.bf16.mxu0 0
      %976 = vmatpush1.bf16.xpose.msra.mxu0 0
      %977 = vmatprep.subr.bf16.mxu0 0
      %978 = vmatpush1.bf16.xpose.msra.mxu0 0
      %979 = vmatprep.subr.bf16.mxu0 0
      %980 = vmatpush1.bf16.xpose.msra.mxu0 0
      %981 = vmatprep.subr.bf16.mxu0 0
      %982 = vmatpush1.bf16.xpose.msra.mxu0 0
      %983 = vmatprep.subr.bf16.mxu0 0
      %984 = vmatpush1.bf16.xpose.msra.mxu0 0
      %985 = vmatprep.subr.bf16.mxu0 0
      %986 = vmatpush1.bf16.xpose.msra.mxu0 0
      %987 = vmatprep.subr.bf16.mxu0 0
      %988 = vmatpush1.bf16.xpose.msra.mxu0 0
      %989 = vmatprep.subr.bf16.mxu0 0
      %990 = vmatpush1.bf16.xpose.msra.mxu0 0
      %991 = vmatprep.subr.bf16.mxu0 0
      %992 = vmatpush1.bf16.xpose.msra.mxu0 0
      %993 = vmatprep.subr.bf16.mxu0 0
      %994 = vmatpush1.bf16.xpose.msra.mxu0 0
      %995 = vmatprep.subr.bf16.mxu0 0
      %996 = vmatpush1.bf16.xpose.msra.mxu0 0
      %997 = vmatprep.subr.bf16.mxu0 0
      %998 = vmatpush1.bf16.xpose.msra.mxu0 0
      %999 = vmatprep.subr.bf16.mxu0 0
      %1000 = vmatpush1.bf16.xpose.msra.mxu0 0
      %1001 = vmatprep.subr.bf16.mxu0 0
      %1002 = vmatpush1.bf16.xpose.msra.mxu0 0
      %1003 = vmatprep.subr.bf16.mxu0 0
      %1004 = vmatpush1.bf16.xpose.msra.mxu0 0
      %1005 = vmatprep.mubr.bf16.mxu0 0
      %1006 = vmatmul.mubr.bf16.gmra.mrb[0].mxu0 %v968
      %v1007 = vpop.f32.mrb[0].mxu0
      %v1008 = vadd.f32 %v629, %v1007
      %v1009 = vpop.f32.mrb[0].mxu0
      %v1010 = vpop.f32.mrb[0].mxu0
      %v1011 = vpop.f32.mrb[0].mxu0
      %1012 = vdwg.mxu0
      %v1013 = vsel %vm634, %v1008, -inf
      %1014 = vmax.xlane.f32.xlu0 %v1013
      %v1015 = vpop.xlane.xlu0 %1014
      %v1016 = vsub.f32 %v1008, %v1015
      %v1017 = vmul.f32 %v1016, 1.442695
      %v1018 = vpow.pop %v1017
      %v1019 = vsel %vm634, %v1018, 0.0
      %1020 = vadd.xlane.f32.xlu0 %v1019
      %v1021 = vpop.xlane.xlu0 %1020
      %v1022 = vrcp.pop %v1021
      %v1023 = vmul.f32 %v1018, %v1022
      %v1024 = vpack.c.bf16 %v1023, %v1023
      %1025 = vrot.lane.b32.xlu0 %v624, 40
      %v1026 = vpop.permute.xlu0 %1025
      %v1028 = vsel %vm634, %v1024, 0
      %v1031 = vsel %vm698, %v1026, 0
      %1033 = vmatprep.subr.bf16.mxu0 0
      %1034 = vmatpush1.bf16.msra.mxu0 %v1031
      %1035 = vmatprep.subr.bf16.mxu0 0
      %1036 = vmatpush1.bf16.msra.mxu0 0
      %1037 = vmatprep.subr.bf16.mxu0 0
      %1038 = vmatpush1.bf16.msra.mxu0 0
      %1039 = vmatprep.subr.bf16.mxu0 0
      %1040 = vmatpush1.bf16.msra.mxu0 0
      %1041 = vmatprep.subr.bf16.mxu0 0
      %1042 = vmatpush1.bf16.msra.mxu0 0
      %1043 = vmatprep.subr.bf16.mxu0 0
      %1044 = vmatpush1.bf16.msra.mxu0 0
      %1045 = vmatprep.subr.bf16.mxu0 0
      %1046 = vmatpush1.bf16.msra.mxu0 0
      %1047 = vmatprep.subr.bf16.mxu0 0
      %1048 = vmatpush1.bf16.msra.mxu0 0
      %1049 = vmatprep.subr.bf16.mxu0 0
      %1050 = vmatpush1.bf16.msra.mxu0 0
      %1051 = vmatprep.subr.bf16.mxu0 0
      %1052 = vmatpush1.bf16.msra.mxu0 0
      %1053 = vmatprep.subr.bf16.mxu0 0
      %1054 = vmatpush1.bf16.msra.mxu0 0
      %1055 = vmatprep.subr.bf16.mxu0 0
      %1056 = vmatpush1.bf16.msra.mxu0 0
      %1057 = vmatprep.subr.bf16.mxu0 0
      %1058 = vmatpush1.bf16.msra.mxu0 0
      %1059 = vmatprep.subr.bf16.mxu0 0
      %1060 = vmatpush1.bf16.msra.mxu0 0
      %1061 = vmatprep.subr.bf16.mxu0 0
      %1062 = vmatpush1.bf16.msra.mxu0 0
      %1063 = vmatprep.subr.bf16.mxu0 0
      %1064 = vmatpush1.bf16.msra.mxu0 0
      %1065 = vmatprep.mubr.bf16.mxu0 0
      %1066 = vmatmul.mubr.bf16.gmra.mrb[0].mxu0 %v1028
      %v1067 = vpop.f32.mrb[0].mxu0
      %v1068 = vadd.f32 0.0, %v1067
      %v1069 = vpop.f32.mrb[0].mxu0
      %v1070 = vpop.f32.mrb[0].mxu0
      %v1071 = vpop.f32.mrb[0].mxu0
      %1072 = vdwg.mxu0
      %1074 = vrot.lane.b32.xlu0 %v848, 8
      %v1075 = vpop.permute.xlu0 %1074
      %1078 = vrot.lane.b32.xlu0 %v958, 16
      %v1079 = vpop.permute.xlu0 %1078
      %1082 = vrot.lane.b32.xlu0 %v1068, 24
      %v1083 = vpop.permute.xlu0 %1082
      %v1085 = vsel %vm634, %v737, %v1075
      %vm1086 = vcmask 130048
      %v1087 = vsel %vm1086, %v1085, %v1079
      %vm1088 = vcmask 195584
      %v1089 = vsel %vm1088, %v1087, %v1083
      %v1090 = vld [vmem:[%s6] sm:$0xff]
      %v1091 = vld [vmem:[%s6 + $0x8] sm:$0xff]
      %v1092 = vld [vmem:[%s6 + $0x10] sm:$0xff]
      %v1093 = vld [vmem:[%s6 + $0x18] sm:$0xff]
      %v1094 = vpack.c.bf16 %v1089, %v1089
      %v1095 = vpack.c.bf16 %v1091, %v1090
      %v1096 = vpack.c.bf16 %v1093, %v1092
      %v1097 = vld [vmem:[%s7] sm:$0x1]
      %v1099 = vlaneseq
      %v1100 = vshrl.u32 %v1099, 7
      %v1101 = vsub.s32 0, %v1100
      %v1102 = vrot.slane %v1097, %v1101
      %v1105 = vsel %vm535, %v1094, 0
      %1107 = vmatprep.subr.bf16.mxu0 0
      %1108 = vmatpush1.bf16.msra.mxu0 %v1095
      %1109 = vmatprep.subr.bf16.mxu0 0
      %1110 = vmatpush1.bf16.msra.mxu0 %v1096
      %1111 = vmatprep.subr.bf16.mxu0 0
      %1112 = vmatpush1.bf16.msra.mxu0 0
      %1113 = vmatprep.subr.bf16.mxu0 0
      %1114 = vmatpush1.bf16.msra.mxu0 0
      %1115 = vmatprep.subr.bf16.mxu0 0
      %1116 = vmatpush1.bf16.msra.mxu0 0
      %1117 = vmatprep.subr.bf16.mxu0 0
      %1118 = vmatpush1.bf16.msra.mxu0 0
      %1119 = vmatprep.subr.bf16.mxu0 0
      %1120 = vmatpush1.bf16.msra.mxu0 0
      %1121 = vmatprep.subr.bf16.mxu0 0
      %1122 = vmatpush1.bf16.msra.mxu0 0
      %1123 = vmatprep.subr.bf16.mxu0 0
      %1124 = vmatpush1.bf16.msra.mxu0 0
      %1125 = vmatprep.subr.bf16.mxu0 0
      %1126 = vmatpush1.bf16.msra.mxu0 0
      %1127 = vmatprep.subr.bf16.mxu0 0
      %1128 = vmatpush1.bf16.msra.mxu0 0
      %1129 = vmatprep.subr.bf16.mxu0 0
      %1130 = vmatpush1.bf16.msra.mxu0 0
      %1131 = vmatprep.subr.bf16.mxu0 0
      %1132 = vmatpush1.bf16.msra.mxu0 0
      %1133 = vmatprep.subr.bf16.mxu0 0
      %1134 = vmatpush1.bf16.msra.mxu0 0
      %1135 = vmatprep.subr.bf16.mxu0 0
      %1136 = vmatpush1.bf16.msra.mxu0 0
      %1137 = vmatprep.subr.bf16.mxu0 0
      %1138 = vmatpush1.bf16.msra.mxu0 0
      %1139 = vmatprep.mubr.bf16.mxu0 0
      %1140 = vmatmul.mubr.bf16.gmra.mrb[0].mxu0 %v1105
      %v1141 = vpop.f32.mrb[0].mxu0
      %v1142 = vadd.f32 %v1102, %v1141
      %v1143 = vpop.f32.mrb[0].mxu0
      %v1144 = vpop.f32.mrb[0].mxu0
      %v1145 = vpop.f32.mrb[0].mxu0
      %1146 = vdwg.mxu0
      %v1147 = vadd.f32 %v1142, %v563
      %v1148 = vld [vmem:[%s8] sm:$0x1]
      %v1149 = vld [vmem:[%s9] sm:$0x1]
      %v1150 = vsel %vm535, %v1147, 0.0
      %1151 = vadd.xlane.f32.xlu0 %v1150
      %v1152 = vpop.xlane.xlu0 %1151
      %v1153 = vmul.f32 %v1152, %v539
      %v1154 = vsub.f32 %v1147, %v1153
      %v1155 = vmul.f32 %v1154, %v1154
      %v1156 = vsel %vm535, %v1155, 0.0
      %1157 = vadd.xlane.f32.xlu0 %v1156
      %v1158 = vpop.xlane.xlu0 %1157
      %v1159 = vmul.f32 %v1158, %v539
      %v1160 = vadd.f32 %v1159, 1e-12
      %v1161 = vrsqrt.pop %v1160
      %v1162 = vmul.f32 %v1154, %v1161
      %v1164 = vlaneseq
      %v1165 = vshrl.u32 %v1164, 7
      %v1166 = vsub.s32 0, %v1165
      %v1167 = vrot.slane %v1148, %v1166
      %v1169 = vmul.f32 %v1162, %v1167
      %v1171 = vlaneseq
      %v1172 = vshrl.u32 %v1171, 7
      %v1173 = vsub.s32 0, %v1172
      %v1174 = vrot.slane %v1149, %v1173
      %v1176 = vadd.f32 %v1169, %v1174
      %v1177 = vld [vmem:[%s10] sm:$0xff]
      %v1178 = vld [vmem:[%s10 + $0x8] sm:$0xff]
      %v1179 = vld [vmem:[%s10 + $0x10] sm:$0xff]
      %v1180 = vld [vmem:[%s10 + $0x18] sm:$0xff]
      %v1181 = vpack.c.bf16 %v1176, %v1176
      %v1182 = vpack.c.bf16 %v1178, %v1177
      %v1183 = vpack.c.bf16 %v1180, %v1179
      %v1184 = vld [vmem:[%s11] sm:$0x1]
      %v1186 = vlaneseq
      %v1187 = vshrl.u32 %v1186, 7
      %v1188 = vsub.s32 0, %v1187
      %v1189 = vrot.slane %v1184, %v1188
      %v1192 = vsel %vm535, %v1181, 0
      %1194 = vmatprep.subr.bf16.mxu0 0
      %1195 = vmatpush1.bf16.msra.mxu0 %v1182
      %1196 = vmatprep.subr.bf16.mxu0 0
      %1197 = vmatpush1.bf16.msra.mxu0 %v1183
      %1198 = vmatprep.subr.bf16.mxu0 0
      %1199 = vmatpush1.bf16.msra.mxu0 0
      %1200 = vmatprep.subr.bf16.mxu0 0
      %1201 = vmatpush1.bf16.msra.mxu0 0
      %1202 = vmatprep.subr.bf16.mxu0 0
      %1203 = vmatpush1.bf16.msra.mxu0 0
      %1204 = vmatprep.subr.bf16.mxu0 0
      %1205 = vmatpush1.bf16.msra.mxu0 0
      %1206 = vmatprep.subr.bf16.mxu0 0
      %1207 = vmatpush1.bf16.msra.mxu0 0
      %1208 = vmatprep.subr.bf16.mxu0 0
      %1209 = vmatpush1.bf16.msra.mxu0 0
      %1210 = vmatprep.subr.bf16.mxu0 0
      %1211 = vmatpush1.bf16.msra.mxu0 0
      %1212 = vmatprep.subr.bf16.mxu0 0
      %1213 = vmatpush1.bf16.msra.mxu0 0
      %1214 = vmatprep.subr.bf16.mxu0 0
      %1215 = vmatpush1.bf16.msra.mxu0 0
      %1216 = vmatprep.subr.bf16.mxu0 0
      %1217 = vmatpush1.bf16.msra.mxu0 0
      %1218 = vmatprep.subr.bf16.mxu0 0
      %1219 = vmatpush1.bf16.msra.mxu0 0
      %1220 = vmatprep.subr.bf16.mxu0 0
      %1221 = vmatpush1.bf16.msra.mxu0 0
      %1222 = vmatprep.subr.bf16.mxu0 0
      %1223 = vmatpush1.bf16.msra.mxu0 0
      %1224 = vmatprep.subr.bf16.mxu0 0
      %1225 = vmatpush1.bf16.msra.mxu0 0
      %1226 = vmatprep.mubr.bf16.mxu0 0
      %1227 = vmatmul.mubr.bf16.gmra.mrb[0].mxu0 %v1192
      %v1228 = vpop.f32.mrb[0].mxu0
      %v1229 = vadd.f32 %v1189, %v1228
      %v1230 = vpop.f32.mrb[0].mxu0
      %v1231 = vpop.f32.mrb[0].mxu0
      %v1232 = vpop.f32.mrb[0].mxu0
      %1233 = vdwg.mxu0
      %v1234 = vmul.f32 %v1229, 0.5
      %v1235 = vmul.f32 %v1229, 0.044715
      %v1236 = vmul.f32 %v1235, %v1229
      %v1237 = vmul.f32 %v1236, %v1229
      %v1238 = vadd.f32 %v1229, %v1237
      %v1239 = vmul.f32 %v1238, 0.7978846
      %v1240 = vtanh.pop %v1239
      %v1241 = vadd.f32 %v1240, 1.0
      %v1242 = vmul.f32 %v1234, %v1241
      %v1243 = vld [vmem:[%s12] sm:$0xff]
      %v1244 = vld [vmem:[%s12 + $0x8] sm:$0xff]
      %v1245 = vld [vmem:[%s12 + $0x10] sm:$0xff]
      %v1246 = vld [vmem:[%s12 + $0x18] sm:$0xff]
      %v1247 = vld [vmem:[%s12 + $0x20] sm:$0xff]
      %v1248 = vld [vmem:[%s12 + $0x28] sm:$0xff]
      %v1249 = vld [vmem:[%s12 + $0x30] sm:$0xff]
      %v1250 = vld [vmem:[%s12 + $0x38] sm:$0xff]
      %v1251 = vpack.c.bf16 %v1242, %v1242
      %v1252 = vpack.c.bf16 %v1244, %v1243
      %v1253 = vpack.c.bf16 %v1246, %v1245
      %v1254 = vpack.c.bf16 %v1248, %v1247
      %v1255 = vpack.c.bf16 %v1250, %v1249
      %v1256 = vld [vmem:[%s13] sm:$0x1]
      %v1258 = vlaneseq
      %v1259 = vshrl.u32 %v1258, 7
      %v1260 = vsub.s32 0, %v1259
      %v1261 = vrot.slane %v1256, %v1260
      %vm1263 = vcmask 523264
      %v1265 = vsel %vm1263, %v1251, 0
      %1267 = vmatprep.subr.bf16.mxu0 0
      %1268 = vmatpush1.bf16.msra.mxu0 %v1252
      %1269 = vmatprep.subr.bf16.mxu0 0
      %1270 = vmatpush1.bf16.msra.mxu0 %v1253
      %1271 = vmatprep.subr.bf16.mxu0 0
      %1272 = vmatpush1.bf16.msra.mxu0 %v1254
      %1273 = vmatprep.subr.bf16.mxu0 0
      %1274 = vmatpush1.bf16.msra.mxu0 %v1255
      %1275 = vmatprep.subr.bf16.mxu0 0
      %1276 = vmatpush1.bf16.msra.mxu0 0
      %1277 = vmatprep.subr.bf16.mxu0 0
      %1278 = vmatpush1.bf16.msra.mxu0 0
      %1279 = vmatprep.subr.bf16.mxu0 0
      %1280 = vmatpush1.bf16.msra.mxu0 0
      %1281 = vmatprep.subr.bf16.mxu0 0
      %1282 = vmatpush1.bf16.msra.mxu0 0
      %1283 = vmatprep.subr.bf16.mxu0 0
      %1284 = vmatpush1.bf16.msra.mxu0 0
      %1285 = vmatprep.subr.bf16.mxu0 0
      %1286 = vmatpush1.bf16.msra.mxu0 0
      %1287 = vmatprep.subr.bf16.mxu0 0
      %1288 = vmatpush1.bf16.msra.mxu0 0
      %1289 = vmatprep.subr.bf16.mxu0 0
      %1290 = vmatpush1.bf16.msra.mxu0 0
      %1291 = vmatprep.subr.bf16.mxu0 0
      %1292 = vmatpush1.bf16.msra.mxu0 0
      %1293 = vmatprep.subr.bf16.mxu0 0
      %1294 = vmatpush1.bf16.msra.mxu0 0
      %1295 = vmatprep.subr.bf16.mxu0 0
      %1296 = vmatpush1.bf16.msra.mxu0 0
      %1297 = vmatprep.subr.bf16.mxu0 0
      %1298 = vmatpush1.bf16.msra.mxu0 0
      %1299 = vmatprep.mubr.bf16.mxu0 0
      %1300 = vmatmul.mubr.bf16.gmra.mrb[0].mxu0 %v1265
      %v1301 = vpop.f32.mrb[0].mxu0
      %v1302 = vadd.f32 %v1261, %v1301
      %v1303 = vpop.f32.mrb[0].mxu0
      %v1304 = vpop.f32.mrb[0].mxu0
      %v1305 = vpop.f32.mrb[0].mxu0
      %1306 = vdwg.mxu0
      %v1307 = vadd.f32 %v1302, %v1176
      %v1308 = vld [vmem:[%s14] sm:$0x1]
      %v1309 = vld [vmem:[%s15] sm:$0x1]
      %v1310 = vsel %vm535, %v1307, 0.0
      %1311 = vadd.xlane.f32.xlu0 %v1310
      %v1312 = vpop.xlane.xlu0 %1311
      %v1313 = vmul.f32 %v1312, %v539
      %v1314 = vsub.f32 %v1307, %v1313
      %v1315 = vmul.f32 %v1314, %v1314
      %v1316 = vsel %vm535, %v1315, 0.0
      %1317 = vadd.xlane.f32.xlu0 %v1316
      %v1318 = vpop.xlane.xlu0 %1317
      %v1319 = vmul.f32 %v1318, %v539
      %v1320 = vadd.f32 %v1319, 1e-12
      %v1321 = vrsqrt.pop %v1320
      %v1322 = vmul.f32 %v1314, %v1321
      %v1324 = vlaneseq
      %v1325 = vshrl.u32 %v1324, 7
      %v1326 = vsub.s32 0, %v1325
      %v1327 = vrot.slane %v1308, %v1326
      %v1329 = vmul.f32 %v1322, %v1327
      %v1331 = vlaneseq
      %v1332 = vshrl.u32 %v1331, 7
      %v1333 = vsub.s32 0, %v1332
      %v1334 = vrot.slane %v1309, %v1333
      %v1336 = vadd.f32 %v1329, %v1334
      %1337 = vst.msk [vmem:[%s530] sm:$0xff] %vm535, %v1336
      %p1338 = scmp.lt.s32.totalorder %s27, 1
      %s1339 = scalar_select %p1338, %s27, 1
      %s1340 = smul.addr %s1339, 8
      %s1341 = scalar_lea.vmem %s16, %s1340
      // Predicated region
      $region85: #{bert_forward.2} parent=83 // pred_check
        %p1342 = pneg %p391
      $region86: #{bert_forward.2} parent=83 // pred_check_branch
        %1344 = sbr.rel (%p1342) target = $region88
      $region87: #{bert_forward.2} parent=83 // pred_region
        _
      $region88: #{bert_forward.2} parent=83 // pred_fallthru
        _
    $region84: #{bert_forward.2} parent=5 // pred_fallthru
      _
    %p1345 = scmp.le.s32.totalorder 2, %s22
    // Predicated region
    $region89: #{bert_forward.2} parent=5 // pred_check
      %p1346 = pneg %p1345
    $region90: #{bert_forward.2} parent=5 // pred_check_branch
      %1348 = sbr.rel (%p1346) target = $region92
    $region91: #{bert_forward.2} parent=5 // pred_region
      %s1349 = ssub.s32 %s22, 2
      // Predicated region
      $region93: #{bert_forward.2} parent=91 // pred_check
        %p1350 = pneg %p397
      $region94: #{bert_forward.2} parent=91 // pred_check_branch
        %1352 = sbr.rel (%p1350) target = $region96
      $region95: #{bert_forward.2} parent=91 // pred_region
        %p1353 = scmp.lt.s32.totalorder %s28, 1
        %s1354 = scalar_select %p1353, %s28, 1
        %s1355 = smul.addr %s1354, 8
        %s1356 = scalar_lea.vmem %s16, %s1355
      $region96: #{bert_forward.2} parent=91 // pred_fallthru
        _
    $region92: #{bert_forward.2} parent=5 // pred_fallthru
      _
  $region6: #{bert_forward.2} parent=0 // loop_footer
    %s26 = sadd.s32 1, %s22
  $region7: #{bert_forward.2} parent=0 // loop_footer_branch
    %21 = sbr.rel target = $region3
  $region8: #{bert_forward.2} parent=0 // loop_exit
    _

</llo_original>
